<compile_context>
chip_gen: v5e
topology: v5e:2x2
jax: 0.10.0
libtpu: 0.0.40
codegen_flags: <defaults>
</compile_context>

<pallas_src>
import functools
import math

import jax
import jax.numpy as jnp
from jax.experimental import pallas as pl
from jax.experimental.pallas import tpu as pltpu

VMEM = pl.BlockSpec(memory_space=pltpu.MemorySpace.VMEM)
HEAD_PAD = 128          # lane-dense width of the sigmoid-head output slab
NEG_INF = -1e30


# ---------------------------------------------------------------------------
# In-kernel helpers (pure functions of loaded values)
# ---------------------------------------------------------------------------
def _layernorm(z, gamma, beta, eps=1e-6):
    mean = jnp.mean(z, axis=-1, keepdims=True)
    var = jnp.mean((z - mean) ** 2, axis=-1, keepdims=True)
    return (z - mean) * jax.lax.rsqrt(var + eps) * gamma + beta


def _mlp2(x, w1, b1, w2, b2, cdt):
    """relu(x @ w1 + b1) @ w2 + b2 — bf16 MXU inputs, f32 accumulation."""
    h = jnp.dot(x.astype(cdt), w1, preferred_element_type=jnp.float32) + b1
    h = jnp.maximum(h, 0.0)
    return jnp.dot(h.astype(cdt), w2, preferred_element_type=jnp.float32) + b2


def _att_ff_block(code, obs_c, wq, wk, wv, att_g, att_b,
                  ff_w1, ff_b1, ff_w2, ff_b2, ff_g, ff_b,
                  inv_temp, n_obs_valid, cdt):
    """Attention over [self] + obs rows + residual LN, then FFN + residual LN."""
    c = code.astype(cdt)
    mq = jnp.dot(c, wq, preferred_element_type=jnp.float32)
    mk = jnp.dot(c, wk, preferred_element_type=jnp.float32)
    mv = jnp.dot(c, wv, preferred_element_type=jnp.float32)
    ok = jnp.dot(obs_c, wk, preferred_element_type=jnp.float32)
    ov = jnp.dot(obs_c, wv, preferred_element_type=jnp.float32)

    s_self = jnp.sum(mq * mk, axis=-1, keepdims=True) * inv_temp          # (N,1)
    # mq @ ok.T without materializing a transpose: contract last dims.
    s_obs = jax.lax.dot_general(
        mq.astype(cdt), ok.astype(cdt), (((1,), (1,)), ((), ())),
        preferred_element_type=jnp.float32) * inv_temp                    # (N,M)
    if n_obs_valid < s_obs.shape[-1]:                 # mask padded obstacle rows
        col = jax.lax.broadcasted_iota(jnp.int32, s_obs.shape, 1)
        s_obs = jnp.where(col < n_obs_valid, s_obs, NEG_INF)

    # softmax over the virtual concat [self | obs] without materializing it
    mx = jnp.maximum(s_self, jnp.max(s_obs, axis=-1, keepdims=True))
    e_self = jnp.exp(s_self - mx)
    e_obs = jnp.exp(s_obs - mx)
    denom = e_self + jnp.sum(e_obs, axis=-1, keepdims=True)               # >= 1
    num = e_self * mv + jnp.dot(e_obs.astype(cdt), ov.astype(cdt),
                                preferred_element_type=jnp.float32)
    new = num * pl.reciprocal(denom, approx=True)
    code = _layernorm(new + code, att_g, att_b)

    # FeedForward: layernorm(w2(relu(w1 x)) + x)
    c = code.astype(cdt)
    h = jnp.maximum(jnp.dot(c, ff_w1, preferred_element_type=jnp.float32) + ff_b1, 0.0)
    z = jnp.dot(h.astype(cdt), ff_w2, preferred_element_type=jnp.float32) + ff_b2 + code
    return _layernorm(z, ff_g, ff_b)


# ---------------------------------------------------------------------------
# The single fused kernel
# ---------------------------------------------------------------------------
def collision_net_kernel(
    v_ref, edge_ref, obs_ref,
    hx_w1, hx_w2, hx_b,
    hy_w1, hy_w2, hy_b,
    on_w1, on_w2, on_b,
    oe_w1, oe_w2, oe_b,
    nb_qkv, nb_ffw, nb_vec,
    eb_qkv, eb_ffw, eb_vec,
    fy_w1, fy_w2, fy_b,
    f2_w1, f2_w2, f2_w3, f2_b1, f2_b2, f2_b3,
    out_ref,
    *, inv_temp, n_obs_valid, n_blocks, cdt, use_obstacles,
):
    v = v_ref[...]                         # (N, C) f32
    ei = edge_ref[...]                     # (Ne, 2) int32
    n_nodes = v.shape[0]
    n_edges = ei.shape[0]

    # One-hot gather matrices (exact f32 row gathers, done on the MXU).
    iota_n = jax.lax.broadcasted_iota(jnp.int32, (n_edges, n_nodes), 1)
    gi = jnp.where(iota_n == ei[:, 0:1], 1.0, 0.0).astype(jnp.float32)    # edge_index[0]
    gj = jnp.where(iota_n == ei[:, 1:2], 1.0, 0.0).astype(jnp.float32)    # edge_index[1]

    # ---- front-end encoders ------------------------------------------------
    x = _mlp2(v, hx_w1[...], hx_b[0:1, :], hx_w2[...], hx_b[1:2, :], cdt)  # (N,E)

    vi = jnp.dot(gi, v, preferred_element_type=jnp.float32)
    vj = jnp.dot(gj, v, preferred_element_type=jnp.float32)
    dv = vj - vi
    # hy first Linear applied to the virtual concat [dv | vj | vi]
    hyh = (jnp.dot(dv.astype(cdt), hy_w1[0], preferred_element_type=jnp.float32)
           + jnp.dot(vj.astype(cdt), hy_w1[1], preferred_element_type=jnp.float32)
           + jnp.dot(vi.astype(cdt), hy_w1[2], preferred_element_type=jnp.float32)
           + hy_b[0:1, :])
    hyh = jnp.maximum(hyh, 0.0)
    y = jnp.dot(hyh.astype(cdt), hy_w2[...], preferred_element_type=jnp.float32) + hy_b[1:2, :]

    # ---- obstacle attention blocks (3 node + 3 edge, statically unrolled) ---
    if use_obstacles:
        obs = obs_ref[...]
        obs_node = _mlp2(obs, on_w1[...], on_b[0:1, :], on_w2[...], on_b[1:2, :], cdt).astype(cdt)
        obs_edge = _mlp2(obs, oe_w1[...], oe_b[0:1, :], oe_w2[...], oe_b[1:2, :], cdt).astype(cdt)

        for blk in range(n_blocks):
            q, f, r = 3 * blk, 2 * blk, 6 * blk
            x = _att_ff_block(
                x, obs_node,
                nb_qkv[q + 0], nb_qkv[q + 1], nb_qkv[q + 2],
                nb_vec[r + 0:r + 1, :], nb_vec[r + 1:r + 2, :],
                nb_ffw[f + 0], nb_vec[r + 2:r + 3, :],
                nb_ffw[f + 1], nb_vec[r + 3:r + 4, :],
                nb_vec[r + 4:r + 5, :], nb_vec[r + 5:r + 6, :],
                inv_temp, n_obs_valid, cdt)
            y = _att_ff_block(
                y, obs_edge,
                eb_qkv[q + 0], eb_qkv[q + 1], eb_qkv[q + 2],
                eb_vec[r + 0:r + 1, :], eb_vec[r + 1:r + 2, :],
                eb_ffw[f + 0], eb_vec[r + 2:r + 3, :],
                eb_ffw[f + 1], eb_vec[r + 3:r + 4, :],
                eb_vec[r + 4:r + 5, :], eb_vec[r + 5:r + 6, :],
                inv_temp, n_obs_valid, cdt)

    # ---- edge head: y = max(y, fy([xj-xi | xj | xi])) ------------------------
    xi = jnp.dot(gi, x, preferred_element_type=jnp.float32)
    xj = jnp.dot(gj, x, preferred_element_type=jnp.float32)
    dx = xj - xi
    fh = (jnp.dot(dx.astype(cdt), fy_w1[0], preferred_element_type=jnp.float32)
          + jnp.dot(xj.astype(cdt), fy_w1[1], preferred_element_type=jnp.float32)
          + jnp.dot(xi.astype(cdt), fy_w1[2], preferred_element_type=jnp.float32)
          + fy_b[0:1, :])
    fh = jnp.maximum(fh, 0.0)
    fz = jnp.dot(fh.astype(cdt), fy_w2[...], preferred_element_type=jnp.float32) + fy_b[1:2, :]
    y = jnp.maximum(y, fz)

    # ---- feta2 sigmoid head --------------------------------------------------
    # TODO(synk): Dropout(p=0.4) layers implemented as identity (inference mode).
    h1 = jnp.maximum(jnp.dot(y.astype(cdt), f2_w1[...],
                             preferred_element_type=jnp.float32) + f2_b1[...], 0.0)
    h2 = jnp.maximum(jnp.dot(h1.astype(cdt), f2_w2[...],
                             preferred_element_type=jnp.float32) + f2_b2[...], 0.0)
    logits = jnp.dot(h2.astype(cdt), f2_w3[...],
                     preferred_element_type=jnp.float32) + f2_b3[...]      # (Ne,128)
    out_ref[...] = jax.nn.sigmoid(logits)        # lane-dense store; sliced outside


# ---------------------------------------------------------------------------
# Host-side wrapper: one pallas_call for the whole forward pass
# ---------------------------------------------------------------------------
def collision_net_forward(packed, v, edge_index, obstacles, *, embed_size,
                          obs_size, n_blocks=3, use_obstacles=True,
                          compute_dtype=jnp.bfloat16):
    n_edges = edge_index.shape[1]
    obs_flat = obstacles.reshape(-1, obs_size).astype(jnp.float32)
    n_obs = obs_flat.shape[0]
    m_pad = max(8, ((n_obs + 7) // 8) * 8)            # sublane-multiple padding
    obs_pad = jnp.zeros((m_pad, obs_size), jnp.float32).at[:n_obs].set(obs_flat)
    edge_t = edge_index.T.astype(jnp.int32)           # (Ne, 2) — lane slices in-kernel

    kernel = functools.partial(
        collision_net_kernel,
        inv_temp=1.0 / (embed_size ** 0.5),
        n_obs_valid=n_obs,
        n_blocks=n_blocks,
        cdt=compute_dtype,
        use_obstacles=use_obstacles,
    )
    n_in = 3 + len(packed)
    out = pl.pallas_call(
        kernel,
        in_specs=[VMEM] * n_in,
        out_specs=VMEM,
        out_shape=jax.ShapeDtypeStruct((n_edges, HEAD_PAD), jnp.float32),
    )(v.astype(jnp.float32), edge_t, obs_pad, *packed)
    return out[:, :2]                                  # drop the lane padding


# ---------------------------------------------------------------------------
# Parameter construction (deterministic, synthetic — not a checkpoint)
# ---------------------------------------------------------------------------
def _linear(key, d_in, d_out, bias=True):
    kw, kb = jax.random.split(key)
    w = jax.random.normal(kw, (d_in, d_out), jnp.float32) / math.sqrt(d_in)
    b = 0.01 * jax.random.normal(kb, (d_out,), jnp.float32) if bias else None
    return w, b


def _block_raw(key, e):
    k = jax.random.split(key, 5)
    wq, _ = _linear(k[0], e, e, bias=False)
    wk, _ = _linear(k[1], e, e, bias=False)
    wv, _ = _linear(k[2], e, e, bias=False)
    w1, b1 = _linear(k[3], e, e)
    w2, b2 = _linear(k[4], e, e)
    return dict(wq=wq, wk=wk, wv=wv,
                att_g=jnp.ones((e,), jnp.float32), att_b=jnp.zeros((e,), jnp.float32),
                ff_w1=w1, ff_b1=b1, ff_w2=w2, ff_b2=b2,
                ff_g=jnp.ones((e,), jnp.float32), ff_b=jnp.zeros((e,), jnp.float32))


def init_params(key, config_size, embed_size, obs_size, n_blocks=3):
    ks = iter(jax.random.split(key, 64))
    p = {}
    p["hx"] = (_linear(next(ks), config_size, embed_size),
               _linear(next(ks), embed_size, embed_size))
    p["hy"] = (_linear(next(ks), config_size * 3, embed_size),
               _linear(next(ks), embed_size, embed_size))
    p["obs_node"] = (_linear(next(ks), obs_size, embed_size),
                     _linear(next(ks), embed_size, embed_size))
    p["obs_edge"] = (_linear(next(ks), obs_size, embed_size),
                     _linear(next(ks), embed_size, embed_size))
    p["node_blocks"] = [_block_raw(next(ks), embed_size) for _ in range(n_blocks)]
    p["edge_blocks"] = [_block_raw(next(ks), embed_size) for _ in range(n_blocks)]
    p["fy"] = (_linear(next(ks), embed_size * 3, embed_size),
               _linear(next(ks), embed_size, embed_size))
    p["feta2"] = (_linear(next(ks), embed_size, embed_size),
                  _linear(next(ks), embed_size, 64),
                  _linear(next(ks), 64, 2))
    return p


def pack_params(p, *, config_size, embed_size, compute_dtype=jnp.bfloat16):
    """Pack all weights into a flat tuple of VMEM-friendly arrays (done once,
    outside jit): bf16 matmul weights, f32 biases/LN params, stacked block
    weights, concat-Linears split along the input axis, lane-padded head."""
    cdt, f32 = compute_dtype, jnp.float32
    c, e = config_size, embed_size

    def mlp_pack(m):
        (w1, b1), (w2, b2) = m
        return w1.astype(cdt), w2.astype(cdt), jnp.stack([b1, b2]).astype(f32)

    hx_w1, hx_w2, hx_b = mlp_pack(p["hx"])
    on_w1, on_w2, on_b = mlp_pack(p["obs_node"])
    oe_w1, oe_w2, oe_b = mlp_pack(p["obs_edge"])

    (hyw1, hyb1), (hyw2, hyb2) = p["hy"]
    hy_w1 = jnp.stack([hyw1[0:c], hyw1[c:2 * c], hyw1[2 * c:3 * c]]).astype(cdt)
    hy_w2 = hyw2.astype(cdt)
    hy_b = jnp.stack([hyb1, hyb2]).astype(f32)

    (fyw1, fyb1), (fyw2, fyb2) = p["fy"]
    fy_w1 = jnp.stack([fyw1[0:e], fyw1[e:2 * e], fyw1[2 * e:3 * e]]).astype(cdt)
    fy_w2 = fyw2.astype(cdt)
    fy_b = jnp.stack([fyb1, fyb2]).astype(f32)

    def blocks_pack(blocks):
        qkv = jnp.stack([m for b in blocks for m in (b["wq"], b["wk"], b["wv"])]).astype(cdt)
        ffw = jnp.stack([m for b in blocks for m in (b["ff_w1"], b["ff_w2"])]).astype(cdt)
        vec = jnp.stack([r for b in blocks for r in
                         (b["att_g"], b["att_b"], b["ff_b1"], b["ff_b2"],
                          b["ff_g"], b["ff_b"])]).astype(f32)
        return qkv, ffw, vec

    nb_qkv, nb_ffw, nb_vec = blocks_pack(p["node_blocks"])
    eb_qkv, eb_ffw, eb_vec = blocks_pack(p["edge_blocks"])

    (f2w1, f2b1), (f2w2, f2b2), (f2w3, f2b3) = p["feta2"]
    f2_w3 = jnp.zeros((f2w3.shape[0], HEAD_PAD), f32).at[:, :f2w3.shape[1]].set(f2w3).astype(cdt)
    f2_b3 = jnp.zeros((1, HEAD_PAD), f32).at[:, :f2b3.shape[0]].set(f2b3)

    return (hx_w1, hx_w2, hx_b,
            hy_w1, hy_w2, hy_b,
            on_w1, on_w2, on_b,
            oe_w1, oe_w2, oe_b,
            nb_qkv, nb_ffw, nb_vec,
            eb_qkv, eb_ffw, eb_vec,
            fy_w1, fy_w2, fy_b,
            f2w1.astype(cdt), f2w2.astype(cdt), f2_w3,
            f2b1.reshape(1, -1).astype(f32), f2b2.reshape(1, -1).astype(f32), f2_b3)


# ---------------------------------------------------------------------------
# Main
# ---------------------------------------------------------------------------
if __name__ == "__main__":
    config_size = 6
    embed_size = 32
    obs_size = 9

    N_nodes = 16
    N_edges = 24
    N_obs = 5

    key = jax.random.PRNGKey(0)
    k_param, k_v, k_e, k_o = jax.random.split(key, 4)

    params = init_params(k_param, config_size, embed_size, obs_size)
    packed = pack_params(params, config_size=config_size, embed_size=embed_size,
                         compute_dtype=jnp.bfloat16)

    v = jax.random.normal(k_v, (N_nodes, config_size), jnp.float32)
    edge_index = jax.random.randint(k_e, (2, N_edges), 0, N_nodes, dtype=jnp.int32)
    obstacles = jax.random.normal(k_o, (N_obs, obs_size), jnp.float32)

    fwd = jax.jit(functools.partial(collision_net_forward,
                                    embed_size=embed_size,
                                    obs_size=obs_size,
                                    use_obstacles=True))
    out = fwd(packed, v, edge_index, obstacles)
    out = jax.block_until_ready(out)

    assert out.shape == (N_edges, 2), out.shape
    assert bool(jnp.all(jnp.isfinite(out)))
    assert bool(jnp.all((out >= 0.0) & (out <= 1.0)))
    print("KERNEL_OK")
</pallas_src>

<mosaic_0001>
module attributes {stable_mosaic.version = 11 : i64} {
  func.func @collision_net_kernel(%arg0: memref<16x6xf32, #tpu.memory_space<vmem>>, %arg1: memref<24x2xi32, #tpu.memory_space<vmem>>, %arg2: memref<8x9xf32, #tpu.memory_space<vmem>>, %arg3: memref<6x32xbf16, #tpu.memory_space<vmem>>, %arg4: memref<32x32xbf16, #tpu.memory_space<vmem>>, %arg5: memref<2x32xf32, #tpu.memory_space<vmem>>, %arg6: memref<3x6x32xbf16, #tpu.memory_space<vmem>>, %arg7: memref<32x32xbf16, #tpu.memory_space<vmem>>, %arg8: memref<2x32xf32, #tpu.memory_space<vmem>>, %arg9: memref<9x32xbf16, #tpu.memory_space<vmem>>, %arg10: memref<32x32xbf16, #tpu.memory_space<vmem>>, %arg11: memref<2x32xf32, #tpu.memory_space<vmem>>, %arg12: memref<9x32xbf16, #tpu.memory_space<vmem>>, %arg13: memref<32x32xbf16, #tpu.memory_space<vmem>>, %arg14: memref<2x32xf32, #tpu.memory_space<vmem>>, %arg15: memref<9x32x32xbf16, #tpu.memory_space<vmem>>, %arg16: memref<6x32x32xbf16, #tpu.memory_space<vmem>>, %arg17: memref<18x32xf32, #tpu.memory_space<vmem>>, %arg18: memref<9x32x32xbf16, #tpu.memory_space<vmem>>, %arg19: memref<6x32x32xbf16, #tpu.memory_space<vmem>>, %arg20: memref<18x32xf32, #tpu.memory_space<vmem>>, %arg21: memref<3x32x32xbf16, #tpu.memory_space<vmem>>, %arg22: memref<32x32xbf16, #tpu.memory_space<vmem>>, %arg23: memref<2x32xf32, #tpu.memory_space<vmem>>, %arg24: memref<32x32xbf16, #tpu.memory_space<vmem>>, %arg25: memref<32x64xbf16, #tpu.memory_space<vmem>>, %arg26: memref<64x128xbf16, #tpu.memory_space<vmem>>, %arg27: memref<1x32xf32, #tpu.memory_space<vmem>>, %arg28: memref<1x64xf32, #tpu.memory_space<vmem>>, %arg29: memref<1x128xf32, #tpu.memory_space<vmem>>, %arg30: memref<24x128xf32, #tpu.memory_space<vmem>>) attributes {dimension_semantics = [], scalar_prefetch = 0 : i64, scratch_operands = 0 : i64, tpu.core_type = #tpu.core_type<tc>} {
    %c0 = arith.constant 0 : index
    %c0_0 = arith.constant 0 : index
    %0 = vector.load %arg0[%c0, %c0_0] : memref<16x6xf32, #tpu.memory_space<vmem>>, vector<16x6xf32>
    %c0_1 = arith.constant 0 : index
    %c0_2 = arith.constant 0 : index
    %1 = vector.load %arg1[%c0_1, %c0_2] : memref<24x2xi32, #tpu.memory_space<vmem>>, vector<24x2xi32>
    %2 = tpu.iota {dimensions = array<i32: 1>} : vector<24x16xi32>
    %3 = vector.extract_strided_slice %1 {offsets = [0, 0], sizes = [24, 1], strides = [1, 1]} : vector<24x2xi32> to vector<24x1xi32>
    %4 = vector.broadcast %3 : vector<24x1xi32> to vector<24x16xi32>
    %5 = arith.cmpi eq, %2, %4 : vector<24x16xi32>
    %cst = arith.constant 1.000000e+00 : f32
    %cst_3 = arith.constant 0.000000e+00 : f32
    %6 = vector.broadcast %cst : f32 to vector<24x16xf32>
    %7 = vector.broadcast %cst_3 : f32 to vector<24x16xf32>
    %8 = arith.select %5, %6, %7 : vector<24x16xi1>, vector<24x16xf32>
    %9 = vector.extract_strided_slice %1 {offsets = [0, 1], sizes = [24, 1], strides = [1, 1]} : vector<24x2xi32> to vector<24x1xi32>
    %10 = vector.broadcast %9 : vector<24x1xi32> to vector<24x16xi32>
    %11 = arith.cmpi eq, %2, %10 : vector<24x16xi32>
    %cst_4 = arith.constant 1.000000e+00 : f32
    %cst_5 = arith.constant 0.000000e+00 : f32
    %12 = vector.broadcast %cst_4 : f32 to vector<24x16xf32>
    %13 = vector.broadcast %cst_5 : f32 to vector<24x16xf32>
    %14 = arith.select %11, %12, %13 : vector<24x16xi1>, vector<24x16xf32>
    %c0_6 = arith.constant 0 : index
    %c0_7 = arith.constant 0 : index
    %15 = vector.load %arg3[%c0_6, %c0_7] : memref<6x32xbf16, #tpu.memory_space<vmem>>, vector<6x32xbf16>
    %c0_8 = arith.constant 0 : index
    %c0_9 = arith.constant 0 : index
    %16 = vector.load %arg5[%c0_8, %c0_9] : memref<2x32xf32, #tpu.memory_space<vmem>>, vector<1x32xf32>
    %c0_10 = arith.constant 0 : index
    %c0_11 = arith.constant 0 : index
    %17 = vector.load %arg4[%c0_10, %c0_11] : memref<32x32xbf16, #tpu.memory_space<vmem>>, vector<32x32xbf16>
    %c1 = arith.constant 1 : index
    %c0_12 = arith.constant 0 : index
    %18 = vector.load %arg5[%c1, %c0_12] : memref<2x32xf32, #tpu.memory_space<vmem>>, vector<1x32xf32>
    %19 = arith.truncf %0 : vector<16x6xf32> to vector<16x6xbf16>
    %cst_13 = arith.constant dense<0.000000e+00> : vector<16x32xf32>
    %20 = tpu.matmul %19, %15, %cst_13 {dimension_numbers = #tpu.dot_dimension_numbers<[1], [0], [0], [1], [0, 0, 1, 1], [], []>} : vector<16x6xbf16>, vector<6x32xbf16>, vector<16x32xf32> -> vector<16x32xf32>
    %21 = vector.broadcast %16 : vector<1x32xf32> to vector<16x32xf32>
    %22 = arith.addf %20, %21 : vector<16x32xf32>
    %cst_14 = arith.constant 0.000000e+00 : f32
    %23 = vector.broadcast %cst_14 : f32 to vector<16x32xf32>
    %24 = arith.maximumf %22, %23 : vector<16x32xf32>
    %25 = arith.truncf %24 : vector<16x32xf32> to vector<16x32xbf16>
    %cst_15 = arith.constant dense<0.000000e+00> : vector<16x32xf32>
    %26 = tpu.matmul %25, %17, %cst_15 {dimension_numbers = #tpu.dot_dimension_numbers<[1], [0], [0], [1], [0, 0, 1, 1], [], []>} : vector<16x32xbf16>, vector<32x32xbf16>, vector<16x32xf32> -> vector<16x32xf32>
    %27 = vector.broadcast %18 : vector<1x32xf32> to vector<16x32xf32>
    %28 = arith.addf %26, %27 : vector<16x32xf32>
    %cst_16 = arith.constant dense<0.000000e+00> : vector<24x6xf32>
    %29 = tpu.matmul %8, %0, %cst_16 {dimension_numbers = #tpu.dot_dimension_numbers<[1], [0], [0], [1], [0, 0, 1, 1], [], []>} : vector<24x16xf32>, vector<16x6xf32>, vector<24x6xf32> -> vector<24x6xf32>
    %cst_17 = arith.constant dense<0.000000e+00> : vector<24x6xf32>
    %30 = tpu.matmul %14, %0, %cst_17 {dimension_numbers = #tpu.dot_dimension_numbers<[1], [0], [0], [1], [0, 0, 1, 1], [], []>} : vector<24x16xf32>, vector<16x6xf32>, vector<24x6xf32> -> vector<24x6xf32>
    %31 = arith.subf %30, %29 : vector<24x6xf32>
    %32 = arith.truncf %31 : vector<24x6xf32> to vector<24x6xbf16>
    %c0_18 = arith.constant 0 : index
    %c0_19 = arith.constant 0 : index
    %c0_20 = arith.constant 0 : index
    %33 = vector.load %arg6[%c0_18, %c0_19, %c0_20] : memref<3x6x32xbf16, #tpu.memory_space<vmem>>, vector<1x6x32xbf16>
    %34 = vector.shape_cast %33 : vector<1x6x32xbf16> to vector<6x32xbf16>
    %cst_21 = arith.constant dense<0.000000e+00> : vector<24x32xf32>
    %35 = tpu.matmul %32, %34, %cst_21 {dimension_numbers = #tpu.dot_dimension_numbers<[1], [0], [0], [1], [0, 0, 1, 1], [], []>} : vector<24x6xbf16>, vector<6x32xbf16>, vector<24x32xf32> -> vector<24x32xf32>
    %36 = arith.truncf %30 : vector<24x6xf32> to vector<24x6xbf16>
    %c1_22 = arith.constant 1 : index
    %c0_23 = arith.constant 0 : index
    %c0_24 = arith.constant 0 : index
    %37 = vector.load %arg6[%c1_22, %c0_23, %c0_24] : memref<3x6x32xbf16, #tpu.memory_space<vmem>>, vector<1x6x32xbf16>
    %38 = vector.shape_cast %37 : vector<1x6x32xbf16> to vector<6x32xbf16>
    %cst_25 = arith.constant dense<0.000000e+00> : vector<24x32xf32>
    %39 = tpu.matmul %36, %38, %cst_25 {dimension_numbers = #tpu.dot_dimension_numbers<[1], [0], [0], [1], [0, 0, 1, 1], [], []>} : vector<24x6xbf16>, vector<6x32xbf16>, vector<24x32xf32> -> vector<24x32xf32>
    %40 = arith.addf %35, %39 : vector<24x32xf32>
    %41 = arith.truncf %29 : vector<24x6xf32> to vector<24x6xbf16>
    %c2 = arith.constant 2 : index
    %c0_26 = arith.constant 0 : index
    %c0_27 = arith.constant 0 : index
    %42 = vector.load %arg6[%c2, %c0_26, %c0_27] : memref<3x6x32xbf16, #tpu.memory_space<vmem>>, vector<1x6x32xbf16>
    %43 = vector.shape_cast %42 : vector<1x6x32xbf16> to vector<6x32xbf16>
    %cst_28 = arith.constant dense<0.000000e+00> : vector<24x32xf32>
    %44 = tpu.matmul %41, %43, %cst_28 {dimension_numbers = #tpu.dot_dimension_numbers<[1], [0], [0], [1], [0, 0, 1, 1], [], []>} : vector<24x6xbf16>, vector<6x32xbf16>, vector<24x32xf32> -> vector<24x32xf32>
    %45 = arith.addf %40, %44 : vector<24x32xf32>
    %c0_29 = arith.constant 0 : index
    %c0_30 = arith.constant 0 : index
    %46 = vector.load %arg8[%c0_29, %c0_30] : memref<2x32xf32, #tpu.memory_space<vmem>>, vector<1x32xf32>
    %47 = vector.broadcast %46 : vector<1x32xf32> to vector<24x32xf32>
    %48 = arith.addf %45, %47 : vector<24x32xf32>
    %cst_31 = arith.constant 0.000000e+00 : f32
    %49 = vector.broadcast %cst_31 : f32 to vector<24x32xf32>
    %50 = arith.maximumf %48, %49 : vector<24x32xf32>
    %51 = arith.truncf %50 : vector<24x32xf32> to vector<24x32xbf16>
    %c0_32 = arith.constant 0 : index
    %c0_33 = arith.constant 0 : index
    %52 = vector.load %arg7[%c0_32, %c0_33] : memref<32x32xbf16, #tpu.memory_space<vmem>>, vector<32x32xbf16>
    %cst_34 = arith.constant dense<0.000000e+00> : vector<24x32xf32>
    %53 = tpu.matmul %51, %52, %cst_34 {dimension_numbers = #tpu.dot_dimension_numbers<[1], [0], [0], [1], [0, 0, 1, 1], [], []>} : vector<24x32xbf16>, vector<32x32xbf16>, vector<24x32xf32> -> vector<24x32xf32>
    %c1_35 = arith.constant 1 : index
    %c0_36 = arith.constant 0 : index
    %54 = vector.load %arg8[%c1_35, %c0_36] : memref<2x32xf32, #tpu.memory_space<vmem>>, vector<1x32xf32>
    %55 = vector.broadcast %54 : vector<1x32xf32> to vector<24x32xf32>
    %56 = arith.addf %53, %55 : vector<24x32xf32>
    %c0_37 = arith.constant 0 : index
    %c0_38 = arith.constant 0 : index
    %57 = vector.load %arg2[%c0_37, %c0_38] : memref<8x9xf32, #tpu.memory_space<vmem>>, vector<8x9xf32>
    %c0_39 = arith.constant 0 : index
    %c0_40 = arith.constant 0 : index
    %58 = vector.load %arg9[%c0_39, %c0_40] : memref<9x32xbf16, #tpu.memory_space<vmem>>, vector<9x32xbf16>
    %c0_41 = arith.constant 0 : index
    %c0_42 = arith.constant 0 : index
    %59 = vector.load %arg11[%c0_41, %c0_42] : memref<2x32xf32, #tpu.memory_space<vmem>>, vector<1x32xf32>
    %c0_43 = arith.constant 0 : index
    %c0_44 = arith.constant 0 : index
    %60 = vector.load %arg10[%c0_43, %c0_44] : memref<32x32xbf16, #tpu.memory_space<vmem>>, vector<32x32xbf16>
    %c1_45 = arith.constant 1 : index
    %c0_46 = arith.constant 0 : index
    %61 = vector.load %arg11[%c1_45, %c0_46] : memref<2x32xf32, #tpu.memory_space<vmem>>, vector<1x32xf32>
    %62 = arith.truncf %57 : vector<8x9xf32> to vector<8x9xbf16>
    %cst_47 = arith.constant dense<0.000000e+00> : vector<8x32xf32>
    %63 = tpu.matmul %62, %58, %cst_47 {dimension_numbers = #tpu.dot_dimension_numbers<[1], [0], [0], [1], [0, 0, 1, 1], [], []>} : vector<8x9xbf16>, vector<9x32xbf16>, vector<8x32xf32> -> vector<8x32xf32>
    %64 = vector.broadcast %59 : vector<1x32xf32> to vector<8x32xf32>
    %65 = arith.addf %63, %64 : vector<8x32xf32>
    %cst_48 = arith.constant 0.000000e+00 : f32
    %66 = vector.broadcast %cst_48 : f32 to vector<8x32xf32>
    %67 = arith.maximumf %65, %66 : vector<8x32xf32>
    %68 = arith.truncf %67 : vector<8x32xf32> to vector<8x32xbf16>
    %cst_49 = arith.constant dense<0.000000e+00> : vector<8x32xf32>
    %69 = tpu.matmul %68, %60, %cst_49 {dimension_numbers = #tpu.dot_dimension_numbers<[1], [0], [0], [1], [0, 0, 1, 1], [], []>} : vector<8x32xbf16>, vector<32x32xbf16>, vector<8x32xf32> -> vector<8x32xf32>
    %70 = vector.broadcast %61 : vector<1x32xf32> to vector<8x32xf32>
    %71 = arith.addf %69, %70 : vector<8x32xf32>
    %72 = arith.truncf %71 : vector<8x32xf32> to vector<8x32xbf16>
    %c0_50 = arith.constant 0 : index
    %c0_51 = arith.constant 0 : index
    %73 = vector.load %arg12[%c0_50, %c0_51] : memref<9x32xbf16, #tpu.memory_space<vmem>>, vector<9x32xbf16>
    %c0_52 = arith.constant 0 : index
    %c0_53 = arith.constant 0 : index
    %74 = vector.load %arg14[%c0_52, %c0_53] : memref<2x32xf32, #tpu.memory_space<vmem>>, vector<1x32xf32>
    %c0_54 = arith.constant 0 : index
    %c0_55 = arith.constant 0 : index
    %75 = vector.load %arg13[%c0_54, %c0_55] : memref<32x32xbf16, #tpu.memory_space<vmem>>, vector<32x32xbf16>
    %c1_56 = arith.constant 1 : index
    %c0_57 = arith.constant 0 : index
    %76 = vector.load %arg14[%c1_56, %c0_57] : memref<2x32xf32, #tpu.memory_space<vmem>>, vector<1x32xf32>
    %77 = arith.truncf %57 : vector<8x9xf32> to vector<8x9xbf16>
    %cst_58 = arith.constant dense<0.000000e+00> : vector<8x32xf32>
    %78 = tpu.matmul %77, %73, %cst_58 {dimension_numbers = #tpu.dot_dimension_numbers<[1], [0], [0], [1], [0, 0, 1, 1], [], []>} : vector<8x9xbf16>, vector<9x32xbf16>, vector<8x32xf32> -> vector<8x32xf32>
    %79 = vector.broadcast %74 : vector<1x32xf32> to vector<8x32xf32>
    %80 = arith.addf %78, %79 : vector<8x32xf32>
    %cst_59 = arith.constant 0.000000e+00 : f32
    %81 = vector.broadcast %cst_59 : f32 to vector<8x32xf32>
    %82 = arith.maximumf %80, %81 : vector<8x32xf32>
    %83 = arith.truncf %82 : vector<8x32xf32> to vector<8x32xbf16>
    %cst_60 = arith.constant dense<0.000000e+00> : vector<8x32xf32>
    %84 = tpu.matmul %83, %75, %cst_60 {dimension_numbers = #tpu.dot_dimension_numbers<[1], [0], [0], [1], [0, 0, 1, 1], [], []>} : vector<8x32xbf16>, vector<32x32xbf16>, vector<8x32xf32> -> vector<8x32xf32>
    %85 = vector.broadcast %76 : vector<1x32xf32> to vector<8x32xf32>
    %86 = arith.addf %84, %85 : vector<8x32xf32>
    %87 = arith.truncf %86 : vector<8x32xf32> to vector<8x32xbf16>
    %c0_61 = arith.constant 0 : index
    %c0_62 = arith.constant 0 : index
    %c0_63 = arith.constant 0 : index
    %88 = vector.load %arg15[%c0_61, %c0_62, %c0_63] : memref<9x32x32xbf16, #tpu.memory_space<vmem>>, vector<1x32x32xbf16>
    %89 = vector.shape_cast %88 : vector<1x32x32xbf16> to vector<32x32xbf16>
    %c1_64 = arith.constant 1 : index
    %c0_65 = arith.constant 0 : index
    %c0_66 = arith.constant 0 : index
    %90 = vector.load %arg15[%c1_64, %c0_65, %c0_66] : memref<9x32x32xbf16, #tpu.memory_space<vmem>>, vector<1x32x32xbf16>
    %91 = vector.shape_cast %90 : vector<1x32x32xbf16> to vector<32x32xbf16>
    %c2_67 = arith.constant 2 : index
    %c0_68 = arith.constant 0 : index
    %c0_69 = arith.constant 0 : index
    %92 = vector.load %arg15[%c2_67, %c0_68, %c0_69] : memref<9x32x32xbf16, #tpu.memory_space<vmem>>, vector<1x32x32xbf16>
    %93 = vector.shape_cast %92 : vector<1x32x32xbf16> to vector<32x32xbf16>
    %c0_70 = arith.constant 0 : index
    %c0_71 = arith.constant 0 : index
    %94 = vector.load %arg17[%c0_70, %c0_71] : memref<18x32xf32, #tpu.memory_space<vmem>>, vector<1x32xf32>
    %c1_72 = arith.constant 1 : index
    %c0_73 = arith.constant 0 : index
    %95 = vector.load %arg17[%c1_72, %c0_73] : memref<18x32xf32, #tpu.memory_space<vmem>>, vector<1x32xf32>
    %c0_74 = arith.constant 0 : index
    %c0_75 = arith.constant 0 : index
    %c0_76 = arith.constant 0 : index
    %96 = vector.load %arg16[%c0_74, %c0_75, %c0_76] : memref<6x32x32xbf16, #tpu.memory_space<vmem>>, vector<1x32x32xbf16>
    %97 = vector.shape_cast %96 : vector<1x32x32xbf16> to vector<32x32xbf16>
    %c2_77 = arith.constant 2 : index
    %c0_78 = arith.constant 0 : index
    %98 = vector.load %arg17[%c2_77, %c0_78] : memref<18x32xf32, #tpu.memory_space<vmem>>, vector<1x32xf32>
    %c1_79 = arith.constant 1 : index
    %c0_80 = arith.constant 0 : index
    %c0_81 = arith.constant 0 : index
    %99 = vector.load %arg16[%c1_79, %c0_80, %c0_81] : memref<6x32x32xbf16, #tpu.memory_space<vmem>>, vector<1x32x32xbf16>
    %100 = vector.shape_cast %99 : vector<1x32x32xbf16> to vector<32x32xbf16>
    %c3 = arith.constant 3 : index
    %c0_82 = arith.constant 0 : index
    %101 = vector.load %arg17[%c3, %c0_82] : memref<18x32xf32, #tpu.memory_space<vmem>>, vector<1x32xf32>
    %c4 = arith.constant 4 : index
    %c0_83 = arith.constant 0 : index
    %102 = vector.load %arg17[%c4, %c0_83] : memref<18x32xf32, #tpu.memory_space<vmem>>, vector<1x32xf32>
    %c5 = arith.constant 5 : index
    %c0_84 = arith.constant 0 : index
    %103 = vector.load %arg17[%c5, %c0_84] : memref<18x32xf32, #tpu.memory_space<vmem>>, vector<1x32xf32>
    %104 = arith.truncf %28 : vector<16x32xf32> to vector<16x32xbf16>
    %cst_85 = arith.constant dense<0.000000e+00> : vector<16x32xf32>
    %105 = tpu.matmul %104, %89, %cst_85 {dimension_numbers = #tpu.dot_dimension_numbers<[1], [0], [0], [1], [0, 0, 1, 1], [], []>} : vector<16x32xbf16>, vector<32x32xbf16>, vector<16x32xf32> -> vector<16x32xf32>
    %cst_86 = arith.constant dense<0.000000e+00> : vector<16x32xf32>
    %106 = tpu.matmul %104, %91, %cst_86 {dimension_numbers = #tpu.dot_dimension_numbers<[1], [0], [0], [1], [0, 0, 1, 1], [], []>} : vector<16x32xbf16>, vector<32x32xbf16>, vector<16x32xf32> -> vector<16x32xf32>
    %cst_87 = arith.constant dense<0.000000e+00> : vector<16x32xf32>
    %107 = tpu.matmul %104, %93, %cst_87 {dimension_numbers = #tpu.dot_dimension_numbers<[1], [0], [0], [1], [0, 0, 1, 1], [], []>} : vector<16x32xbf16>, vector<32x32xbf16>, vector<16x32xf32> -> vector<16x32xf32>
    %cst_88 = arith.constant dense<0.000000e+00> : vector<8x32xf32>
    %108 = tpu.matmul %72, %91, %cst_88 {dimension_numbers = #tpu.dot_dimension_numbers<[1], [0], [0], [1], [0, 0, 1, 1], [], []>} : vector<8x32xbf16>, vector<32x32xbf16>, vector<8x32xf32> -> vector<8x32xf32>
    %cst_89 = arith.constant dense<0.000000e+00> : vector<8x32xf32>
    %109 = tpu.matmul %72, %93, %cst_89 {dimension_numbers = #tpu.dot_dimension_numbers<[1], [0], [0], [1], [0, 0, 1, 1], [], []>} : vector<8x32xbf16>, vector<32x32xbf16>, vector<8x32xf32> -> vector<8x32xf32>
    %110 = arith.mulf %105, %106 : vector<16x32xf32>
    %cst_90 = arith.constant dense<0.000000e+00> : vector<16xf32>
    %111 = vector.multi_reduction <add>, %110, %cst_90 [1] : vector<16x32xf32> to vector<16xf32>
    %112 = vector.shape_cast %111 : vector<16xf32> to vector<16x1xf32>
    %cst_91 = arith.constant 0.176776692 : f32
    %113 = vector.broadcast %cst_91 : f32 to vector<16x1xf32>
    %114 = arith.mulf %112, %113 : vector<16x1xf32>
    %115 = arith.truncf %105 : vector<16x32xf32> to vector<16x32xbf16>
    %116 = arith.truncf %108 : vector<8x32xf32> to vector<8x32xbf16>
    %cst_92 = arith.constant dense<0.000000e+00> : vector<16x8xf32>
    %117 = tpu.matmul %115, %116, %cst_92 {dimension_numbers = #tpu.dot_dimension_numbers<[1], [1], [0], [0], [0, 0, 1, 0], [], []>} : vector<16x32xbf16>, vector<8x32xbf16>, vector<16x8xf32> -> vector<16x8xf32>
    %cst_93 = arith.constant 0.176776692 : f32
    %118 = vector.broadcast %cst_93 : f32 to vector<16x8xf32>
    %119 = arith.mulf %117, %118 : vector<16x8xf32>
    %120 = tpu.iota {dimensions = array<i32: 1>} : vector<16x8xi32>
    %c5_i32 = arith.constant 5 : i32
    %121 = vector.broadcast %c5_i32 : i32 to vector<16x8xi32>
    %122 = arith.cmpi slt, %120, %121 : vector<16x8xi32>
    %cst_94 = arith.constant -1.000000e+30 : f32
    %123 = vector.broadcast %cst_94 : f32 to vector<16x8xf32>
    %124 = arith.select %122, %119, %123 : vector<16x8xi1>, vector<16x8xf32>
    %cst_95 = arith.constant dense<0xFF800000> : vector<16xf32>
    %125 = vector.multi_reduction <maximumf>, %124, %cst_95 [1] : vector<16x8xf32> to vector<16xf32>
    %126 = vector.shape_cast %125 : vector<16xf32> to vector<16x1xf32>
    %127 = arith.maximumf %114, %126 : vector<16x1xf32>
    %128 = arith.subf %114, %127 : vector<16x1xf32>
    %129 = math.exp %128 : vector<16x1xf32>
    %130 = vector.broadcast %127 : vector<16x1xf32> to vector<16x8xf32>
    %131 = arith.subf %124, %130 : vector<16x8xf32>
    %132 = math.exp %131 : vector<16x8xf32>
    %cst_96 = arith.constant dense<0.000000e+00> : vector<16xf32>
    %133 = vector.multi_reduction <add>, %132, %cst_96 [1] : vector<16x8xf32> to vector<16xf32>
    %134 = vector.shape_cast %133 : vector<16xf32> to vector<16x1xf32>
    %135 = arith.addf %129, %134 : vector<16x1xf32>
    %136 = vector.broadcast %129 : vector<16x1xf32> to vector<16x32xf32>
    %137 = arith.mulf %136, %107 : vector<16x32xf32>
    %138 = arith.truncf %132 : vector<16x8xf32> to vector<16x8xbf16>
    %139 = arith.truncf %109 : vector<8x32xf32> to vector<8x32xbf16>
    %cst_97 = arith.constant dense<0.000000e+00> : vector<16x32xf32>
    %140 = tpu.matmul %138, %139, %cst_97 {dimension_numbers = #tpu.dot_dimension_numbers<[1], [0], [0], [1], [0, 0, 1, 1], [], []>} : vector<16x8xbf16>, vector<8x32xbf16>, vector<16x32xf32> -> vector<16x32xf32>
    %141 = arith.addf %137, %140 : vector<16x32xf32>
    %142 = tpu.reciprocal %135 {approx = true} : vector<16x1xf32> -> vector<16x1xf32>
    %143 = vector.broadcast %142 : vector<16x1xf32> to vector<16x32xf32>
    %144 = arith.mulf %141, %143 : vector<16x32xf32>
    %145 = arith.addf %144, %28 : vector<16x32xf32>
    %cst_98 = arith.constant dense<0.000000e+00> : vector<16xf32>
    %146 = vector.multi_reduction <add>, %145, %cst_98 [1] : vector<16x32xf32> to vector<16xf32>
    %147 = vector.shape_cast %146 : vector<16xf32> to vector<16x1xf32>
    %cst_99 = arith.constant 3.200000e+01 : f32
    %148 = vector.broadcast %cst_99 : f32 to vector<16x1xf32>
    %149 = arith.divf %147, %148 : vector<16x1xf32>
    %150 = vector.broadcast %149 : vector<16x1xf32> to vector<16x32xf32>
    %151 = arith.subf %145, %150 : vector<16x32xf32>
    %152 = arith.mulf %151, %151 : vector<16x32xf32>
    %cst_100 = arith.constant dense<0.000000e+00> : vector<16xf32>
    %153 = vector.multi_reduction <add>, %152, %cst_100 [1] : vector<16x32xf32> to vector<16xf32>
    %154 = vector.shape_cast %153 : vector<16xf32> to vector<16x1xf32>
    %cst_101 = arith.constant 3.200000e+01 : f32
    %155 = vector.broadcast %cst_101 : f32 to vector<16x1xf32>
    %156 = arith.divf %154, %155 : vector<16x1xf32>
    %157 = vector.broadcast %149 : vector<16x1xf32> to vector<16x32xf32>
    %158 = arith.subf %145, %157 : vector<16x32xf32>
    %cst_102 = arith.constant 9.99999997E-7 : f32
    %159 = vector.broadcast %cst_102 : f32 to vector<16x1xf32>
    %160 = arith.addf %156, %159 : vector<16x1xf32>
    %161 = math.rsqrt %160 : vector<16x1xf32>
    %162 = vector.broadcast %161 : vector<16x1xf32> to vector<16x32xf32>
    %163 = arith.mulf %158, %162 : vector<16x32xf32>
    %164 = vector.broadcast %94 : vector<1x32xf32> to vector<16x32xf32>
    %165 = arith.mulf %163, %164 : vector<16x32xf32>
    %166 = vector.broadcast %95 : vector<1x32xf32> to vector<16x32xf32>
    %167 = arith.addf %165, %166 : vector<16x32xf32>
    %168 = arith.truncf %167 : vector<16x32xf32> to vector<16x32xbf16>
    %cst_103 = arith.constant dense<0.000000e+00> : vector<16x32xf32>
    %169 = tpu.matmul %168, %97, %cst_103 {dimension_numbers = #tpu.dot_dimension_numbers<[1], [0], [0], [1], [0, 0, 1, 1], [], []>} : vector<16x32xbf16>, vector<32x32xbf16>, vector<16x32xf32> -> vector<16x32xf32>
    %170 = vector.broadcast %98 : vector<1x32xf32> to vector<16x32xf32>
    %171 = arith.addf %169, %170 : vector<16x32xf32>
    %cst_104 = arith.constant 0.000000e+00 : f32
    %172 = vector.broadcast %cst_104 : f32 to vector<16x32xf32>
    %173 = arith.maximumf %171, %172 : vector<16x32xf32>
    %174 = arith.truncf %173 : vector<16x32xf32> to vector<16x32xbf16>
    %cst_105 = arith.constant dense<0.000000e+00> : vector<16x32xf32>
    %175 = tpu.matmul %174, %100, %cst_105 {dimension_numbers = #tpu.dot_dimension_numbers<[1], [0], [0], [1], [0, 0, 1, 1], [], []>} : vector<16x32xbf16>, vector<32x32xbf16>, vector<16x32xf32> -> vector<16x32xf32>
    %176 = vector.broadcast %101 : vector<1x32xf32> to vector<16x32xf32>
    %177 = arith.addf %175, %176 : vector<16x32xf32>
    %178 = arith.addf %177, %167 : vector<16x32xf32>
    %cst_106 = arith.constant dense<0.000000e+00> : vector<16xf32>
    %179 = vector.multi_reduction <add>, %178, %cst_106 [1] : vector<16x32xf32> to vector<16xf32>
    %180 = vector.shape_cast %179 : vector<16xf32> to vector<16x1xf32>
    %cst_107 = arith.constant 3.200000e+01 : f32
    %181 = vector.broadcast %cst_107 : f32 to vector<16x1xf32>
    %182 = arith.divf %180, %181 : vector<16x1xf32>
    %183 = vector.broadcast %182 : vector<16x1xf32> to vector<16x32xf32>
    %184 = arith.subf %178, %183 : vector<16x32xf32>
    %185 = arith.mulf %184, %184 : vector<16x32xf32>
    %cst_108 = arith.constant dense<0.000000e+00> : vector<16xf32>
    %186 = vector.multi_reduction <add>, %185, %cst_108 [1] : vector<16x32xf32> to vector<16xf32>
    %187 = vector.shape_cast %186 : vector<16xf32> to vector<16x1xf32>
    %cst_109 = arith.constant 3.200000e+01 : f32
    %188 = vector.broadcast %cst_109 : f32 to vector<16x1xf32>
    %189 = arith.divf %187, %188 : vector<16x1xf32>
    %190 = vector.broadcast %182 : vector<16x1xf32> to vector<16x32xf32>
    %191 = arith.subf %178, %190 : vector<16x32xf32>
    %cst_110 = arith.constant 9.99999997E-7 : f32
    %192 = vector.broadcast %cst_110 : f32 to vector<16x1xf32>
    %193 = arith.addf %189, %192 : vector<16x1xf32>
    %194 = math.rsqrt %193 : vector<16x1xf32>
    %195 = vector.broadcast %194 : vector<16x1xf32> to vector<16x32xf32>
    %196 = arith.mulf %191, %195 : vector<16x32xf32>
    %197 = vector.broadcast %102 : vector<1x32xf32> to vector<16x32xf32>
    %198 = arith.mulf %196, %197 : vector<16x32xf32>
    %199 = vector.broadcast %103 : vector<1x32xf32> to vector<16x32xf32>
    %200 = arith.addf %198, %199 : vector<16x32xf32>
    %c0_111 = arith.constant 0 : index
    %c0_112 = arith.constant 0 : index
    %c0_113 = arith.constant 0 : index
    %201 = vector.load %arg18[%c0_111, %c0_112, %c0_113] : memref<9x32x32xbf16, #tpu.memory_space<vmem>>, vector<1x32x32xbf16>
    %202 = vector.shape_cast %201 : vector<1x32x32xbf16> to vector<32x32xbf16>
    %c1_114 = arith.constant 1 : index
    %c0_115 = arith.constant 0 : index
    %c0_116 = arith.constant 0 : index
    %203 = vector.load %arg18[%c1_114, %c0_115, %c0_116] : memref<9x32x32xbf16, #tpu.memory_space<vmem>>, vector<1x32x32xbf16>
    %204 = vector.shape_cast %203 : vector<1x32x32xbf16> to vector<32x32xbf16>
    %c2_117 = arith.constant 2 : index
    %c0_118 = arith.constant 0 : index
    %c0_119 = arith.constant 0 : index
    %205 = vector.load %arg18[%c2_117, %c0_118, %c0_119] : memref<9x32x32xbf16, #tpu.memory_space<vmem>>, vector<1x32x32xbf16>
    %206 = vector.shape_cast %205 : vector<1x32x32xbf16> to vector<32x32xbf16>
    %c0_120 = arith.constant 0 : index
    %c0_121 = arith.constant 0 : index
    %207 = vector.load %arg20[%c0_120, %c0_121] : memref<18x32xf32, #tpu.memory_space<vmem>>, vector<1x32xf32>
    %c1_122 = arith.constant 1 : index
    %c0_123 = arith.constant 0 : index
    %208 = vector.load %arg20[%c1_122, %c0_123] : memref<18x32xf32, #tpu.memory_space<vmem>>, vector<1x32xf32>
    %c0_124 = arith.constant 0 : index
    %c0_125 = arith.constant 0 : index
    %c0_126 = arith.constant 0 : index
    %209 = vector.load %arg19[%c0_124, %c0_125, %c0_126] : memref<6x32x32xbf16, #tpu.memory_space<vmem>>, vector<1x32x32xbf16>
    %210 = vector.shape_cast %209 : vector<1x32x32xbf16> to vector<32x32xbf16>
    %c2_127 = arith.constant 2 : index
    %c0_128 = arith.constant 0 : index
    %211 = vector.load %arg20[%c2_127, %c0_128] : memref<18x32xf32, #tpu.memory_space<vmem>>, vector<1x32xf32>
    %c1_129 = arith.constant 1 : index
    %c0_130 = arith.constant 0 : index
    %c0_131 = arith.constant 0 : index
    %212 = vector.load %arg19[%c1_129, %c0_130, %c0_131] : memref<6x32x32xbf16, #tpu.memory_space<vmem>>, vector<1x32x32xbf16>
    %213 = vector.shape_cast %212 : vector<1x32x32xbf16> to vector<32x32xbf16>
    %c3_132 = arith.constant 3 : index
    %c0_133 = arith.constant 0 : index
    %214 = vector.load %arg20[%c3_132, %c0_133] : memref<18x32xf32, #tpu.memory_space<vmem>>, vector<1x32xf32>
    %c4_134 = arith.constant 4 : index
    %c0_135 = arith.constant 0 : index
    %215 = vector.load %arg20[%c4_134, %c0_135] : memref<18x32xf32, #tpu.memory_space<vmem>>, vector<1x32xf32>
    %c5_136 = arith.constant 5 : index
    %c0_137 = arith.constant 0 : index
    %216 = vector.load %arg20[%c5_136, %c0_137] : memref<18x32xf32, #tpu.memory_space<vmem>>, vector<1x32xf32>
    %217 = arith.truncf %56 : vector<24x32xf32> to vector<24x32xbf16>
    %cst_138 = arith.constant dense<0.000000e+00> : vector<24x32xf32>
    %218 = tpu.matmul %217, %202, %cst_138 {dimension_numbers = #tpu.dot_dimension_numbers<[1], [0], [0], [1], [0, 0, 1, 1], [], []>} : vector<24x32xbf16>, vector<32x32xbf16>, vector<24x32xf32> -> vector<24x32xf32>
    %cst_139 = arith.constant dense<0.000000e+00> : vector<24x32xf32>
    %219 = tpu.matmul %217, %204, %cst_139 {dimension_numbers = #tpu.dot_dimension_numbers<[1], [0], [0], [1], [0, 0, 1, 1], [], []>} : vector<24x32xbf16>, vector<32x32xbf16>, vector<24x32xf32> -> vector<24x32xf32>
    %cst_140 = arith.constant dense<0.000000e+00> : vector<24x32xf32>
    %220 = tpu.matmul %217, %206, %cst_140 {dimension_numbers = #tpu.dot_dimension_numbers<[1], [0], [0], [1], [0, 0, 1, 1], [], []>} : vector<24x32xbf16>, vector<32x32xbf16>, vector<24x32xf32> -> vector<24x32xf32>
    %cst_141 = arith.constant dense<0.000000e+00> : vector<8x32xf32>
    %221 = tpu.matmul %87, %204, %cst_141 {dimension_numbers = #tpu.dot_dimension_numbers<[1], [0], [0], [1], [0, 0, 1, 1], [], []>} : vector<8x32xbf16>, vector<32x32xbf16>, vector<8x32xf32> -> vector<8x32xf32>
    %cst_142 = arith.constant dense<0.000000e+00> : vector<8x32xf32>
    %222 = tpu.matmul %87, %206, %cst_142 {dimension_numbers = #tpu.dot_dimension_numbers<[1], [0], [0], [1], [0, 0, 1, 1], [], []>} : vector<8x32xbf16>, vector<32x32xbf16>, vector<8x32xf32> -> vector<8x32xf32>
    %223 = arith.mulf %218, %219 : vector<24x32xf32>
    %cst_143 = arith.constant dense<0.000000e+00> : vector<24xf32>
    %224 = vector.multi_reduction <add>, %223, %cst_143 [1] : vector<24x32xf32> to vector<24xf32>
    %225 = vector.shape_cast %224 : vector<24xf32> to vector<24x1xf32>
    %cst_144 = arith.constant 0.176776692 : f32
    %226 = vector.broadcast %cst_144 : f32 to vector<24x1xf32>
    %227 = arith.mulf %225, %226 : vector<24x1xf32>
    %228 = arith.truncf %218 : vector<24x32xf32> to vector<24x32xbf16>
    %229 = arith.truncf %221 : vector<8x32xf32> to vector<8x32xbf16>
    %cst_145 = arith.constant dense<0.000000e+00> : vector<24x8xf32>
    %230 = tpu.matmul %228, %229, %cst_145 {dimension_numbers = #tpu.dot_dimension_numbers<[1], [1], [0], [0], [0, 0, 1, 0], [], []>} : vector<24x32xbf16>, vector<8x32xbf16>, vector<24x8xf32> -> vector<24x8xf32>
    %cst_146 = arith.constant 0.176776692 : f32
    %231 = vector.broadcast %cst_146 : f32 to vector<24x8xf32>
    %232 = arith.mulf %230, %231 : vector<24x8xf32>
    %233 = tpu.iota {dimensions = array<i32: 1>} : vector<24x8xi32>
    %c5_i32_147 = arith.constant 5 : i32
    %234 = vector.broadcast %c5_i32_147 : i32 to vector<24x8xi32>
    %235 = arith.cmpi slt, %233, %234 : vector<24x8xi32>
    %cst_148 = arith.constant -1.000000e+30 : f32
    %236 = vector.broadcast %cst_148 : f32 to vector<24x8xf32>
    %237 = arith.select %235, %232, %236 : vector<24x8xi1>, vector<24x8xf32>
    %cst_149 = arith.constant dense<0xFF800000> : vector<24xf32>
    %238 = vector.multi_reduction <maximumf>, %237, %cst_149 [1] : vector<24x8xf32> to vector<24xf32>
    %239 = vector.shape_cast %238 : vector<24xf32> to vector<24x1xf32>
    %240 = arith.maximumf %227, %239 : vector<24x1xf32>
    %241 = arith.subf %227, %240 : vector<24x1xf32>
    %242 = math.exp %241 : vector<24x1xf32>
    %243 = vector.broadcast %240 : vector<24x1xf32> to vector<24x8xf32>
    %244 = arith.subf %237, %243 : vector<24x8xf32>
    %245 = math.exp %244 : vector<24x8xf32>
    %cst_150 = arith.constant dense<0.000000e+00> : vector<24xf32>
    %246 = vector.multi_reduction <add>, %245, %cst_150 [1] : vector<24x8xf32> to vector<24xf32>
    %247 = vector.shape_cast %246 : vector<24xf32> to vector<24x1xf32>
    %248 = arith.addf %242, %247 : vector<24x1xf32>
    %249 = vector.broadcast %242 : vector<24x1xf32> to vector<24x32xf32>
    %250 = arith.mulf %249, %220 : vector<24x32xf32>
    %251 = arith.truncf %245 : vector<24x8xf32> to vector<24x8xbf16>
    %252 = arith.truncf %222 : vector<8x32xf32> to vector<8x32xbf16>
    %cst_151 = arith.constant dense<0.000000e+00> : vector<24x32xf32>
    %253 = tpu.matmul %251, %252, %cst_151 {dimension_numbers = #tpu.dot_dimension_numbers<[1], [0], [0], [1], [0, 0, 1, 1], [], []>} : vector<24x8xbf16>, vector<8x32xbf16>, vector<24x32xf32> -> vector<24x32xf32>
    %254 = arith.addf %250, %253 : vector<24x32xf32>
    %255 = tpu.reciprocal %248 {approx = true} : vector<24x1xf32> -> vector<24x1xf32>
    %256 = vector.broadcast %255 : vector<24x1xf32> to vector<24x32xf32>
    %257 = arith.mulf %254, %256 : vector<24x32xf32>
    %258 = arith.addf %257, %56 : vector<24x32xf32>
    %cst_152 = arith.constant dense<0.000000e+00> : vector<24xf32>
    %259 = vector.multi_reduction <add>, %258, %cst_152 [1] : vector<24x32xf32> to vector<24xf32>
    %260 = vector.shape_cast %259 : vector<24xf32> to vector<24x1xf32>
    %cst_153 = arith.constant 3.200000e+01 : f32
    %261 = vector.broadcast %cst_153 : f32 to vector<24x1xf32>
    %262 = arith.divf %260, %261 : vector<24x1xf32>
    %263 = vector.broadcast %262 : vector<24x1xf32> to vector<24x32xf32>
    %264 = arith.subf %258, %263 : vector<24x32xf32>
    %265 = arith.mulf %264, %264 : vector<24x32xf32>
    %cst_154 = arith.constant dense<0.000000e+00> : vector<24xf32>
    %266 = vector.multi_reduction <add>, %265, %cst_154 [1] : vector<24x32xf32> to vector<24xf32>
    %267 = vector.shape_cast %266 : vector<24xf32> to vector<24x1xf32>
    %cst_155 = arith.constant 3.200000e+01 : f32
    %268 = vector.broadcast %cst_155 : f32 to vector<24x1xf32>
    %269 = arith.divf %267, %268 : vector<24x1xf32>
    %270 = vector.broadcast %262 : vector<24x1xf32> to vector<24x32xf32>
    %271 = arith.subf %258, %270 : vector<24x32xf32>
    %cst_156 = arith.constant 9.99999997E-7 : f32
    %272 = vector.broadcast %cst_156 : f32 to vector<24x1xf32>
    %273 = arith.addf %269, %272 : vector<24x1xf32>
    %274 = math.rsqrt %273 : vector<24x1xf32>
    %275 = vector.broadcast %274 : vector<24x1xf32> to vector<24x32xf32>
    %276 = arith.mulf %271, %275 : vector<24x32xf32>
    %277 = vector.broadcast %207 : vector<1x32xf32> to vector<24x32xf32>
    %278 = arith.mulf %276, %277 : vector<24x32xf32>
    %279 = vector.broadcast %208 : vector<1x32xf32> to vector<24x32xf32>
    %280 = arith.addf %278, %279 : vector<24x32xf32>
    %281 = arith.truncf %280 : vector<24x32xf32> to vector<24x32xbf16>
    %cst_157 = arith.constant dense<0.000000e+00> : vector<24x32xf32>
    %282 = tpu.matmul %281, %210, %cst_157 {dimension_numbers = #tpu.dot_dimension_numbers<[1], [0], [0], [1], [0, 0, 1, 1], [], []>} : vector<24x32xbf16>, vector<32x32xbf16>, vector<24x32xf32> -> vector<24x32xf32>
    %283 = vector.broadcast %211 : vector<1x32xf32> to vector<24x32xf32>
    %284 = arith.addf %282, %283 : vector<24x32xf32>
    %cst_158 = arith.constant 0.000000e+00 : f32
    %285 = vector.broadcast %cst_158 : f32 to vector<24x32xf32>
    %286 = arith.maximumf %284, %285 : vector<24x32xf32>
    %287 = arith.truncf %286 : vector<24x32xf32> to vector<24x32xbf16>
    %cst_159 = arith.constant dense<0.000000e+00> : vector<24x32xf32>
    %288 = tpu.matmul %287, %213, %cst_159 {dimension_numbers = #tpu.dot_dimension_numbers<[1], [0], [0], [1], [0, 0, 1, 1], [], []>} : vector<24x32xbf16>, vector<32x32xbf16>, vector<24x32xf32> -> vector<24x32xf32>
    %289 = vector.broadcast %214 : vector<1x32xf32> to vector<24x32xf32>
    %290 = arith.addf %288, %289 : vector<24x32xf32>
    %291 = arith.addf %290, %280 : vector<24x32xf32>
    %cst_160 = arith.constant dense<0.000000e+00> : vector<24xf32>
    %292 = vector.multi_reduction <add>, %291, %cst_160 [1] : vector<24x32xf32> to vector<24xf32>
    %293 = vector.shape_cast %292 : vector<24xf32> to vector<24x1xf32>
    %cst_161 = arith.constant 3.200000e+01 : f32
    %294 = vector.broadcast %cst_161 : f32 to vector<24x1xf32>
    %295 = arith.divf %293, %294 : vector<24x1xf32>
    %296 = vector.broadcast %295 : vector<24x1xf32> to vector<24x32xf32>
    %297 = arith.subf %291, %296 : vector<24x32xf32>
    %298 = arith.mulf %297, %297 : vector<24x32xf32>
    %cst_162 = arith.constant dense<0.000000e+00> : vector<24xf32>
    %299 = vector.multi_reduction <add>, %298, %cst_162 [1] : vector<24x32xf32> to vector<24xf32>
    %300 = vector.shape_cast %299 : vector<24xf32> to vector<24x1xf32>
    %cst_163 = arith.constant 3.200000e+01 : f32
    %301 = vector.broadcast %cst_163 : f32 to vector<24x1xf32>
    %302 = arith.divf %300, %301 : vector<24x1xf32>
    %303 = vector.broadcast %295 : vector<24x1xf32> to vector<24x32xf32>
    %304 = arith.subf %291, %303 : vector<24x32xf32>
    %cst_164 = arith.constant 9.99999997E-7 : f32
    %305 = vector.broadcast %cst_164 : f32 to vector<24x1xf32>
    %306 = arith.addf %302, %305 : vector<24x1xf32>
    %307 = math.rsqrt %306 : vector<24x1xf32>
    %308 = vector.broadcast %307 : vector<24x1xf32> to vector<24x32xf32>
    %309 = arith.mulf %304, %308 : vector<24x32xf32>
    %310 = vector.broadcast %215 : vector<1x32xf32> to vector<24x32xf32>
    %311 = arith.mulf %309, %310 : vector<24x32xf32>
    %312 = vector.broadcast %216 : vector<1x32xf32> to vector<24x32xf32>
    %313 = arith.addf %311, %312 : vector<24x32xf32>
    %c3_165 = arith.constant 3 : index
    %c0_166 = arith.constant 0 : index
    %c0_167 = arith.constant 0 : index
    %314 = vector.load %arg15[%c3_165, %c0_166, %c0_167] : memref<9x32x32xbf16, #tpu.memory_space<vmem>>, vector<1x32x32xbf16>
    %315 = vector.shape_cast %314 : vector<1x32x32xbf16> to vector<32x32xbf16>
    %c4_168 = arith.constant 4 : index
    %c0_169 = arith.constant 0 : index
    %c0_170 = arith.constant 0 : index
    %316 = vector.load %arg15[%c4_168, %c0_169, %c0_170] : memref<9x32x32xbf16, #tpu.memory_space<vmem>>, vector<1x32x32xbf16>
    %317 = vector.shape_cast %316 : vector<1x32x32xbf16> to vector<32x32xbf16>
    %c5_171 = arith.constant 5 : index
    %c0_172 = arith.constant 0 : index
    %c0_173 = arith.constant 0 : index
    %318 = vector.load %arg15[%c5_171, %c0_172, %c0_173] : memref<9x32x32xbf16, #tpu.memory_space<vmem>>, vector<1x32x32xbf16>
    %319 = vector.shape_cast %318 : vector<1x32x32xbf16> to vector<32x32xbf16>
    %c6 = arith.constant 6 : index
    %c0_174 = arith.constant 0 : index
    %320 = vector.load %arg17[%c6, %c0_174] : memref<18x32xf32, #tpu.memory_space<vmem>>, vector<1x32xf32>
    %c7 = arith.constant 7 : index
    %c0_175 = arith.constant 0 : index
    %321 = vector.load %arg17[%c7, %c0_175] : memref<18x32xf32, #tpu.memory_space<vmem>>, vector<1x32xf32>
    %c2_176 = arith.constant 2 : index
    %c0_177 = arith.constant 0 : index
    %c0_178 = arith.constant 0 : index
    %322 = vector.load %arg16[%c2_176, %c0_177, %c0_178] : memref<6x32x32xbf16, #tpu.memory_space<vmem>>, vector<1x32x32xbf16>
    %323 = vector.shape_cast %322 : vector<1x32x32xbf16> to vector<32x32xbf16>
    %c8 = arith.constant 8 : index
    %c0_179 = arith.constant 0 : index
    %324 = vector.load %arg17[%c8, %c0_179] : memref<18x32xf32, #tpu.memory_space<vmem>>, vector<1x32xf32>
    %c3_180 = arith.constant 3 : index
    %c0_181 = arith.constant 0 : index
    %c0_182 = arith.constant 0 : index
    %325 = vector.load %arg16[%c3_180, %c0_181, %c0_182] : memref<6x32x32xbf16, #tpu.memory_space<vmem>>, vector<1x32x32xbf16>
    %326 = vector.shape_cast %325 : vector<1x32x32xbf16> to vector<32x32xbf16>
    %c9 = arith.constant 9 : index
    %c0_183 = arith.constant 0 : index
    %327 = vector.load %arg17[%c9, %c0_183] : memref<18x32xf32, #tpu.memory_space<vmem>>, vector<1x32xf32>
    %c10 = arith.constant 10 : index
    %c0_184 = arith.constant 0 : index
    %328 = vector.load %arg17[%c10, %c0_184] : memref<18x32xf32, #tpu.memory_space<vmem>>, vector<1x32xf32>
    %c11 = arith.constant 11 : index
    %c0_185 = arith.constant 0 : index
    %329 = vector.load %arg17[%c11, %c0_185] : memref<18x32xf32, #tpu.memory_space<vmem>>, vector<1x32xf32>
    %330 = arith.truncf %200 : vector<16x32xf32> to vector<16x32xbf16>
    %cst_186 = arith.constant dense<0.000000e+00> : vector<16x32xf32>
    %331 = tpu.matmul %330, %315, %cst_186 {dimension_numbers = #tpu.dot_dimension_numbers<[1], [0], [0], [1], [0, 0, 1, 1], [], []>} : vector<16x32xbf16>, vector<32x32xbf16>, vector<16x32xf32> -> vector<16x32xf32>
    %cst_187 = arith.constant dense<0.000000e+00> : vector<16x32xf32>
    %332 = tpu.matmul %330, %317, %cst_187 {dimension_numbers = #tpu.dot_dimension_numbers<[1], [0], [0], [1], [0, 0, 1, 1], [], []>} : vector<16x32xbf16>, vector<32x32xbf16>, vector<16x32xf32> -> vector<16x32xf32>
    %cst_188 = arith.constant dense<0.000000e+00> : vector<16x32xf32>
    %333 = tpu.matmul %330, %319, %cst_188 {dimension_numbers = #tpu.dot_dimension_numbers<[1], [0], [0], [1], [0, 0, 1, 1], [], []>} : vector<16x32xbf16>, vector<32x32xbf16>, vector<16x32xf32> -> vector<16x32xf32>
    %cst_189 = arith.constant dense<0.000000e+00> : vector<8x32xf32>
    %334 = tpu.matmul %72, %317, %cst_189 {dimension_numbers = #tpu.dot_dimension_numbers<[1], [0], [0], [1], [0, 0, 1, 1], [], []>} : vector<8x32xbf16>, vector<32x32xbf16>, vector<8x32xf32> -> vector<8x32xf32>
    %cst_190 = arith.constant dense<0.000000e+00> : vector<8x32xf32>
    %335 = tpu.matmul %72, %319, %cst_190 {dimension_numbers = #tpu.dot_dimension_numbers<[1], [0], [0], [1], [0, 0, 1, 1], [], []>} : vector<8x32xbf16>, vector<32x32xbf16>, vector<8x32xf32> -> vector<8x32xf32>
    %336 = arith.mulf %331, %332 : vector<16x32xf32>
    %cst_191 = arith.constant dense<0.000000e+00> : vector<16xf32>
    %337 = vector.multi_reduction <add>, %336, %cst_191 [1] : vector<16x32xf32> to vector<16xf32>
    %338 = vector.shape_cast %337 : vector<16xf32> to vector<16x1xf32>
    %cst_192 = arith.constant 0.176776692 : f32
    %339 = vector.broadcast %cst_192 : f32 to vector<16x1xf32>
    %340 = arith.mulf %338, %339 : vector<16x1xf32>
    %341 = arith.truncf %331 : vector<16x32xf32> to vector<16x32xbf16>
    %342 = arith.truncf %334 : vector<8x32xf32> to vector<8x32xbf16>
    %cst_193 = arith.constant dense<0.000000e+00> : vector<16x8xf32>
    %343 = tpu.matmul %341, %342, %cst_193 {dimension_numbers = #tpu.dot_dimension_numbers<[1], [1], [0], [0], [0, 0, 1, 0], [], []>} : vector<16x32xbf16>, vector<8x32xbf16>, vector<16x8xf32> -> vector<16x8xf32>
    %cst_194 = arith.constant 0.176776692 : f32
    %344 = vector.broadcast %cst_194 : f32 to vector<16x8xf32>
    %345 = arith.mulf %343, %344 : vector<16x8xf32>
    %346 = tpu.iota {dimensions = array<i32: 1>} : vector<16x8xi32>
    %c5_i32_195 = arith.constant 5 : i32
    %347 = vector.broadcast %c5_i32_195 : i32 to vector<16x8xi32>
    %348 = arith.cmpi slt, %346, %347 : vector<16x8xi32>
    %cst_196 = arith.constant -1.000000e+30 : f32
    %349 = vector.broadcast %cst_196 : f32 to vector<16x8xf32>
    %350 = arith.select %348, %345, %349 : vector<16x8xi1>, vector<16x8xf32>
    %cst_197 = arith.constant dense<0xFF800000> : vector<16xf32>
    %351 = vector.multi_reduction <maximumf>, %350, %cst_197 [1] : vector<16x8xf32> to vector<16xf32>
    %352 = vector.shape_cast %351 : vector<16xf32> to vector<16x1xf32>
    %353 = arith.maximumf %340, %352 : vector<16x1xf32>
    %354 = arith.subf %340, %353 : vector<16x1xf32>
    %355 = math.exp %354 : vector<16x1xf32>
    %356 = vector.broadcast %353 : vector<16x1xf32> to vector<16x8xf32>
    %357 = arith.subf %350, %356 : vector<16x8xf32>
    %358 = math.exp %357 : vector<16x8xf32>
    %cst_198 = arith.constant dense<0.000000e+00> : vector<16xf32>
    %359 = vector.multi_reduction <add>, %358, %cst_198 [1] : vector<16x8xf32> to vector<16xf32>
    %360 = vector.shape_cast %359 : vector<16xf32> to vector<16x1xf32>
    %361 = arith.addf %355, %360 : vector<16x1xf32>
    %362 = vector.broadcast %355 : vector<16x1xf32> to vector<16x32xf32>
    %363 = arith.mulf %362, %333 : vector<16x32xf32>
    %364 = arith.truncf %358 : vector<16x8xf32> to vector<16x8xbf16>
    %365 = arith.truncf %335 : vector<8x32xf32> to vector<8x32xbf16>
    %cst_199 = arith.constant dense<0.000000e+00> : vector<16x32xf32>
    %366 = tpu.matmul %364, %365, %cst_199 {dimension_numbers = #tpu.dot_dimension_numbers<[1], [0], [0], [1], [0, 0, 1, 1], [], []>} : vector<16x8xbf16>, vector<8x32xbf16>, vector<16x32xf32> -> vector<16x32xf32>
    %367 = arith.addf %363, %366 : vector<16x32xf32>
    %368 = tpu.reciprocal %361 {approx = true} : vector<16x1xf32> -> vector<16x1xf32>
    %369 = vector.broadcast %368 : vector<16x1xf32> to vector<16x32xf32>
    %370 = arith.mulf %367, %369 : vector<16x32xf32>
    %371 = arith.addf %370, %200 : vector<16x32xf32>
    %cst_200 = arith.constant dense<0.000000e+00> : vector<16xf32>
    %372 = vector.multi_reduction <add>, %371, %cst_200 [1] : vector<16x32xf32> to vector<16xf32>
    %373 = vector.shape_cast %372 : vector<16xf32> to vector<16x1xf32>
    %cst_201 = arith.constant 3.200000e+01 : f32
    %374 = vector.broadcast %cst_201 : f32 to vector<16x1xf32>
    %375 = arith.divf %373, %374 : vector<16x1xf32>
    %376 = vector.broadcast %375 : vector<16x1xf32> to vector<16x32xf32>
    %377 = arith.subf %371, %376 : vector<16x32xf32>
    %378 = arith.mulf %377, %377 : vector<16x32xf32>
    %cst_202 = arith.constant dense<0.000000e+00> : vector<16xf32>
    %379 = vector.multi_reduction <add>, %378, %cst_202 [1] : vector<16x32xf32> to vector<16xf32>
    %380 = vector.shape_cast %379 : vector<16xf32> to vector<16x1xf32>
    %cst_203 = arith.constant 3.200000e+01 : f32
    %381 = vector.broadcast %cst_203 : f32 to vector<16x1xf32>
    %382 = arith.divf %380, %381 : vector<16x1xf32>
    %383 = vector.broadcast %375 : vector<16x1xf32> to vector<16x32xf32>
    %384 = arith.subf %371, %383 : vector<16x32xf32>
    %cst_204 = arith.constant 9.99999997E-7 : f32
    %385 = vector.broadcast %cst_204 : f32 to vector<16x1xf32>
    %386 = arith.addf %382, %385 : vector<16x1xf32>
    %387 = math.rsqrt %386 : vector<16x1xf32>
    %388 = vector.broadcast %387 : vector<16x1xf32> to vector<16x32xf32>
    %389 = arith.mulf %384, %388 : vector<16x32xf32>
    %390 = vector.broadcast %320 : vector<1x32xf32> to vector<16x32xf32>
    %391 = arith.mulf %389, %390 : vector<16x32xf32>
    %392 = vector.broadcast %321 : vector<1x32xf32> to vector<16x32xf32>
    %393 = arith.addf %391, %392 : vector<16x32xf32>
    %394 = arith.truncf %393 : vector<16x32xf32> to vector<16x32xbf16>
    %cst_205 = arith.constant dense<0.000000e+00> : vector<16x32xf32>
    %395 = tpu.matmul %394, %323, %cst_205 {dimension_numbers = #tpu.dot_dimension_numbers<[1], [0], [0], [1], [0, 0, 1, 1], [], []>} : vector<16x32xbf16>, vector<32x32xbf16>, vector<16x32xf32> -> vector<16x32xf32>
    %396 = vector.broadcast %324 : vector<1x32xf32> to vector<16x32xf32>
    %397 = arith.addf %395, %396 : vector<16x32xf32>
    %cst_206 = arith.constant 0.000000e+00 : f32
    %398 = vector.broadcast %cst_206 : f32 to vector<16x32xf32>
    %399 = arith.maximumf %397, %398 : vector<16x32xf32>
    %400 = arith.truncf %399 : vector<16x32xf32> to vector<16x32xbf16>
    %cst_207 = arith.constant dense<0.000000e+00> : vector<16x32xf32>
    %401 = tpu.matmul %400, %326, %cst_207 {dimension_numbers = #tpu.dot_dimension_numbers<[1], [0], [0], [1], [0, 0, 1, 1], [], []>} : vector<16x32xbf16>, vector<32x32xbf16>, vector<16x32xf32> -> vector<16x32xf32>
    %402 = vector.broadcast %327 : vector<1x32xf32> to vector<16x32xf32>
    %403 = arith.addf %401, %402 : vector<16x32xf32>
    %404 = arith.addf %403, %393 : vector<16x32xf32>
    %cst_208 = arith.constant dense<0.000000e+00> : vector<16xf32>
    %405 = vector.multi_reduction <add>, %404, %cst_208 [1] : vector<16x32xf32> to vector<16xf32>
    %406 = vector.shape_cast %405 : vector<16xf32> to vector<16x1xf32>
    %cst_209 = arith.constant 3.200000e+01 : f32
    %407 = vector.broadcast %cst_209 : f32 to vector<16x1xf32>
    %408 = arith.divf %406, %407 : vector<16x1xf32>
    %409 = vector.broadcast %408 : vector<16x1xf32> to vector<16x32xf32>
    %410 = arith.subf %404, %409 : vector<16x32xf32>
    %411 = arith.mulf %410, %410 : vector<16x32xf32>
    %cst_210 = arith.constant dense<0.000000e+00> : vector<16xf32>
    %412 = vector.multi_reduction <add>, %411, %cst_210 [1] : vector<16x32xf32> to vector<16xf32>
    %413 = vector.shape_cast %412 : vector<16xf32> to vector<16x1xf32>
    %cst_211 = arith.constant 3.200000e+01 : f32
    %414 = vector.broadcast %cst_211 : f32 to vector<16x1xf32>
    %415 = arith.divf %413, %414 : vector<16x1xf32>
    %416 = vector.broadcast %408 : vector<16x1xf32> to vector<16x32xf32>
    %417 = arith.subf %404, %416 : vector<16x32xf32>
    %cst_212 = arith.constant 9.99999997E-7 : f32
    %418 = vector.broadcast %cst_212 : f32 to vector<16x1xf32>
    %419 = arith.addf %415, %418 : vector<16x1xf32>
    %420 = math.rsqrt %419 : vector<16x1xf32>
    %421 = vector.broadcast %420 : vector<16x1xf32> to vector<16x32xf32>
    %422 = arith.mulf %417, %421 : vector<16x32xf32>
    %423 = vector.broadcast %328 : vector<1x32xf32> to vector<16x32xf32>
    %424 = arith.mulf %422, %423 : vector<16x32xf32>
    %425 = vector.broadcast %329 : vector<1x32xf32> to vector<16x32xf32>
    %426 = arith.addf %424, %425 : vector<16x32xf32>
    %c3_213 = arith.constant 3 : index
    %c0_214 = arith.constant 0 : index
    %c0_215 = arith.constant 0 : index
    %427 = vector.load %arg18[%c3_213, %c0_214, %c0_215] : memref<9x32x32xbf16, #tpu.memory_space<vmem>>, vector<1x32x32xbf16>
    %428 = vector.shape_cast %427 : vector<1x32x32xbf16> to vector<32x32xbf16>
    %c4_216 = arith.constant 4 : index
    %c0_217 = arith.constant 0 : index
    %c0_218 = arith.constant 0 : index
    %429 = vector.load %arg18[%c4_216, %c0_217, %c0_218] : memref<9x32x32xbf16, #tpu.memory_space<vmem>>, vector<1x32x32xbf16>
    %430 = vector.shape_cast %429 : vector<1x32x32xbf16> to vector<32x32xbf16>
    %c5_219 = arith.constant 5 : index
    %c0_220 = arith.constant 0 : index
    %c0_221 = arith.constant 0 : index
    %431 = vector.load %arg18[%c5_219, %c0_220, %c0_221] : memref<9x32x32xbf16, #tpu.memory_space<vmem>>, vector<1x32x32xbf16>
    %432 = vector.shape_cast %431 : vector<1x32x32xbf16> to vector<32x32xbf16>
    %c6_222 = arith.constant 6 : index
    %c0_223 = arith.constant 0 : index
    %433 = vector.load %arg20[%c6_222, %c0_223] : memref<18x32xf32, #tpu.memory_space<vmem>>, vector<1x32xf32>
    %c7_224 = arith.constant 7 : index
    %c0_225 = arith.constant 0 : index
    %434 = vector.load %arg20[%c7_224, %c0_225] : memref<18x32xf32, #tpu.memory_space<vmem>>, vector<1x32xf32>
    %c2_226 = arith.constant 2 : index
    %c0_227 = arith.constant 0 : index
    %c0_228 = arith.constant 0 : index
    %435 = vector.load %arg19[%c2_226, %c0_227, %c0_228] : memref<6x32x32xbf16, #tpu.memory_space<vmem>>, vector<1x32x32xbf16>
    %436 = vector.shape_cast %435 : vector<1x32x32xbf16> to vector<32x32xbf16>
    %c8_229 = arith.constant 8 : index
    %c0_230 = arith.constant 0 : index
    %437 = vector.load %arg20[%c8_229, %c0_230] : memref<18x32xf32, #tpu.memory_space<vmem>>, vector<1x32xf32>
    %c3_231 = arith.constant 3 : index
    %c0_232 = arith.constant 0 : index
    %c0_233 = arith.constant 0 : index
    %438 = vector.load %arg19[%c3_231, %c0_232, %c0_233] : memref<6x32x32xbf16, #tpu.memory_space<vmem>>, vector<1x32x32xbf16>
    %439 = vector.shape_cast %438 : vector<1x32x32xbf16> to vector<32x32xbf16>
    %c9_234 = arith.constant 9 : index
    %c0_235 = arith.constant 0 : index
    %440 = vector.load %arg20[%c9_234, %c0_235] : memref<18x32xf32, #tpu.memory_space<vmem>>, vector<1x32xf32>
    %c10_236 = arith.constant 10 : index
    %c0_237 = arith.constant 0 : index
    %441 = vector.load %arg20[%c10_236, %c0_237] : memref<18x32xf32, #tpu.memory_space<vmem>>, vector<1x32xf32>
    %c11_238 = arith.constant 11 : index
    %c0_239 = arith.constant 0 : index
    %442 = vector.load %arg20[%c11_238, %c0_239] : memref<18x32xf32, #tpu.memory_space<vmem>>, vector<1x32xf32>
    %443 = arith.truncf %313 : vector<24x32xf32> to vector<24x32xbf16>
    %cst_240 = arith.constant dense<0.000000e+00> : vector<24x32xf32>
    %444 = tpu.matmul %443, %428, %cst_240 {dimension_numbers = #tpu.dot_dimension_numbers<[1], [0], [0], [1], [0, 0, 1, 1], [], []>} : vector<24x32xbf16>, vector<32x32xbf16>, vector<24x32xf32> -> vector<24x32xf32>
    %cst_241 = arith.constant dense<0.000000e+00> : vector<24x32xf32>
    %445 = tpu.matmul %443, %430, %cst_241 {dimension_numbers = #tpu.dot_dimension_numbers<[1], [0], [0], [1], [0, 0, 1, 1], [], []>} : vector<24x32xbf16>, vector<32x32xbf16>, vector<24x32xf32> -> vector<24x32xf32>
    %cst_242 = arith.constant dense<0.000000e+00> : vector<24x32xf32>
    %446 = tpu.matmul %443, %432, %cst_242 {dimension_numbers = #tpu.dot_dimension_numbers<[1], [0], [0], [1], [0, 0, 1, 1], [], []>} : vector<24x32xbf16>, vector<32x32xbf16>, vector<24x32xf32> -> vector<24x32xf32>
    %cst_243 = arith.constant dense<0.000000e+00> : vector<8x32xf32>
    %447 = tpu.matmul %87, %430, %cst_243 {dimension_numbers = #tpu.dot_dimension_numbers<[1], [0], [0], [1], [0, 0, 1, 1], [], []>} : vector<8x32xbf16>, vector<32x32xbf16>, vector<8x32xf32> -> vector<8x32xf32>
    %cst_244 = arith.constant dense<0.000000e+00> : vector<8x32xf32>
    %448 = tpu.matmul %87, %432, %cst_244 {dimension_numbers = #tpu.dot_dimension_numbers<[1], [0], [0], [1], [0, 0, 1, 1], [], []>} : vector<8x32xbf16>, vector<32x32xbf16>, vector<8x32xf32> -> vector<8x32xf32>
    %449 = arith.mulf %444, %445 : vector<24x32xf32>
    %cst_245 = arith.constant dense<0.000000e+00> : vector<24xf32>
    %450 = vector.multi_reduction <add>, %449, %cst_245 [1] : vector<24x32xf32> to vector<24xf32>
    %451 = vector.shape_cast %450 : vector<24xf32> to vector<24x1xf32>
    %cst_246 = arith.constant 0.176776692 : f32
    %452 = vector.broadcast %cst_246 : f32 to vector<24x1xf32>
    %453 = arith.mulf %451, %452 : vector<24x1xf32>
    %454 = arith.truncf %444 : vector<24x32xf32> to vector<24x32xbf16>
    %455 = arith.truncf %447 : vector<8x32xf32> to vector<8x32xbf16>
    %cst_247 = arith.constant dense<0.000000e+00> : vector<24x8xf32>
    %456 = tpu.matmul %454, %455, %cst_247 {dimension_numbers = #tpu.dot_dimension_numbers<[1], [1], [0], [0], [0, 0, 1, 0], [], []>} : vector<24x32xbf16>, vector<8x32xbf16>, vector<24x8xf32> -> vector<24x8xf32>
    %cst_248 = arith.constant 0.176776692 : f32
    %457 = vector.broadcast %cst_248 : f32 to vector<24x8xf32>
    %458 = arith.mulf %456, %457 : vector<24x8xf32>
    %459 = tpu.iota {dimensions = array<i32: 1>} : vector<24x8xi32>
    %c5_i32_249 = arith.constant 5 : i32
    %460 = vector.broadcast %c5_i32_249 : i32 to vector<24x8xi32>
    %461 = arith.cmpi slt, %459, %460 : vector<24x8xi32>
    %cst_250 = arith.constant -1.000000e+30 : f32
    %462 = vector.broadcast %cst_250 : f32 to vector<24x8xf32>
    %463 = arith.select %461, %458, %462 : vector<24x8xi1>, vector<24x8xf32>
    %cst_251 = arith.constant dense<0xFF800000> : vector<24xf32>
    %464 = vector.multi_reduction <maximumf>, %463, %cst_251 [1] : vector<24x8xf32> to vector<24xf32>
    %465 = vector.shape_cast %464 : vector<24xf32> to vector<24x1xf32>
    %466 = arith.maximumf %453, %465 : vector<24x1xf32>
    %467 = arith.subf %453, %466 : vector<24x1xf32>
    %468 = math.exp %467 : vector<24x1xf32>
    %469 = vector.broadcast %466 : vector<24x1xf32> to vector<24x8xf32>
    %470 = arith.subf %463, %469 : vector<24x8xf32>
    %471 = math.exp %470 : vector<24x8xf32>
    %cst_252 = arith.constant dense<0.000000e+00> : vector<24xf32>
    %472 = vector.multi_reduction <add>, %471, %cst_252 [1] : vector<24x8xf32> to vector<24xf32>
    %473 = vector.shape_cast %472 : vector<24xf32> to vector<24x1xf32>
    %474 = arith.addf %468, %473 : vector<24x1xf32>
    %475 = vector.broadcast %468 : vector<24x1xf32> to vector<24x32xf32>
    %476 = arith.mulf %475, %446 : vector<24x32xf32>
    %477 = arith.truncf %471 : vector<24x8xf32> to vector<24x8xbf16>
    %478 = arith.truncf %448 : vector<8x32xf32> to vector<8x32xbf16>
    %cst_253 = arith.constant dense<0.000000e+00> : vector<24x32xf32>
    %479 = tpu.matmul %477, %478, %cst_253 {dimension_numbers = #tpu.dot_dimension_numbers<[1], [0], [0], [1], [0, 0, 1, 1], [], []>} : vector<24x8xbf16>, vector<8x32xbf16>, vector<24x32xf32> -> vector<24x32xf32>
    %480 = arith.addf %476, %479 : vector<24x32xf32>
    %481 = tpu.reciprocal %474 {approx = true} : vector<24x1xf32> -> vector<24x1xf32>
    %482 = vector.broadcast %481 : vector<24x1xf32> to vector<24x32xf32>
    %483 = arith.mulf %480, %482 : vector<24x32xf32>
    %484 = arith.addf %483, %313 : vector<24x32xf32>
    %cst_254 = arith.constant dense<0.000000e+00> : vector<24xf32>
    %485 = vector.multi_reduction <add>, %484, %cst_254 [1] : vector<24x32xf32> to vector<24xf32>
    %486 = vector.shape_cast %485 : vector<24xf32> to vector<24x1xf32>
    %cst_255 = arith.constant 3.200000e+01 : f32
    %487 = vector.broadcast %cst_255 : f32 to vector<24x1xf32>
    %488 = arith.divf %486, %487 : vector<24x1xf32>
    %489 = vector.broadcast %488 : vector<24x1xf32> to vector<24x32xf32>
    %490 = arith.subf %484, %489 : vector<24x32xf32>
    %491 = arith.mulf %490, %490 : vector<24x32xf32>
    %cst_256 = arith.constant dense<0.000000e+00> : vector<24xf32>
    %492 = vector.multi_reduction <add>, %491, %cst_256 [1] : vector<24x32xf32> to vector<24xf32>
    %493 = vector.shape_cast %492 : vector<24xf32> to vector<24x1xf32>
    %cst_257 = arith.constant 3.200000e+01 : f32
    %494 = vector.broadcast %cst_257 : f32 to vector<24x1xf32>
    %495 = arith.divf %493, %494 : vector<24x1xf32>
    %496 = vector.broadcast %488 : vector<24x1xf32> to vector<24x32xf32>
    %497 = arith.subf %484, %496 : vector<24x32xf32>
    %cst_258 = arith.constant 9.99999997E-7 : f32
    %498 = vector.broadcast %cst_258 : f32 to vector<24x1xf32>
    %499 = arith.addf %495, %498 : vector<24x1xf32>
    %500 = math.rsqrt %499 : vector<24x1xf32>
    %501 = vector.broadcast %500 : vector<24x1xf32> to vector<24x32xf32>
    %502 = arith.mulf %497, %501 : vector<24x32xf32>
    %503 = vector.broadcast %433 : vector<1x32xf32> to vector<24x32xf32>
    %504 = arith.mulf %502, %503 : vector<24x32xf32>
    %505 = vector.broadcast %434 : vector<1x32xf32> to vector<24x32xf32>
    %506 = arith.addf %504, %505 : vector<24x32xf32>
    %507 = arith.truncf %506 : vector<24x32xf32> to vector<24x32xbf16>
    %cst_259 = arith.constant dense<0.000000e+00> : vector<24x32xf32>
    %508 = tpu.matmul %507, %436, %cst_259 {dimension_numbers = #tpu.dot_dimension_numbers<[1], [0], [0], [1], [0, 0, 1, 1], [], []>} : vector<24x32xbf16>, vector<32x32xbf16>, vector<24x32xf32> -> vector<24x32xf32>
    %509 = vector.broadcast %437 : vector<1x32xf32> to vector<24x32xf32>
    %510 = arith.addf %508, %509 : vector<24x32xf32>
    %cst_260 = arith.constant 0.000000e+00 : f32
    %511 = vector.broadcast %cst_260 : f32 to vector<24x32xf32>
    %512 = arith.maximumf %510, %511 : vector<24x32xf32>
    %513 = arith.truncf %512 : vector<24x32xf32> to vector<24x32xbf16>
    %cst_261 = arith.constant dense<0.000000e+00> : vector<24x32xf32>
    %514 = tpu.matmul %513, %439, %cst_261 {dimension_numbers = #tpu.dot_dimension_numbers<[1], [0], [0], [1], [0, 0, 1, 1], [], []>} : vector<24x32xbf16>, vector<32x32xbf16>, vector<24x32xf32> -> vector<24x32xf32>
    %515 = vector.broadcast %440 : vector<1x32xf32> to vector<24x32xf32>
    %516 = arith.addf %514, %515 : vector<24x32xf32>
    %517 = arith.addf %516, %506 : vector<24x32xf32>
    %cst_262 = arith.constant dense<0.000000e+00> : vector<24xf32>
    %518 = vector.multi_reduction <add>, %517, %cst_262 [1] : vector<24x32xf32> to vector<24xf32>
    %519 = vector.shape_cast %518 : vector<24xf32> to vector<24x1xf32>
    %cst_263 = arith.constant 3.200000e+01 : f32
    %520 = vector.broadcast %cst_263 : f32 to vector<24x1xf32>
    %521 = arith.divf %519, %520 : vector<24x1xf32>
    %522 = vector.broadcast %521 : vector<24x1xf32> to vector<24x32xf32>
    %523 = arith.subf %517, %522 : vector<24x32xf32>
    %524 = arith.mulf %523, %523 : vector<24x32xf32>
    %cst_264 = arith.constant dense<0.000000e+00> : vector<24xf32>
    %525 = vector.multi_reduction <add>, %524, %cst_264 [1] : vector<24x32xf32> to vector<24xf32>
    %526 = vector.shape_cast %525 : vector<24xf32> to vector<24x1xf32>
    %cst_265 = arith.constant 3.200000e+01 : f32
    %527 = vector.broadcast %cst_265 : f32 to vector<24x1xf32>
    %528 = arith.divf %526, %527 : vector<24x1xf32>
    %529 = vector.broadcast %521 : vector<24x1xf32> to vector<24x32xf32>
    %530 = arith.subf %517, %529 : vector<24x32xf32>
    %cst_266 = arith.constant 9.99999997E-7 : f32
    %531 = vector.broadcast %cst_266 : f32 to vector<24x1xf32>
    %532 = arith.addf %528, %531 : vector<24x1xf32>
    %533 = math.rsqrt %532 : vector<24x1xf32>
    %534 = vector.broadcast %533 : vector<24x1xf32> to vector<24x32xf32>
    %535 = arith.mulf %530, %534 : vector<24x32xf32>
    %536 = vector.broadcast %441 : vector<1x32xf32> to vector<24x32xf32>
    %537 = arith.mulf %535, %536 : vector<24x32xf32>
    %538 = vector.broadcast %442 : vector<1x32xf32> to vector<24x32xf32>
    %539 = arith.addf %537, %538 : vector<24x32xf32>
    %c6_267 = arith.constant 6 : index
    %c0_268 = arith.constant 0 : index
    %c0_269 = arith.constant 0 : index
    %540 = vector.load %arg15[%c6_267, %c0_268, %c0_269] : memref<9x32x32xbf16, #tpu.memory_space<vmem>>, vector<1x32x32xbf16>
    %541 = vector.shape_cast %540 : vector<1x32x32xbf16> to vector<32x32xbf16>
    %c7_270 = arith.constant 7 : index
    %c0_271 = arith.constant 0 : index
    %c0_272 = arith.constant 0 : index
    %542 = vector.load %arg15[%c7_270, %c0_271, %c0_272] : memref<9x32x32xbf16, #tpu.memory_space<vmem>>, vector<1x32x32xbf16>
    %543 = vector.shape_cast %542 : vector<1x32x32xbf16> to vector<32x32xbf16>
    %c8_273 = arith.constant 8 : index
    %c0_274 = arith.constant 0 : index
    %c0_275 = arith.constant 0 : index
    %544 = vector.load %arg15[%c8_273, %c0_274, %c0_275] : memref<9x32x32xbf16, #tpu.memory_space<vmem>>, vector<1x32x32xbf16>
    %545 = vector.shape_cast %544 : vector<1x32x32xbf16> to vector<32x32xbf16>
    %c12 = arith.constant 12 : index
    %c0_276 = arith.constant 0 : index
    %546 = vector.load %arg17[%c12, %c0_276] : memref<18x32xf32, #tpu.memory_space<vmem>>, vector<1x32xf32>
    %c13 = arith.constant 13 : index
    %c0_277 = arith.constant 0 : index
    %547 = vector.load %arg17[%c13, %c0_277] : memref<18x32xf32, #tpu.memory_space<vmem>>, vector<1x32xf32>
    %c4_278 = arith.constant 4 : index
    %c0_279 = arith.constant 0 : index
    %c0_280 = arith.constant 0 : index
    %548 = vector.load %arg16[%c4_278, %c0_279, %c0_280] : memref<6x32x32xbf16, #tpu.memory_space<vmem>>, vector<1x32x32xbf16>
    %549 = vector.shape_cast %548 : vector<1x32x32xbf16> to vector<32x32xbf16>
    %c14 = arith.constant 14 : index
    %c0_281 = arith.constant 0 : index
    %550 = vector.load %arg17[%c14, %c0_281] : memref<18x32xf32, #tpu.memory_space<vmem>>, vector<1x32xf32>
    %c5_282 = arith.constant 5 : index
    %c0_283 = arith.constant 0 : index
    %c0_284 = arith.constant 0 : index
    %551 = vector.load %arg16[%c5_282, %c0_283, %c0_284] : memref<6x32x32xbf16, #tpu.memory_space<vmem>>, vector<1x32x32xbf16>
    %552 = vector.shape_cast %551 : vector<1x32x32xbf16> to vector<32x32xbf16>
    %c15 = arith.constant 15 : index
    %c0_285 = arith.constant 0 : index
    %553 = vector.load %arg17[%c15, %c0_285] : memref<18x32xf32, #tpu.memory_space<vmem>>, vector<1x32xf32>
    %c16 = arith.constant 16 : index
    %c0_286 = arith.constant 0 : index
    %554 = vector.load %arg17[%c16, %c0_286] : memref<18x32xf32, #tpu.memory_space<vmem>>, vector<1x32xf32>
    %c17 = arith.constant 17 : index
    %c0_287 = arith.constant 0 : index
    %555 = vector.load %arg17[%c17, %c0_287] : memref<18x32xf32, #tpu.memory_space<vmem>>, vector<1x32xf32>
    %556 = arith.truncf %426 : vector<16x32xf32> to vector<16x32xbf16>
    %cst_288 = arith.constant dense<0.000000e+00> : vector<16x32xf32>
    %557 = tpu.matmul %556, %541, %cst_288 {dimension_numbers = #tpu.dot_dimension_numbers<[1], [0], [0], [1], [0, 0, 1, 1], [], []>} : vector<16x32xbf16>, vector<32x32xbf16>, vector<16x32xf32> -> vector<16x32xf32>
    %cst_289 = arith.constant dense<0.000000e+00> : vector<16x32xf32>
    %558 = tpu.matmul %556, %543, %cst_289 {dimension_numbers = #tpu.dot_dimension_numbers<[1], [0], [0], [1], [0, 0, 1, 1], [], []>} : vector<16x32xbf16>, vector<32x32xbf16>, vector<16x32xf32> -> vector<16x32xf32>
    %cst_290 = arith.constant dense<0.000000e+00> : vector<16x32xf32>
    %559 = tpu.matmul %556, %545, %cst_290 {dimension_numbers = #tpu.dot_dimension_numbers<[1], [0], [0], [1], [0, 0, 1, 1], [], []>} : vector<16x32xbf16>, vector<32x32xbf16>, vector<16x32xf32> -> vector<16x32xf32>
    %cst_291 = arith.constant dense<0.000000e+00> : vector<8x32xf32>
    %560 = tpu.matmul %72, %543, %cst_291 {dimension_numbers = #tpu.dot_dimension_numbers<[1], [0], [0], [1], [0, 0, 1, 1], [], []>} : vector<8x32xbf16>, vector<32x32xbf16>, vector<8x32xf32> -> vector<8x32xf32>
    %cst_292 = arith.constant dense<0.000000e+00> : vector<8x32xf32>
    %561 = tpu.matmul %72, %545, %cst_292 {dimension_numbers = #tpu.dot_dimension_numbers<[1], [0], [0], [1], [0, 0, 1, 1], [], []>} : vector<8x32xbf16>, vector<32x32xbf16>, vector<8x32xf32> -> vector<8x32xf32>
    %562 = arith.mulf %557, %558 : vector<16x32xf32>
    %cst_293 = arith.constant dense<0.000000e+00> : vector<16xf32>
    %563 = vector.multi_reduction <add>, %562, %cst_293 [1] : vector<16x32xf32> to vector<16xf32>
    %564 = vector.shape_cast %563 : vector<16xf32> to vector<16x1xf32>
    %cst_294 = arith.constant 0.176776692 : f32
    %565 = vector.broadcast %cst_294 : f32 to vector<16x1xf32>
    %566 = arith.mulf %564, %565 : vector<16x1xf32>
    %567 = arith.truncf %557 : vector<16x32xf32> to vector<16x32xbf16>
    %568 = arith.truncf %560 : vector<8x32xf32> to vector<8x32xbf16>
    %cst_295 = arith.constant dense<0.000000e+00> : vector<16x8xf32>
    %569 = tpu.matmul %567, %568, %cst_295 {dimension_numbers = #tpu.dot_dimension_numbers<[1], [1], [0], [0], [0, 0, 1, 0], [], []>} : vector<16x32xbf16>, vector<8x32xbf16>, vector<16x8xf32> -> vector<16x8xf32>
    %cst_296 = arith.constant 0.176776692 : f32
    %570 = vector.broadcast %cst_296 : f32 to vector<16x8xf32>
    %571 = arith.mulf %569, %570 : vector<16x8xf32>
    %572 = tpu.iota {dimensions = array<i32: 1>} : vector<16x8xi32>
    %c5_i32_297 = arith.constant 5 : i32
    %573 = vector.broadcast %c5_i32_297 : i32 to vector<16x8xi32>
    %574 = arith.cmpi slt, %572, %573 : vector<16x8xi32>
    %cst_298 = arith.constant -1.000000e+30 : f32
    %575 = vector.broadcast %cst_298 : f32 to vector<16x8xf32>
    %576 = arith.select %574, %571, %575 : vector<16x8xi1>, vector<16x8xf32>
    %cst_299 = arith.constant dense<0xFF800000> : vector<16xf32>
    %577 = vector.multi_reduction <maximumf>, %576, %cst_299 [1] : vector<16x8xf32> to vector<16xf32>
    %578 = vector.shape_cast %577 : vector<16xf32> to vector<16x1xf32>
    %579 = arith.maximumf %566, %578 : vector<16x1xf32>
    %580 = arith.subf %566, %579 : vector<16x1xf32>
    %581 = math.exp %580 : vector<16x1xf32>
    %582 = vector.broadcast %579 : vector<16x1xf32> to vector<16x8xf32>
    %583 = arith.subf %576, %582 : vector<16x8xf32>
    %584 = math.exp %583 : vector<16x8xf32>
    %cst_300 = arith.constant dense<0.000000e+00> : vector<16xf32>
    %585 = vector.multi_reduction <add>, %584, %cst_300 [1] : vector<16x8xf32> to vector<16xf32>
    %586 = vector.shape_cast %585 : vector<16xf32> to vector<16x1xf32>
    %587 = arith.addf %581, %586 : vector<16x1xf32>
    %588 = vector.broadcast %581 : vector<16x1xf32> to vector<16x32xf32>
    %589 = arith.mulf %588, %559 : vector<16x32xf32>
    %590 = arith.truncf %584 : vector<16x8xf32> to vector<16x8xbf16>
    %591 = arith.truncf %561 : vector<8x32xf32> to vector<8x32xbf16>
    %cst_301 = arith.constant dense<0.000000e+00> : vector<16x32xf32>
    %592 = tpu.matmul %590, %591, %cst_301 {dimension_numbers = #tpu.dot_dimension_numbers<[1], [0], [0], [1], [0, 0, 1, 1], [], []>} : vector<16x8xbf16>, vector<8x32xbf16>, vector<16x32xf32> -> vector<16x32xf32>
    %593 = arith.addf %589, %592 : vector<16x32xf32>
    %594 = tpu.reciprocal %587 {approx = true} : vector<16x1xf32> -> vector<16x1xf32>
    %595 = vector.broadcast %594 : vector<16x1xf32> to vector<16x32xf32>
    %596 = arith.mulf %593, %595 : vector<16x32xf32>
    %597 = arith.addf %596, %426 : vector<16x32xf32>
    %cst_302 = arith.constant dense<0.000000e+00> : vector<16xf32>
    %598 = vector.multi_reduction <add>, %597, %cst_302 [1] : vector<16x32xf32> to vector<16xf32>
    %599 = vector.shape_cast %598 : vector<16xf32> to vector<16x1xf32>
    %cst_303 = arith.constant 3.200000e+01 : f32
    %600 = vector.broadcast %cst_303 : f32 to vector<16x1xf32>
    %601 = arith.divf %599, %600 : vector<16x1xf32>
    %602 = vector.broadcast %601 : vector<16x1xf32> to vector<16x32xf32>
    %603 = arith.subf %597, %602 : vector<16x32xf32>
    %604 = arith.mulf %603, %603 : vector<16x32xf32>
    %cst_304 = arith.constant dense<0.000000e+00> : vector<16xf32>
    %605 = vector.multi_reduction <add>, %604, %cst_304 [1] : vector<16x32xf32> to vector<16xf32>
    %606 = vector.shape_cast %605 : vector<16xf32> to vector<16x1xf32>
    %cst_305 = arith.constant 3.200000e+01 : f32
    %607 = vector.broadcast %cst_305 : f32 to vector<16x1xf32>
    %608 = arith.divf %606, %607 : vector<16x1xf32>
    %609 = vector.broadcast %601 : vector<16x1xf32> to vector<16x32xf32>
    %610 = arith.subf %597, %609 : vector<16x32xf32>
    %cst_306 = arith.constant 9.99999997E-7 : f32
    %611 = vector.broadcast %cst_306 : f32 to vector<16x1xf32>
    %612 = arith.addf %608, %611 : vector<16x1xf32>
    %613 = math.rsqrt %612 : vector<16x1xf32>
    %614 = vector.broadcast %613 : vector<16x1xf32> to vector<16x32xf32>
    %615 = arith.mulf %610, %614 : vector<16x32xf32>
    %616 = vector.broadcast %546 : vector<1x32xf32> to vector<16x32xf32>
    %617 = arith.mulf %615, %616 : vector<16x32xf32>
    %618 = vector.broadcast %547 : vector<1x32xf32> to vector<16x32xf32>
    %619 = arith.addf %617, %618 : vector<16x32xf32>
    %620 = arith.truncf %619 : vector<16x32xf32> to vector<16x32xbf16>
    %cst_307 = arith.constant dense<0.000000e+00> : vector<16x32xf32>
    %621 = tpu.matmul %620, %549, %cst_307 {dimension_numbers = #tpu.dot_dimension_numbers<[1], [0], [0], [1], [0, 0, 1, 1], [], []>} : vector<16x32xbf16>, vector<32x32xbf16>, vector<16x32xf32> -> vector<16x32xf32>
    %622 = vector.broadcast %550 : vector<1x32xf32> to vector<16x32xf32>
    %623 = arith.addf %621, %622 : vector<16x32xf32>
    %cst_308 = arith.constant 0.000000e+00 : f32
    %624 = vector.broadcast %cst_308 : f32 to vector<16x32xf32>
    %625 = arith.maximumf %623, %624 : vector<16x32xf32>
    %626 = arith.truncf %625 : vector<16x32xf32> to vector<16x32xbf16>
    %cst_309 = arith.constant dense<0.000000e+00> : vector<16x32xf32>
    %627 = tpu.matmul %626, %552, %cst_309 {dimension_numbers = #tpu.dot_dimension_numbers<[1], [0], [0], [1], [0, 0, 1, 1], [], []>} : vector<16x32xbf16>, vector<32x32xbf16>, vector<16x32xf32> -> vector<16x32xf32>
    %628 = vector.broadcast %553 : vector<1x32xf32> to vector<16x32xf32>
    %629 = arith.addf %627, %628 : vector<16x32xf32>
    %630 = arith.addf %629, %619 : vector<16x32xf32>
    %cst_310 = arith.constant dense<0.000000e+00> : vector<16xf32>
    %631 = vector.multi_reduction <add>, %630, %cst_310 [1] : vector<16x32xf32> to vector<16xf32>
    %632 = vector.shape_cast %631 : vector<16xf32> to vector<16x1xf32>
    %cst_311 = arith.constant 3.200000e+01 : f32
    %633 = vector.broadcast %cst_311 : f32 to vector<16x1xf32>
    %634 = arith.divf %632, %633 : vector<16x1xf32>
    %635 = vector.broadcast %634 : vector<16x1xf32> to vector<16x32xf32>
    %636 = arith.subf %630, %635 : vector<16x32xf32>
    %637 = arith.mulf %636, %636 : vector<16x32xf32>
    %cst_312 = arith.constant dense<0.000000e+00> : vector<16xf32>
    %638 = vector.multi_reduction <add>, %637, %cst_312 [1] : vector<16x32xf32> to vector<16xf32>
    %639 = vector.shape_cast %638 : vector<16xf32> to vector<16x1xf32>
    %cst_313 = arith.constant 3.200000e+01 : f32
    %640 = vector.broadcast %cst_313 : f32 to vector<16x1xf32>
    %641 = arith.divf %639, %640 : vector<16x1xf32>
    %642 = vector.broadcast %634 : vector<16x1xf32> to vector<16x32xf32>
    %643 = arith.subf %630, %642 : vector<16x32xf32>
    %cst_314 = arith.constant 9.99999997E-7 : f32
    %644 = vector.broadcast %cst_314 : f32 to vector<16x1xf32>
    %645 = arith.addf %641, %644 : vector<16x1xf32>
    %646 = math.rsqrt %645 : vector<16x1xf32>
    %647 = vector.broadcast %646 : vector<16x1xf32> to vector<16x32xf32>
    %648 = arith.mulf %643, %647 : vector<16x32xf32>
    %649 = vector.broadcast %554 : vector<1x32xf32> to vector<16x32xf32>
    %650 = arith.mulf %648, %649 : vector<16x32xf32>
    %651 = vector.broadcast %555 : vector<1x32xf32> to vector<16x32xf32>
    %652 = arith.addf %650, %651 : vector<16x32xf32>
    %c6_315 = arith.constant 6 : index
    %c0_316 = arith.constant 0 : index
    %c0_317 = arith.constant 0 : index
    %653 = vector.load %arg18[%c6_315, %c0_316, %c0_317] : memref<9x32x32xbf16, #tpu.memory_space<vmem>>, vector<1x32x32xbf16>
    %654 = vector.shape_cast %653 : vector<1x32x32xbf16> to vector<32x32xbf16>
    %c7_318 = arith.constant 7 : index
    %c0_319 = arith.constant 0 : index
    %c0_320 = arith.constant 0 : index
    %655 = vector.load %arg18[%c7_318, %c0_319, %c0_320] : memref<9x32x32xbf16, #tpu.memory_space<vmem>>, vector<1x32x32xbf16>
    %656 = vector.shape_cast %655 : vector<1x32x32xbf16> to vector<32x32xbf16>
    %c8_321 = arith.constant 8 : index
    %c0_322 = arith.constant 0 : index
    %c0_323 = arith.constant 0 : index
    %657 = vector.load %arg18[%c8_321, %c0_322, %c0_323] : memref<9x32x32xbf16, #tpu.memory_space<vmem>>, vector<1x32x32xbf16>
    %658 = vector.shape_cast %657 : vector<1x32x32xbf16> to vector<32x32xbf16>
    %c12_324 = arith.constant 12 : index
    %c0_325 = arith.constant 0 : index
    %659 = vector.load %arg20[%c12_324, %c0_325] : memref<18x32xf32, #tpu.memory_space<vmem>>, vector<1x32xf32>
    %c13_326 = arith.constant 13 : index
    %c0_327 = arith.constant 0 : index
    %660 = vector.load %arg20[%c13_326, %c0_327] : memref<18x32xf32, #tpu.memory_space<vmem>>, vector<1x32xf32>
    %c4_328 = arith.constant 4 : index
    %c0_329 = arith.constant 0 : index
    %c0_330 = arith.constant 0 : index
    %661 = vector.load %arg19[%c4_328, %c0_329, %c0_330] : memref<6x32x32xbf16, #tpu.memory_space<vmem>>, vector<1x32x32xbf16>
    %662 = vector.shape_cast %661 : vector<1x32x32xbf16> to vector<32x32xbf16>
    %c14_331 = arith.constant 14 : index
    %c0_332 = arith.constant 0 : index
    %663 = vector.load %arg20[%c14_331, %c0_332] : memref<18x32xf32, #tpu.memory_space<vmem>>, vector<1x32xf32>
    %c5_333 = arith.constant 5 : index
    %c0_334 = arith.constant 0 : index
    %c0_335 = arith.constant 0 : index
    %664 = vector.load %arg19[%c5_333, %c0_334, %c0_335] : memref<6x32x32xbf16, #tpu.memory_space<vmem>>, vector<1x32x32xbf16>
    %665 = vector.shape_cast %664 : vector<1x32x32xbf16> to vector<32x32xbf16>
    %c15_336 = arith.constant 15 : index
    %c0_337 = arith.constant 0 : index
    %666 = vector.load %arg20[%c15_336, %c0_337] : memref<18x32xf32, #tpu.memory_space<vmem>>, vector<1x32xf32>
    %c16_338 = arith.constant 16 : index
    %c0_339 = arith.constant 0 : index
    %667 = vector.load %arg20[%c16_338, %c0_339] : memref<18x32xf32, #tpu.memory_space<vmem>>, vector<1x32xf32>
    %c17_340 = arith.constant 17 : index
    %c0_341 = arith.constant 0 : index
    %668 = vector.load %arg20[%c17_340, %c0_341] : memref<18x32xf32, #tpu.memory_space<vmem>>, vector<1x32xf32>
    %669 = arith.truncf %539 : vector<24x32xf32> to vector<24x32xbf16>
    %cst_342 = arith.constant dense<0.000000e+00> : vector<24x32xf32>
    %670 = tpu.matmul %669, %654, %cst_342 {dimension_numbers = #tpu.dot_dimension_numbers<[1], [0], [0], [1], [0, 0, 1, 1], [], []>} : vector<24x32xbf16>, vector<32x32xbf16>, vector<24x32xf32> -> vector<24x32xf32>
    %cst_343 = arith.constant dense<0.000000e+00> : vector<24x32xf32>
    %671 = tpu.matmul %669, %656, %cst_343 {dimension_numbers = #tpu.dot_dimension_numbers<[1], [0], [0], [1], [0, 0, 1, 1], [], []>} : vector<24x32xbf16>, vector<32x32xbf16>, vector<24x32xf32> -> vector<24x32xf32>
    %cst_344 = arith.constant dense<0.000000e+00> : vector<24x32xf32>
    %672 = tpu.matmul %669, %658, %cst_344 {dimension_numbers = #tpu.dot_dimension_numbers<[1], [0], [0], [1], [0, 0, 1, 1], [], []>} : vector<24x32xbf16>, vector<32x32xbf16>, vector<24x32xf32> -> vector<24x32xf32>
    %cst_345 = arith.constant dense<0.000000e+00> : vector<8x32xf32>
    %673 = tpu.matmul %87, %656, %cst_345 {dimension_numbers = #tpu.dot_dimension_numbers<[1], [0], [0], [1], [0, 0, 1, 1], [], []>} : vector<8x32xbf16>, vector<32x32xbf16>, vector<8x32xf32> -> vector<8x32xf32>
    %cst_346 = arith.constant dense<0.000000e+00> : vector<8x32xf32>
    %674 = tpu.matmul %87, %658, %cst_346 {dimension_numbers = #tpu.dot_dimension_numbers<[1], [0], [0], [1], [0, 0, 1, 1], [], []>} : vector<8x32xbf16>, vector<32x32xbf16>, vector<8x32xf32> -> vector<8x32xf32>
    %675 = arith.mulf %670, %671 : vector<24x32xf32>
    %cst_347 = arith.constant dense<0.000000e+00> : vector<24xf32>
    %676 = vector.multi_reduction <add>, %675, %cst_347 [1] : vector<24x32xf32> to vector<24xf32>
    %677 = vector.shape_cast %676 : vector<24xf32> to vector<24x1xf32>
    %cst_348 = arith.constant 0.176776692 : f32
    %678 = vector.broadcast %cst_348 : f32 to vector<24x1xf32>
    %679 = arith.mulf %677, %678 : vector<24x1xf32>
    %680 = arith.truncf %670 : vector<24x32xf32> to vector<24x32xbf16>
    %681 = arith.truncf %673 : vector<8x32xf32> to vector<8x32xbf16>
    %cst_349 = arith.constant dense<0.000000e+00> : vector<24x8xf32>
    %682 = tpu.matmul %680, %681, %cst_349 {dimension_numbers = #tpu.dot_dimension_numbers<[1], [1], [0], [0], [0, 0, 1, 0], [], []>} : vector<24x32xbf16>, vector<8x32xbf16>, vector<24x8xf32> -> vector<24x8xf32>
    %cst_350 = arith.constant 0.176776692 : f32
    %683 = vector.broadcast %cst_350 : f32 to vector<24x8xf32>
    %684 = arith.mulf %682, %683 : vector<24x8xf32>
    %685 = tpu.iota {dimensions = array<i32: 1>} : vector<24x8xi32>
    %c5_i32_351 = arith.constant 5 : i32
    %686 = vector.broadcast %c5_i32_351 : i32 to vector<24x8xi32>
    %687 = arith.cmpi slt, %685, %686 : vector<24x8xi32>
    %cst_352 = arith.constant -1.000000e+30 : f32
    %688 = vector.broadcast %cst_352 : f32 to vector<24x8xf32>
    %689 = arith.select %687, %684, %688 : vector<24x8xi1>, vector<24x8xf32>
    %cst_353 = arith.constant dense<0xFF800000> : vector<24xf32>
    %690 = vector.multi_reduction <maximumf>, %689, %cst_353 [1] : vector<24x8xf32> to vector<24xf32>
    %691 = vector.shape_cast %690 : vector<24xf32> to vector<24x1xf32>
    %692 = arith.maximumf %679, %691 : vector<24x1xf32>
    %693 = arith.subf %679, %692 : vector<24x1xf32>
    %694 = math.exp %693 : vector<24x1xf32>
    %695 = vector.broadcast %692 : vector<24x1xf32> to vector<24x8xf32>
    %696 = arith.subf %689, %695 : vector<24x8xf32>
    %697 = math.exp %696 : vector<24x8xf32>
    %cst_354 = arith.constant dense<0.000000e+00> : vector<24xf32>
    %698 = vector.multi_reduction <add>, %697, %cst_354 [1] : vector<24x8xf32> to vector<24xf32>
    %699 = vector.shape_cast %698 : vector<24xf32> to vector<24x1xf32>
    %700 = arith.addf %694, %699 : vector<24x1xf32>
    %701 = vector.broadcast %694 : vector<24x1xf32> to vector<24x32xf32>
    %702 = arith.mulf %701, %672 : vector<24x32xf32>
    %703 = arith.truncf %697 : vector<24x8xf32> to vector<24x8xbf16>
    %704 = arith.truncf %674 : vector<8x32xf32> to vector<8x32xbf16>
    %cst_355 = arith.constant dense<0.000000e+00> : vector<24x32xf32>
    %705 = tpu.matmul %703, %704, %cst_355 {dimension_numbers = #tpu.dot_dimension_numbers<[1], [0], [0], [1], [0, 0, 1, 1], [], []>} : vector<24x8xbf16>, vector<8x32xbf16>, vector<24x32xf32> -> vector<24x32xf32>
    %706 = arith.addf %702, %705 : vector<24x32xf32>
    %707 = tpu.reciprocal %700 {approx = true} : vector<24x1xf32> -> vector<24x1xf32>
    %708 = vector.broadcast %707 : vector<24x1xf32> to vector<24x32xf32>
    %709 = arith.mulf %706, %708 : vector<24x32xf32>
    %710 = arith.addf %709, %539 : vector<24x32xf32>
    %cst_356 = arith.constant dense<0.000000e+00> : vector<24xf32>
    %711 = vector.multi_reduction <add>, %710, %cst_356 [1] : vector<24x32xf32> to vector<24xf32>
    %712 = vector.shape_cast %711 : vector<24xf32> to vector<24x1xf32>
    %cst_357 = arith.constant 3.200000e+01 : f32
    %713 = vector.broadcast %cst_357 : f32 to vector<24x1xf32>
    %714 = arith.divf %712, %713 : vector<24x1xf32>
    %715 = vector.broadcast %714 : vector<24x1xf32> to vector<24x32xf32>
    %716 = arith.subf %710, %715 : vector<24x32xf32>
    %717 = arith.mulf %716, %716 : vector<24x32xf32>
    %cst_358 = arith.constant dense<0.000000e+00> : vector<24xf32>
    %718 = vector.multi_reduction <add>, %717, %cst_358 [1] : vector<24x32xf32> to vector<24xf32>
    %719 = vector.shape_cast %718 : vector<24xf32> to vector<24x1xf32>
    %cst_359 = arith.constant 3.200000e+01 : f32
    %720 = vector.broadcast %cst_359 : f32 to vector<24x1xf32>
    %721 = arith.divf %719, %720 : vector<24x1xf32>
    %722 = vector.broadcast %714 : vector<24x1xf32> to vector<24x32xf32>
    %723 = arith.subf %710, %722 : vector<24x32xf32>
    %cst_360 = arith.constant 9.99999997E-7 : f32
    %724 = vector.broadcast %cst_360 : f32 to vector<24x1xf32>
    %725 = arith.addf %721, %724 : vector<24x1xf32>
    %726 = math.rsqrt %725 : vector<24x1xf32>
    %727 = vector.broadcast %726 : vector<24x1xf32> to vector<24x32xf32>
    %728 = arith.mulf %723, %727 : vector<24x32xf32>
    %729 = vector.broadcast %659 : vector<1x32xf32> to vector<24x32xf32>
    %730 = arith.mulf %728, %729 : vector<24x32xf32>
    %731 = vector.broadcast %660 : vector<1x32xf32> to vector<24x32xf32>
    %732 = arith.addf %730, %731 : vector<24x32xf32>
    %733 = arith.truncf %732 : vector<24x32xf32> to vector<24x32xbf16>
    %cst_361 = arith.constant dense<0.000000e+00> : vector<24x32xf32>
    %734 = tpu.matmul %733, %662, %cst_361 {dimension_numbers = #tpu.dot_dimension_numbers<[1], [0], [0], [1], [0, 0, 1, 1], [], []>} : vector<24x32xbf16>, vector<32x32xbf16>, vector<24x32xf32> -> vector<24x32xf32>
    %735 = vector.broadcast %663 : vector<1x32xf32> to vector<24x32xf32>
    %736 = arith.addf %734, %735 : vector<24x32xf32>
    %cst_362 = arith.constant 0.000000e+00 : f32
    %737 = vector.broadcast %cst_362 : f32 to vector<24x32xf32>
    %738 = arith.maximumf %736, %737 : vector<24x32xf32>
    %739 = arith.truncf %738 : vector<24x32xf32> to vector<24x32xbf16>
    %cst_363 = arith.constant dense<0.000000e+00> : vector<24x32xf32>
    %740 = tpu.matmul %739, %665, %cst_363 {dimension_numbers = #tpu.dot_dimension_numbers<[1], [0], [0], [1], [0, 0, 1, 1], [], []>} : vector<24x32xbf16>, vector<32x32xbf16>, vector<24x32xf32> -> vector<24x32xf32>
    %741 = vector.broadcast %666 : vector<1x32xf32> to vector<24x32xf32>
    %742 = arith.addf %740, %741 : vector<24x32xf32>
    %743 = arith.addf %742, %732 : vector<24x32xf32>
    %cst_364 = arith.constant dense<0.000000e+00> : vector<24xf32>
    %744 = vector.multi_reduction <add>, %743, %cst_364 [1] : vector<24x32xf32> to vector<24xf32>
    %745 = vector.shape_cast %744 : vector<24xf32> to vector<24x1xf32>
    %cst_365 = arith.constant 3.200000e+01 : f32
    %746 = vector.broadcast %cst_365 : f32 to vector<24x1xf32>
    %747 = arith.divf %745, %746 : vector<24x1xf32>
    %748 = vector.broadcast %747 : vector<24x1xf32> to vector<24x32xf32>
    %749 = arith.subf %743, %748 : vector<24x32xf32>
    %750 = arith.mulf %749, %749 : vector<24x32xf32>
    %cst_366 = arith.constant dense<0.000000e+00> : vector<24xf32>
    %751 = vector.multi_reduction <add>, %750, %cst_366 [1] : vector<24x32xf32> to vector<24xf32>
    %752 = vector.shape_cast %751 : vector<24xf32> to vector<24x1xf32>
    %cst_367 = arith.constant 3.200000e+01 : f32
    %753 = vector.broadcast %cst_367 : f32 to vector<24x1xf32>
    %754 = arith.divf %752, %753 : vector<24x1xf32>
    %755 = vector.broadcast %747 : vector<24x1xf32> to vector<24x32xf32>
    %756 = arith.subf %743, %755 : vector<24x32xf32>
    %cst_368 = arith.constant 9.99999997E-7 : f32
    %757 = vector.broadcast %cst_368 : f32 to vector<24x1xf32>
    %758 = arith.addf %754, %757 : vector<24x1xf32>
    %759 = math.rsqrt %758 : vector<24x1xf32>
    %760 = vector.broadcast %759 : vector<24x1xf32> to vector<24x32xf32>
    %761 = arith.mulf %756, %760 : vector<24x32xf32>
    %762 = vector.broadcast %667 : vector<1x32xf32> to vector<24x32xf32>
    %763 = arith.mulf %761, %762 : vector<24x32xf32>
    %764 = vector.broadcast %668 : vector<1x32xf32> to vector<24x32xf32>
    %765 = arith.addf %763, %764 : vector<24x32xf32>
    %cst_369 = arith.constant dense<0.000000e+00> : vector<24x32xf32>
    %766 = tpu.matmul %8, %652, %cst_369 {dimension_numbers = #tpu.dot_dimension_numbers<[1], [0], [0], [1], [0, 0, 1, 1], [], []>} : vector<24x16xf32>, vector<16x32xf32>, vector<24x32xf32> -> vector<24x32xf32>
    %cst_370 = arith.constant dense<0.000000e+00> : vector<24x32xf32>
    %767 = tpu.matmul %14, %652, %cst_370 {dimension_numbers = #tpu.dot_dimension_numbers<[1], [0], [0], [1], [0, 0, 1, 1], [], []>} : vector<24x16xf32>, vector<16x32xf32>, vector<24x32xf32> -> vector<24x32xf32>
    %768 = arith.subf %767, %766 : vector<24x32xf32>
    %769 = arith.truncf %768 : vector<24x32xf32> to vector<24x32xbf16>
    %c0_371 = arith.constant 0 : index
    %c0_372 = arith.constant 0 : index
    %c0_373 = arith.constant 0 : index
    %770 = vector.load %arg21[%c0_371, %c0_372, %c0_373] : memref<3x32x32xbf16, #tpu.memory_space<vmem>>, vector<1x32x32xbf16>
    %771 = vector.shape_cast %770 : vector<1x32x32xbf16> to vector<32x32xbf16>
    %cst_374 = arith.constant dense<0.000000e+00> : vector<24x32xf32>
    %772 = tpu.matmul %769, %771, %cst_374 {dimension_numbers = #tpu.dot_dimension_numbers<[1], [0], [0], [1], [0, 0, 1, 1], [], []>} : vector<24x32xbf16>, vector<32x32xbf16>, vector<24x32xf32> -> vector<24x32xf32>
    %773 = arith.truncf %767 : vector<24x32xf32> to vector<24x32xbf16>
    %c1_375 = arith.constant 1 : index
    %c0_376 = arith.constant 0 : index
    %c0_377 = arith.constant 0 : index
    %774 = vector.load %arg21[%c1_375, %c0_376, %c0_377] : memref<3x32x32xbf16, #tpu.memory_space<vmem>>, vector<1x32x32xbf16>
    %775 = vector.shape_cast %774 : vector<1x32x32xbf16> to vector<32x32xbf16>
    %cst_378 = arith.constant dense<0.000000e+00> : vector<24x32xf32>
    %776 = tpu.matmul %773, %775, %cst_378 {dimension_numbers = #tpu.dot_dimension_numbers<[1], [0], [0], [1], [0, 0, 1, 1], [], []>} : vector<24x32xbf16>, vector<32x32xbf16>, vector<24x32xf32> -> vector<24x32xf32>
    %777 = arith.addf %772, %776 : vector<24x32xf32>
    %778 = arith.truncf %766 : vector<24x32xf32> to vector<24x32xbf16>
    %c2_379 = arith.constant 2 : index
    %c0_380 = arith.constant 0 : index
    %c0_381 = arith.constant 0 : index
    %779 = vector.load %arg21[%c2_379, %c0_380, %c0_381] : memref<3x32x32xbf16, #tpu.memory_space<vmem>>, vector<1x32x32xbf16>
    %780 = vector.shape_cast %779 : vector<1x32x32xbf16> to vector<32x32xbf16>
    %cst_382 = arith.constant dense<0.000000e+00> : vector<24x32xf32>
    %781 = tpu.matmul %778, %780, %cst_382 {dimension_numbers = #tpu.dot_dimension_numbers<[1], [0], [0], [1], [0, 0, 1, 1], [], []>} : vector<24x32xbf16>, vector<32x32xbf16>, vector<24x32xf32> -> vector<24x32xf32>
    %782 = arith.addf %777, %781 : vector<24x32xf32>
    %c0_383 = arith.constant 0 : index
    %c0_384 = arith.constant 0 : index
    %783 = vector.load %arg23[%c0_383, %c0_384] : memref<2x32xf32, #tpu.memory_space<vmem>>, vector<1x32xf32>
    %784 = vector.broadcast %783 : vector<1x32xf32> to vector<24x32xf32>
    %785 = arith.addf %782, %784 : vector<24x32xf32>
    %cst_385 = arith.constant 0.000000e+00 : f32
    %786 = vector.broadcast %cst_385 : f32 to vector<24x32xf32>
    %787 = arith.maximumf %785, %786 : vector<24x32xf32>
    %788 = arith.truncf %787 : vector<24x32xf32> to vector<24x32xbf16>
    %c0_386 = arith.constant 0 : index
    %c0_387 = arith.constant 0 : index
    %789 = vector.load %arg22[%c0_386, %c0_387] : memref<32x32xbf16, #tpu.memory_space<vmem>>, vector<32x32xbf16>
    %cst_388 = arith.constant dense<0.000000e+00> : vector<24x32xf32>
    %790 = tpu.matmul %788, %789, %cst_388 {dimension_numbers = #tpu.dot_dimension_numbers<[1], [0], [0], [1], [0, 0, 1, 1], [], []>} : vector<24x32xbf16>, vector<32x32xbf16>, vector<24x32xf32> -> vector<24x32xf32>
    %c1_389 = arith.constant 1 : index
    %c0_390 = arith.constant 0 : index
    %791 = vector.load %arg23[%c1_389, %c0_390] : memref<2x32xf32, #tpu.memory_space<vmem>>, vector<1x32xf32>
    %792 = vector.broadcast %791 : vector<1x32xf32> to vector<24x32xf32>
    %793 = arith.addf %790, %792 : vector<24x32xf32>
    %794 = arith.maximumf %765, %793 : vector<24x32xf32>
    %795 = arith.truncf %794 : vector<24x32xf32> to vector<24x32xbf16>
    %c0_391 = arith.constant 0 : index
    %c0_392 = arith.constant 0 : index
    %796 = vector.load %arg24[%c0_391, %c0_392] : memref<32x32xbf16, #tpu.memory_space<vmem>>, vector<32x32xbf16>
    %cst_393 = arith.constant dense<0.000000e+00> : vector<24x32xf32>
    %797 = tpu.matmul %795, %796, %cst_393 {dimension_numbers = #tpu.dot_dimension_numbers<[1], [0], [0], [1], [0, 0, 1, 1], [], []>} : vector<24x32xbf16>, vector<32x32xbf16>, vector<24x32xf32> -> vector<24x32xf32>
    %c0_394 = arith.constant 0 : index
    %c0_395 = arith.constant 0 : index
    %798 = vector.load %arg27[%c0_394, %c0_395] : memref<1x32xf32, #tpu.memory_space<vmem>>, vector<1x32xf32>
    %799 = vector.broadcast %798 : vector<1x32xf32> to vector<24x32xf32>
    %800 = arith.addf %797, %799 : vector<24x32xf32>
    %cst_396 = arith.constant 0.000000e+00 : f32
    %801 = vector.broadcast %cst_396 : f32 to vector<24x32xf32>
    %802 = arith.maximumf %800, %801 : vector<24x32xf32>
    %803 = arith.truncf %802 : vector<24x32xf32> to vector<24x32xbf16>
    %c0_397 = arith.constant 0 : index
    %c0_398 = arith.constant 0 : index
    %804 = vector.load %arg25[%c0_397, %c0_398] : memref<32x64xbf16, #tpu.memory_space<vmem>>, vector<32x64xbf16>
    %cst_399 = arith.constant dense<0.000000e+00> : vector<24x64xf32>
    %805 = tpu.matmul %803, %804, %cst_399 {dimension_numbers = #tpu.dot_dimension_numbers<[1], [0], [0], [1], [0, 0, 1, 1], [], []>} : vector<24x32xbf16>, vector<32x64xbf16>, vector<24x64xf32> -> vector<24x64xf32>
    %c0_400 = arith.constant 0 : index
    %c0_401 = arith.constant 0 : index
    %806 = vector.load %arg28[%c0_400, %c0_401] : memref<1x64xf32, #tpu.memory_space<vmem>>, vector<1x64xf32>
    %807 = vector.broadcast %806 : vector<1x64xf32> to vector<24x64xf32>
    %808 = arith.addf %805, %807 : vector<24x64xf32>
    %cst_402 = arith.constant 0.000000e+00 : f32
    %809 = vector.broadcast %cst_402 : f32 to vector<24x64xf32>
    %810 = arith.maximumf %808, %809 : vector<24x64xf32>
    %811 = arith.truncf %810 : vector<24x64xf32> to vector<24x64xbf16>
    %c0_403 = arith.constant 0 : index
    %c0_404 = arith.constant 0 : index
    %812 = vector.load %arg26[%c0_403, %c0_404] : memref<64x128xbf16, #tpu.memory_space<vmem>>, vector<64x128xbf16>
    %cst_405 = arith.constant dense<0.000000e+00> : vector<24x128xf32>
    %813 = tpu.matmul %811, %812, %cst_405 {dimension_numbers = #tpu.dot_dimension_numbers<[1], [0], [0], [1], [0, 0, 1, 1], [], []>} : vector<24x64xbf16>, vector<64x128xbf16>, vector<24x128xf32> -> vector<24x128xf32>
    %c0_406 = arith.constant 0 : index
    %c0_407 = arith.constant 0 : index
    %814 = vector.load %arg29[%c0_406, %c0_407] : memref<1x128xf32, #tpu.memory_space<vmem>>, vector<1x128xf32>
    %815 = vector.broadcast %814 : vector<1x128xf32> to vector<24x128xf32>
    %816 = arith.addf %813, %815 : vector<24x128xf32>
    %817 = arith.negf %816 : vector<24x128xf32>
    %818 = math.exp %817 : vector<24x128xf32>
    %cst_408 = arith.constant 1.000000e+00 : f32
    %819 = vector.broadcast %cst_408 : f32 to vector<24x128xf32>
    %820 = arith.addf %819, %818 : vector<24x128xf32>
    %821 = arith.divf %819, %820 : vector<24x128xf32>
    %c0_409 = arith.constant 0 : index
    %c0_410 = arith.constant 0 : index
    %822 = vector.load %arg30[%c0_409, %c0_410] : memref<24x128xf32, #tpu.memory_space<vmem>>, vector<24x128xf32>
    tpu.vector_store %arg30[%c0_409, %c0_410], %821 {strides = array<i32>} : memref<24x128xf32, #tpu.memory_space<vmem>>, vector<24x128xf32>,
    return
  }
}

</mosaic_0001>

<llo_original>
// kernel: collision_net_forward.1
$region0: #{collision_net_forward.1}
  #allocation0 [shape = 'u32[]', space=smem, size = 0x4, offset = 0x4, fixed_abs, tag = 'smem constant byte address 0x4 - core index']
  #allocation1 [shape = 'u32[72,128]{1,0:T(1,128)}', space=vmem, size = 0x9000, scoped, tag = 'internal scratch']
  %s0 = inlined_call_operand.smem [shape: u32[31], index: -1, kind: input, shape index: {}]
  %s1 = sld [smem:[%s0]]
  %s2 = scalar_lea.smem %s0, 1
  %s3 = sld [smem:[%s2]]
  %s4 = scalar_lea.smem %s0, 2
  %s5 = sld [smem:[%s4]]
  %s6 = scalar_lea.smem %s0, 3
  %s7 = sld [smem:[%s6]]
  %s8 = scalar_lea.smem %s0, 4
  %s9 = sld [smem:[%s8]]
  %s10 = scalar_lea.smem %s0, 5
  %s11 = sld [smem:[%s10]]
  %s12 = scalar_lea.smem %s0, 6
  %s13 = sld [smem:[%s12]]
  %s14 = scalar_lea.smem %s0, 7
  %s15 = sld [smem:[%s14]]
  %s16 = scalar_lea.smem %s0, 8
  %s17 = sld [smem:[%s16]]
  %s18 = scalar_lea.smem %s0, 9
  %s19 = sld [smem:[%s18]]
  %s20 = scalar_lea.smem %s0, 10
  %s21 = sld [smem:[%s20]]
  %s22 = scalar_lea.smem %s0, 11
  %s23 = sld [smem:[%s22]]
  %s24 = scalar_lea.smem %s0, 12
  %s25 = sld [smem:[%s24]]
  %s26 = scalar_lea.smem %s0, 13
  %s27 = sld [smem:[%s26]]
  %s28 = scalar_lea.smem %s0, 14
  %s29 = sld [smem:[%s28]]
  %s30 = scalar_lea.smem %s0, 15
  %s31 = sld [smem:[%s30]]
  %s32 = scalar_lea.smem %s0, 16
  %s33 = sld [smem:[%s32]]
  %s34 = scalar_lea.smem %s0, 17
  %s35 = sld [smem:[%s34]]
  %s36 = scalar_lea.smem %s0, 18
  %s37 = sld [smem:[%s36]]
  %s38 = scalar_lea.smem %s0, 19
  %s39 = sld [smem:[%s38]]
  %s40 = scalar_lea.smem %s0, 20
  %s41 = sld [smem:[%s40]]
  %s42 = scalar_lea.smem %s0, 21
  %s43 = sld [smem:[%s42]]
  %s44 = scalar_lea.smem %s0, 22
  %s45 = sld [smem:[%s44]]
  %s46 = scalar_lea.smem %s0, 23
  %s47 = sld [smem:[%s46]]
  %s48 = scalar_lea.smem %s0, 24
  %s49 = sld [smem:[%s48]]
  %s50 = scalar_lea.smem %s0, 25
  %s51 = sld [smem:[%s50]]
  %s52 = scalar_lea.smem %s0, 26
  %s53 = sld [smem:[%s52]]
  %s54 = scalar_lea.smem %s0, 27
  %s55 = sld [smem:[%s54]]
  %s56 = scalar_lea.smem %s0, 28
  %s57 = sld [smem:[%s56]]
  %s58 = scalar_lea.smem %s0, 29
  %s59 = sld [smem:[%s58]]
  %s60 = scalar_lea.smem %s0, 30
  %s61 = sld [smem:[%s60]]
  %s62 = sld [smem:[#allocation0]]
  $region214: #{collision_net_forward.1} parent=0
    _
  %s64 = ssub.s32 1, %s62
  %s65 = scalar_select 0, %s64, %s62
  $region1: #{collision_net_forward.1} parent=0
    #allocation2 [shape = 'u8[2048]{0}', space=vmem, size = 0x800, scoped, tag = 'input window, operand 3, single buffered']
    #allocation3 [shape = 's32[1]{0}', space=sflag, size = 0x4, scoped, tag = 'scoped memory for collision_net_forward.1']
    #allocation4 [shape = 'u8[8192]{0}', space=vmem, size = 0x2000, scoped, tag = 'input window, operand 4, single buffered']
    #allocation5 [shape = 's32[1]{0}', space=sflag, size = 0x4, scoped, tag = 'scoped memory for collision_net_forward.1']
    #allocation6 [shape = 'u8[1024]{0}', space=vmem, size = 0x400, scoped, tag = 'input window, operand 5, single buffered']
    #allocation7 [shape = 'u8[6144]{0}', space=vmem, size = 0x1800, scoped, tag = 'input window, operand 6, single buffered']
    #allocation8 [shape = 's32[1]{0}', space=sflag, size = 0x4, scoped, tag = 'scoped memory for collision_net_forward.1']
    #allocation9 [shape = 'u8[8192]{0}', space=vmem, size = 0x2000, scoped, tag = 'input window, operand 7, single buffered']
    #allocation10 [shape = 'u8[1024]{0}', space=vmem, size = 0x400, scoped, tag = 'input window, operand 8, single buffered']
    #allocation11 [shape = 's32[1]{0}', space=sflag, size = 0x4, scoped, tag = 'scoped memory for collision_net_forward.1']
    #allocation12 [shape = 'u8[4096]{0}', space=vmem, size = 0x1000, scoped, tag = 'input window, operand 9, single buffered']
    #allocation13 [shape = 'u8[8192]{0}', space=vmem, size = 0x2000, scoped, tag = 'input window, operand 10, single buffered']
    #allocation14 [shape = 's32[1]{0}', space=sflag, size = 0x4, scoped, tag = 'scoped memory for collision_net_forward.1']
    #allocation15 [shape = 'u8[1024]{0}', space=vmem, size = 0x400, scoped, tag = 'input window, operand 11, single buffered']
    #allocation16 [shape = 'u8[4096]{0}', space=vmem, size = 0x1000, scoped, tag = 'input window, operand 12, single buffered']
    #allocation17 [shape = 's32[1]{0}', space=sflag, size = 0x4, scoped, tag = 'scoped memory for collision_net_forward.1']
    #allocation18 [shape = 'u8[1024]{0}', space=vmem, size = 0x400, scoped, tag = 'input window, operand 14, single buffered']
    #allocation19 [shape = 'u8[73728]{0}', space=vmem, size = 0x12000, scoped, tag = 'input window, operand 15, single buffered']
    #allocation20 [shape = 's32[1]{0}', space=sflag, size = 0x4, scoped, tag = 'scoped memory for collision_net_forward.1']
    #allocation21 [shape = 'u8[49152]{0}', space=vmem, size = 0xc000, scoped, tag = 'input window, operand 16, single buffered']
    #allocation22 [shape = 'u8[12288]{0}', space=vmem, size = 0x3000, scoped, tag = 'input window, operand 17, single buffered']
    #allocation23 [shape = 's32[1]{0}', space=sflag, size = 0x4, scoped, tag = 'scoped memory for collision_net_forward.1']
    #allocation24 [shape = 'u8[73728]{0}', space=vmem, size = 0x12000, scoped, tag = 'input window, operand 18, single buffered']
    #allocation25 [shape = 'u8[49152]{0}', space=vmem, size = 0xc000, scoped, tag = 'input window, operand 19, single buffered']
    #allocation26 [shape = 's32[1]{0}', space=sflag, size = 0x4, scoped, tag = 'scoped memory for collision_net_forward.1']
    #allocation27 [shape = 'u8[12288]{0}', space=vmem, size = 0x3000, scoped, tag = 'input window, operand 20, single buffered']
    #allocation28 [shape = 'u8[8192]{0}', space=vmem, size = 0x2000, scoped, tag = 'input window, operand 22, single buffered']
    #allocation29 [shape = 's32[1]{0}', space=sflag, size = 0x4, scoped, tag = 'scoped memory for collision_net_forward.1']
    #allocation30 [shape = 'u8[8192]{0}', space=vmem, size = 0x2000, scoped, tag = 'input window, operand 24, single buffered']
    #allocation31 [shape = 'u8[8192]{0}', space=vmem, size = 0x2000, scoped, tag = 'input window, operand 25, single buffered']
    #allocation32 [shape = 's32[1]{0}', space=sflag, size = 0x4, scoped, tag = 'scoped memory for collision_net_forward.1']
    #allocation33 [shape = 'u8[16384]{0}', space=vmem, size = 0x4000, scoped, tag = 'input window, operand 26, single buffered']
    %66 = vsyncpa [#allocation3], 0
    %67 = vsyncpa [#allocation5], 0
    %68 = vsyncpa [#allocation8], 0
    %69 = vsyncpa [#allocation11], 0
    %70 = vsyncpa [#allocation14], 0
    %71 = vsyncpa [#allocation17], 0
    %72 = vsyncpa [#allocation20], 0
    %73 = vsyncpa [#allocation23], 0
    %74 = vsyncpa [#allocation26], 0
    %75 = vsyncpa [#allocation29], 0
    %76 = vsyncpa [#allocation32], 0
    // Predicated region
    $region2: #{collision_net_forward.1} parent=1 // pred_check
      _
    $region3: #{collision_net_forward.1} parent=1 // pred_check_branch
      %78 = sbr.rel (0) target = $region5
    $region4: #{collision_net_forward.1} parent=1 // pred_region
      _
    $region5: #{collision_net_forward.1} parent=1 // pred_fallthru
      _
    // Predicated region
    $region6: #{collision_net_forward.1} parent=1 // pred_check
      _
    $region7: #{collision_net_forward.1} parent=1 // pred_check_branch
      %80 = sbr.rel (0) target = $region9
    $region8: #{collision_net_forward.1} parent=1 // pred_region
      _
    $region9: #{collision_net_forward.1} parent=1 // pred_fallthru
      _
    // Predicated region
    $region10: #{collision_net_forward.1} parent=1 // pred_check
      _
    $region11: #{collision_net_forward.1} parent=1 // pred_check_branch
      %82 = sbr.rel (0) target = $region13
    $region12: #{collision_net_forward.1} parent=1 // pred_region
      _
    $region13: #{collision_net_forward.1} parent=1 // pred_fallthru
      _
    // Predicated region
    $region14: #{collision_net_forward.1} parent=1 // pred_check
      _
    $region15: #{collision_net_forward.1} parent=1 // pred_check_branch
      %84 = sbr.rel (0) target = $region17
    $region16: #{collision_net_forward.1} parent=1 // pred_region
      %86 = vsyncadd [#allocation3], 0
      %s88 = sshll.u32 %s7, 4
      %s89 = int_to_ptr.hbm [resolvable:$true] %s88
      %s90 = sshll.u32 [#allocation2], 4
      %s91 = int_to_ptr.vmem [resolvable:$true] %s90
      %93 = dma.hbm_to_vmem [thread:$0]  %s89, 64, %s91, [#allocation3]
    $region17: #{collision_net_forward.1} parent=1 // pred_fallthru
      _
    // Predicated region
    $region18: #{collision_net_forward.1} parent=1 // pred_check
      _
    $region19: #{collision_net_forward.1} parent=1 // pred_check_branch
      %95 = sbr.rel (0) target = $region21
    $region20: #{collision_net_forward.1} parent=1 // pred_region
      %97 = vsyncadd [#allocation5], 0
      %s98 = sshll.u32 %s9, 4
      %s99 = int_to_ptr.hbm [resolvable:$true] %s98
      %s100 = sshll.u32 [#allocation4], 4
      %s101 = int_to_ptr.vmem [resolvable:$true] %s100
      %106 = dma.hbm_to_vmem [thread:$0]  %s99, 256, %s101, [#allocation5], 64, 64, 4
    $region21: #{collision_net_forward.1} parent=1 // pred_fallthru
      _
    // Predicated region
    $region22: #{collision_net_forward.1} parent=1 // pred_check
      _
    $region23: #{collision_net_forward.1} parent=1 // pred_check_branch
      %108 = sbr.rel (0) target = $region25
    $region24: #{collision_net_forward.1} parent=1 // pred_region
      %110 = vsyncadd [#allocation5], 0
      %s112 = sshll.u32 %s11, 4
      %s113 = int_to_ptr.hbm [resolvable:$true] %s112
      %s114 = sshll.u32 [#allocation6], 4
      %s115 = int_to_ptr.vmem [resolvable:$true] %s114
      %117 = dma.hbm_to_vmem [thread:$0]  %s113, 32, %s115, [#allocation5]
    $region25: #{collision_net_forward.1} parent=1 // pred_fallthru
      _
    // Predicated region
    $region26: #{collision_net_forward.1} parent=1 // pred_check
      _
    $region27: #{collision_net_forward.1} parent=1 // pred_check_branch
      %119 = sbr.rel (0) target = $region29
    $region28: #{collision_net_forward.1} parent=1 // pred_region
      %121 = vsyncadd [#allocation8], 0
      %s122 = sshll.u32 %s13, 4
      %s123 = int_to_ptr.hbm [resolvable:$true] %s122
      %s124 = sshll.u32 [#allocation7], 4
      %s125 = int_to_ptr.vmem [resolvable:$true] %s124
      %130 = dma.hbm_to_vmem [thread:$0]  %s123, 192, %s125, [#allocation8], 64, 64, 4
    $region29: #{collision_net_forward.1} parent=1 // pred_fallthru
      _
    // Predicated region
    $region30: #{collision_net_forward.1} parent=1 // pred_check
      _
    $region31: #{collision_net_forward.1} parent=1 // pred_check_branch
      %132 = sbr.rel (0) target = $region33
    $region32: #{collision_net_forward.1} parent=1 // pred_region
      %134 = vsyncadd [#allocation8], 0
      %s135 = sshll.u32 %s15, 4
      %s136 = int_to_ptr.hbm [resolvable:$true] %s135
      %s137 = sshll.u32 [#allocation9], 4
      %s138 = int_to_ptr.vmem [resolvable:$true] %s137
      %143 = dma.hbm_to_vmem [thread:$0]  %s136, 256, %s138, [#allocation8], 64, 64, 4
    $region33: #{collision_net_forward.1} parent=1 // pred_fallthru
      _
    // Predicated region
    $region34: #{collision_net_forward.1} parent=1 // pred_check
      _
    $region35: #{collision_net_forward.1} parent=1 // pred_check_branch
      %145 = sbr.rel (0) target = $region37
    $region36: #{collision_net_forward.1} parent=1 // pred_region
      %147 = vsyncadd [#allocation11], 0
      %s149 = sshll.u32 %s17, 4
      %s150 = int_to_ptr.hbm [resolvable:$true] %s149
      %s151 = sshll.u32 [#allocation10], 4
      %s152 = int_to_ptr.vmem [resolvable:$true] %s151
      %154 = dma.hbm_to_vmem [thread:$0]  %s150, 32, %s152, [#allocation11]
    $region37: #{collision_net_forward.1} parent=1 // pred_fallthru
      _
    // Predicated region
    $region38: #{collision_net_forward.1} parent=1 // pred_check
      _
    $region39: #{collision_net_forward.1} parent=1 // pred_check_branch
      %156 = sbr.rel (0) target = $region41
    $region40: #{collision_net_forward.1} parent=1 // pred_region
      %158 = vsyncadd [#allocation11], 0
      %s159 = sshll.u32 %s19, 4
      %s160 = int_to_ptr.hbm [resolvable:$true] %s159
      %s161 = sshll.u32 [#allocation12], 4
      %s162 = int_to_ptr.vmem [resolvable:$true] %s161
      %167 = dma.hbm_to_vmem [thread:$0]  %s160, 128, %s162, [#allocation11], 64, 64, 4
    $region41: #{collision_net_forward.1} parent=1 // pred_fallthru
      _
    // Predicated region
    $region42: #{collision_net_forward.1} parent=1 // pred_check
      _
    $region43: #{collision_net_forward.1} parent=1 // pred_check_branch
      %169 = sbr.rel (0) target = $region45
    $region44: #{collision_net_forward.1} parent=1 // pred_region
      %171 = vsyncadd [#allocation14], 0
      %s172 = sshll.u32 %s21, 4
      %s173 = int_to_ptr.hbm [resolvable:$true] %s172
      %s174 = sshll.u32 [#allocation13], 4
      %s175 = int_to_ptr.vmem [resolvable:$true] %s174
      %180 = dma.hbm_to_vmem [thread:$0]  %s173, 256, %s175, [#allocation14], 64, 64, 4
    $region45: #{collision_net_forward.1} parent=1 // pred_fallthru
      _
    // Predicated region
    $region46: #{collision_net_forward.1} parent=1 // pred_check
      _
    $region47: #{collision_net_forward.1} parent=1 // pred_check_branch
      %182 = sbr.rel (0) target = $region49
    $region48: #{collision_net_forward.1} parent=1 // pred_region
      %184 = vsyncadd [#allocation14], 0
      %s186 = sshll.u32 %s23, 4
      %s187 = int_to_ptr.hbm [resolvable:$true] %s186
      %s188 = sshll.u32 [#allocation15], 4
      %s189 = int_to_ptr.vmem [resolvable:$true] %s188
      %191 = dma.hbm_to_vmem [thread:$0]  %s187, 32, %s189, [#allocation14]
    $region49: #{collision_net_forward.1} parent=1 // pred_fallthru
      _
    // Predicated region
    $region50: #{collision_net_forward.1} parent=1 // pred_check
      _
    $region51: #{collision_net_forward.1} parent=1 // pred_check_branch
      %193 = sbr.rel (0) target = $region53
    $region52: #{collision_net_forward.1} parent=1 // pred_region
      %195 = vsyncadd [#allocation17], 0
      %s196 = sshll.u32 %s25, 4
      %s197 = int_to_ptr.hbm [resolvable:$true] %s196
      %s198 = sshll.u32 [#allocation16], 4
      %s199 = int_to_ptr.vmem [resolvable:$true] %s198
      %204 = dma.hbm_to_vmem [thread:$0]  %s197, 128, %s199, [#allocation17], 64, 64, 4
    $region53: #{collision_net_forward.1} parent=1 // pred_fallthru
      _
    // Predicated region
    $region54: #{collision_net_forward.1} parent=1 // pred_check
      _
    $region55: #{collision_net_forward.1} parent=1 // pred_check_branch
      %206 = sbr.rel (0) target = $region57
    $region56: #{collision_net_forward.1} parent=1 // pred_region
      _
    $region57: #{collision_net_forward.1} parent=1 // pred_fallthru
      _
    // Predicated region
    $region58: #{collision_net_forward.1} parent=1 // pred_check
      _
    $region59: #{collision_net_forward.1} parent=1 // pred_check_branch
      %208 = sbr.rel (0) target = $region61
    $region60: #{collision_net_forward.1} parent=1 // pred_region
      %210 = vsyncadd [#allocation17], 0
      %s212 = sshll.u32 %s29, 4
      %s213 = int_to_ptr.hbm [resolvable:$true] %s212
      %s214 = sshll.u32 [#allocation18], 4
      %s215 = int_to_ptr.vmem [resolvable:$true] %s214
      %217 = dma.hbm_to_vmem [thread:$0]  %s213, 32, %s215, [#allocation17]
    $region61: #{collision_net_forward.1} parent=1 // pred_fallthru
      _
    // Predicated region
    $region62: #{collision_net_forward.1} parent=1 // pred_check
      _
    $region63: #{collision_net_forward.1} parent=1 // pred_check_branch
      %219 = sbr.rel (0) target = $region65
    $region64: #{collision_net_forward.1} parent=1 // pred_region
      %221 = vsyncadd [#allocation20], 0
      %s222 = sshll.u32 %s31, 4
      %s223 = int_to_ptr.hbm [resolvable:$true] %s222
      %s224 = sshll.u32 [#allocation19], 4
      %s225 = int_to_ptr.vmem [resolvable:$true] %s224
      %230 = dma.hbm_to_vmem [thread:$0]  %s223, 2304, %s225, [#allocation20], 64, 64, 4
    $region65: #{collision_net_forward.1} parent=1 // pred_fallthru
      _
    // Predicated region
    $region66: #{collision_net_forward.1} parent=1 // pred_check
      _
    $region67: #{collision_net_forward.1} parent=1 // pred_check_branch
      %232 = sbr.rel (0) target = $region69
    $region68: #{collision_net_forward.1} parent=1 // pred_region
      %234 = vsyncadd [#allocation20], 0
      %s235 = sshll.u32 %s33, 4
      %s236 = int_to_ptr.hbm [resolvable:$true] %s235
      %s237 = sshll.u32 [#allocation21], 4
      %s238 = int_to_ptr.vmem [resolvable:$true] %s237
      %243 = dma.hbm_to_vmem [thread:$0]  %s236, 1536, %s238, [#allocation20], 64, 64, 4
    $region69: #{collision_net_forward.1} parent=1 // pred_fallthru
      _
    // Predicated region
    $region70: #{collision_net_forward.1} parent=1 // pred_check
      _
    $region71: #{collision_net_forward.1} parent=1 // pred_check_branch
      %245 = sbr.rel (0) target = $region73
    $region72: #{collision_net_forward.1} parent=1 // pred_region
      %247 = vsyncadd [#allocation23], 0
      %s248 = sshll.u32 %s35, 4
      %s249 = int_to_ptr.hbm [resolvable:$true] %s248
      %s250 = sshll.u32 [#allocation22], 4
      %s251 = int_to_ptr.vmem [resolvable:$true] %s250
      %256 = dma.hbm_to_vmem [thread:$0]  %s249, 384, %s251, [#allocation23], 128, 128, 8
    $region73: #{collision_net_forward.1} parent=1 // pred_fallthru
      _
    // Predicated region
    $region74: #{collision_net_forward.1} parent=1 // pred_check
      _
    $region75: #{collision_net_forward.1} parent=1 // pred_check_branch
      %258 = sbr.rel (0) target = $region77
    $region76: #{collision_net_forward.1} parent=1 // pred_region
      %260 = vsyncadd [#allocation23], 0
      %s261 = sshll.u32 %s37, 4
      %s262 = int_to_ptr.hbm [resolvable:$true] %s261
      %s263 = sshll.u32 [#allocation24], 4
      %s264 = int_to_ptr.vmem [resolvable:$true] %s263
      %269 = dma.hbm_to_vmem [thread:$0]  %s262, 2304, %s264, [#allocation23], 64, 64, 4
    $region77: #{collision_net_forward.1} parent=1 // pred_fallthru
      _
    // Predicated region
    $region78: #{collision_net_forward.1} parent=1 // pred_check
      _
    $region79: #{collision_net_forward.1} parent=1 // pred_check_branch
      %271 = sbr.rel (0) target = $region81
    $region80: #{collision_net_forward.1} parent=1 // pred_region
      %273 = vsyncadd [#allocation26], 0
      %s274 = sshll.u32 %s39, 4
      %s275 = int_to_ptr.hbm [resolvable:$true] %s274
      %s276 = sshll.u32 [#allocation25], 4
      %s277 = int_to_ptr.vmem [resolvable:$true] %s276
      %282 = dma.hbm_to_vmem [thread:$0]  %s275, 1536, %s277, [#allocation26], 64, 64, 4
    $region81: #{collision_net_forward.1} parent=1 // pred_fallthru
      _
    // Predicated region
    $region82: #{collision_net_forward.1} parent=1 // pred_check
      _
    $region83: #{collision_net_forward.1} parent=1 // pred_check_branch
      %284 = sbr.rel (0) target = $region85
    $region84: #{collision_net_forward.1} parent=1 // pred_region
      %286 = vsyncadd [#allocation26], 0
      %s287 = sshll.u32 %s41, 4
      %s288 = int_to_ptr.hbm [resolvable:$true] %s287
      %s289 = sshll.u32 [#allocation27], 4
      %s290 = int_to_ptr.vmem [resolvable:$true] %s289
      %295 = dma.hbm_to_vmem [thread:$0]  %s288, 384, %s290, [#allocation26], 128, 128, 8
    $region85: #{collision_net_forward.1} parent=1 // pred_fallthru
      _
    // Predicated region
    $region86: #{collision_net_forward.1} parent=1 // pred_check
      _
    $region87: #{collision_net_forward.1} parent=1 // pred_check_branch
      %297 = sbr.rel (0) target = $region89
    $region88: #{collision_net_forward.1} parent=1 // pred_region
      _
    $region89: #{collision_net_forward.1} parent=1 // pred_fallthru
      _
    // Predicated region
    $region90: #{collision_net_forward.1} parent=1 // pred_check
      _
    $region91: #{collision_net_forward.1} parent=1 // pred_check_branch
      %299 = sbr.rel (0) target = $region93
    $region92: #{collision_net_forward.1} parent=1 // pred_region
      %301 = vsyncadd [#allocation29], 0
      %s302 = sshll.u32 %s45, 4
      %s303 = int_to_ptr.hbm [resolvable:$true] %s302
      %s304 = sshll.u32 [#allocation28], 4
      %s305 = int_to_ptr.vmem [resolvable:$true] %s304
      %310 = dma.hbm_to_vmem [thread:$0]  %s303, 256, %s305, [#allocation29], 64, 64, 4
    $region93: #{collision_net_forward.1} parent=1 // pred_fallthru
      _
    // Predicated region
    $region94: #{collision_net_forward.1} parent=1 // pred_check
      _
    $region95: #{collision_net_forward.1} parent=1 // pred_check_branch
      %312 = sbr.rel (0) target = $region97
    $region96: #{collision_net_forward.1} parent=1 // pred_region
      _
    $region97: #{collision_net_forward.1} parent=1 // pred_fallthru
      _
    // Predicated region
    $region98: #{collision_net_forward.1} parent=1 // pred_check
      _
    $region99: #{collision_net_forward.1} parent=1 // pred_check_branch
      %314 = sbr.rel (0) target = $region101
    $region100: #{collision_net_forward.1} parent=1 // pred_region
      %316 = vsyncadd [#allocation29], 0
      %s317 = sshll.u32 %s49, 4
      %s318 = int_to_ptr.hbm [resolvable:$true] %s317
      %s319 = sshll.u32 [#allocation30], 4
      %s320 = int_to_ptr.vmem [resolvable:$true] %s319
      %325 = dma.hbm_to_vmem [thread:$0]  %s318, 256, %s320, [#allocation29], 64, 64, 4
    $region101: #{collision_net_forward.1} parent=1 // pred_fallthru
      _
    // Predicated region
    $region102: #{collision_net_forward.1} parent=1 // pred_check
      _
    $region103: #{collision_net_forward.1} parent=1 // pred_check_branch
      %327 = sbr.rel (0) target = $region105
    $region104: #{collision_net_forward.1} parent=1 // pred_region
      %329 = vsyncadd [#allocation32], 0
      %s330 = sshll.u32 %s51, 4
      %s331 = int_to_ptr.hbm [resolvable:$true] %s330
      %s332 = sshll.u32 [#allocation31], 4
      %s333 = int_to_ptr.vmem [resolvable:$true] %s332
      %338 = dma.hbm_to_vmem [thread:$0]  %s331, 256, %s333, [#allocation32], 64, 64, 4
    $region105: #{collision_net_forward.1} parent=1 // pred_fallthru
      _
    // Predicated region
    $region106: #{collision_net_forward.1} parent=1 // pred_check
      _
    $region107: #{collision_net_forward.1} parent=1 // pred_check_branch
      %340 = sbr.rel (0) target = $region109
    $region108: #{collision_net_forward.1} parent=1 // pred_region
      %342 = vsyncadd [#allocation32], 0
      %s343 = sshll.u32 %s53, 4
      %s344 = int_to_ptr.hbm [resolvable:$true] %s343
      %s345 = sshll.u32 [#allocation33], 4
      %s346 = int_to_ptr.vmem [resolvable:$true] %s345
      %351 = dma.hbm_to_vmem [thread:$0]  %s344, 512, %s346, [#allocation32], 64, 64, 4
    $region109: #{collision_net_forward.1} parent=1 // pred_fallthru
      _
    // Predicated region
    $region110: #{collision_net_forward.1} parent=1 // pred_check
      _
    $region111: #{collision_net_forward.1} parent=1 // pred_check_branch
      %353 = sbr.rel (0) target = $region113
    $region112: #{collision_net_forward.1} parent=1 // pred_region
      _
    $region113: #{collision_net_forward.1} parent=1 // pred_fallthru
      _
    // Predicated region
    $region114: #{collision_net_forward.1} parent=1 // pred_check
      _
    $region115: #{collision_net_forward.1} parent=1 // pred_check_branch
      %355 = sbr.rel (0) target = $region117
    $region116: #{collision_net_forward.1} parent=1 // pred_region
      _
    $region117: #{collision_net_forward.1} parent=1 // pred_fallthru
      _
    // Predicated region
    $region118: #{collision_net_forward.1} parent=1 // pred_check
      _
    $region119: #{collision_net_forward.1} parent=1 // pred_check_branch
      %357 = sbr.rel (0) target = $region121
    $region120: #{collision_net_forward.1} parent=1 // pred_region
      _
    $region121: #{collision_net_forward.1} parent=1 // pred_fallthru
      _
    // Predicated region
    $region122: #{collision_net_forward.1} parent=1 // pred_check
      _
    $region123: #{collision_net_forward.1} parent=1 // pred_check_branch
      %359 = sbr.rel (0) target = $region125
    $region124: #{collision_net_forward.1} parent=1 // pred_region
      %361 = dma.done [#allocation3], 64
    $region125: #{collision_net_forward.1} parent=1 // pred_fallthru
      _
    // Predicated region
    $region126: #{collision_net_forward.1} parent=1 // pred_check
      _
    $region127: #{collision_net_forward.1} parent=1 // pred_check_branch
      %363 = sbr.rel (0) target = $region129
    $region128: #{collision_net_forward.1} parent=1 // pred_region
      %365 = dma.done [#allocation5], 256
    $region129: #{collision_net_forward.1} parent=1 // pred_fallthru
      _
    // Predicated region
    $region130: #{collision_net_forward.1} parent=1 // pred_check
      _
    $region131: #{collision_net_forward.1} parent=1 // pred_check_branch
      %367 = sbr.rel (0) target = $region133
    $region132: #{collision_net_forward.1} parent=1 // pred_region
      %369 = dma.done [#allocation5], 32
    $region133: #{collision_net_forward.1} parent=1 // pred_fallthru
      _
    // Predicated region
    $region134: #{collision_net_forward.1} parent=1 // pred_check
      _
    $region135: #{collision_net_forward.1} parent=1 // pred_check_branch
      %371 = sbr.rel (0) target = $region137
    $region136: #{collision_net_forward.1} parent=1 // pred_region
      %373 = dma.done [#allocation8], 192
    $region137: #{collision_net_forward.1} parent=1 // pred_fallthru
      _
    // Predicated region
    $region138: #{collision_net_forward.1} parent=1 // pred_check
      _
    $region139: #{collision_net_forward.1} parent=1 // pred_check_branch
      %375 = sbr.rel (0) target = $region141
    $region140: #{collision_net_forward.1} parent=1 // pred_region
      %377 = dma.done [#allocation8], 256
    $region141: #{collision_net_forward.1} parent=1 // pred_fallthru
      _
    // Predicated region
    $region142: #{collision_net_forward.1} parent=1 // pred_check
      _
    $region143: #{collision_net_forward.1} parent=1 // pred_check_branch
      %379 = sbr.rel (0) target = $region145
    $region144: #{collision_net_forward.1} parent=1 // pred_region
      %381 = dma.done [#allocation11], 32
    $region145: #{collision_net_forward.1} parent=1 // pred_fallthru
      _
    // Predicated region
    $region146: #{collision_net_forward.1} parent=1 // pred_check
      _
    $region147: #{collision_net_forward.1} parent=1 // pred_check_branch
      %383 = sbr.rel (0) target = $region149
    $region148: #{collision_net_forward.1} parent=1 // pred_region
      %385 = dma.done [#allocation11], 128
    $region149: #{collision_net_forward.1} parent=1 // pred_fallthru
      _
    // Predicated region
    $region150: #{collision_net_forward.1} parent=1 // pred_check
      _
    $region151: #{collision_net_forward.1} parent=1 // pred_check_branch
      %387 = sbr.rel (0) target = $region153
    $region152: #{collision_net_forward.1} parent=1 // pred_region
      %389 = dma.done [#allocation14], 256
    $region153: #{collision_net_forward.1} parent=1 // pred_fallthru
      _
    // Predicated region
    $region154: #{collision_net_forward.1} parent=1 // pred_check
      _
    $region155: #{collision_net_forward.1} parent=1 // pred_check_branch
      %391 = sbr.rel (0) target = $region157
    $region156: #{collision_net_forward.1} parent=1 // pred_region
      %393 = dma.done [#allocation14], 32
    $region157: #{collision_net_forward.1} parent=1 // pred_fallthru
      _
    // Predicated region
    $region158: #{collision_net_forward.1} parent=1 // pred_check
      _
    $region159: #{collision_net_forward.1} parent=1 // pred_check_branch
      %395 = sbr.rel (0) target = $region161
    $region160: #{collision_net_forward.1} parent=1 // pred_region
      %397 = dma.done [#allocation17], 128
    $region161: #{collision_net_forward.1} parent=1 // pred_fallthru
      _
    // Predicated region
    $region162: #{collision_net_forward.1} parent=1 // pred_check
      _
    $region163: #{collision_net_forward.1} parent=1 // pred_check_branch
      %399 = sbr.rel (0) target = $region165
    $region164: #{collision_net_forward.1} parent=1 // pred_region
      %401 = dma.done [#allocation17], 32
    $region165: #{collision_net_forward.1} parent=1 // pred_fallthru
      _
    // Predicated region
    $region166: #{collision_net_forward.1} parent=1 // pred_check
      _
    $region167: #{collision_net_forward.1} parent=1 // pred_check_branch
      %403 = sbr.rel (0) target = $region169
    $region168: #{collision_net_forward.1} parent=1 // pred_region
      %405 = dma.done [#allocation20], 2304
    $region169: #{collision_net_forward.1} parent=1 // pred_fallthru
      _
    // Predicated region
    $region170: #{collision_net_forward.1} parent=1 // pred_check
      _
    $region171: #{collision_net_forward.1} parent=1 // pred_check_branch
      %407 = sbr.rel (0) target = $region173
    $region172: #{collision_net_forward.1} parent=1 // pred_region
      %409 = dma.done [#allocation20], 1536
    $region173: #{collision_net_forward.1} parent=1 // pred_fallthru
      _
    // Predicated region
    $region174: #{collision_net_forward.1} parent=1 // pred_check
      _
    $region175: #{collision_net_forward.1} parent=1 // pred_check_branch
      %411 = sbr.rel (0) target = $region177
    $region176: #{collision_net_forward.1} parent=1 // pred_region
      %413 = dma.done [#allocation23], 384
    $region177: #{collision_net_forward.1} parent=1 // pred_fallthru
      _
    // Predicated region
    $region178: #{collision_net_forward.1} parent=1 // pred_check
      _
    $region179: #{collision_net_forward.1} parent=1 // pred_check_branch
      %415 = sbr.rel (0) target = $region181
    $region180: #{collision_net_forward.1} parent=1 // pred_region
      %417 = dma.done [#allocation23], 2304
    $region181: #{collision_net_forward.1} parent=1 // pred_fallthru
      _
    // Predicated region
    $region182: #{collision_net_forward.1} parent=1 // pred_check
      _
    $region183: #{collision_net_forward.1} parent=1 // pred_check_branch
      %419 = sbr.rel (0) target = $region185
    $region184: #{collision_net_forward.1} parent=1 // pred_region
      %421 = dma.done [#allocation26], 1536
    $region185: #{collision_net_forward.1} parent=1 // pred_fallthru
      _
    // Predicated region
    $region186: #{collision_net_forward.1} parent=1 // pred_check
      _
    $region187: #{collision_net_forward.1} parent=1 // pred_check_branch
      %423 = sbr.rel (0) target = $region189
    $region188: #{collision_net_forward.1} parent=1 // pred_region
      %425 = dma.done [#allocation26], 384
    $region189: #{collision_net_forward.1} parent=1 // pred_fallthru
      _
    // Predicated region
    $region190: #{collision_net_forward.1} parent=1 // pred_check
      _
    $region191: #{collision_net_forward.1} parent=1 // pred_check_branch
      %427 = sbr.rel (0) target = $region193
    $region192: #{collision_net_forward.1} parent=1 // pred_region
      %429 = dma.done [#allocation29], 256
    $region193: #{collision_net_forward.1} parent=1 // pred_fallthru
      _
    // Predicated region
    $region194: #{collision_net_forward.1} parent=1 // pred_check
      _
    $region195: #{collision_net_forward.1} parent=1 // pred_check_branch
      %431 = sbr.rel (0) target = $region197
    $region196: #{collision_net_forward.1} parent=1 // pred_region
      %433 = dma.done [#allocation29], 256
    $region197: #{collision_net_forward.1} parent=1 // pred_fallthru
      _
    // Predicated region
    $region198: #{collision_net_forward.1} parent=1 // pred_check
      _
    $region199: #{collision_net_forward.1} parent=1 // pred_check_branch
      %435 = sbr.rel (0) target = $region201
    $region200: #{collision_net_forward.1} parent=1 // pred_region
      %437 = dma.done [#allocation32], 256
    $region201: #{collision_net_forward.1} parent=1 // pred_fallthru
      _
    // Predicated region
    $region202: #{collision_net_forward.1} parent=1 // pred_check
      _
    $region203: #{collision_net_forward.1} parent=1 // pred_check_branch
      %439 = sbr.rel (0) target = $region205
    $region204: #{collision_net_forward.1} parent=1 // pred_region
      %441 = dma.done [#allocation32], 512
    $region205: #{collision_net_forward.1} parent=1 // pred_fallthru
      _
    %v443 = vld [vmem:[%s1] sm:$0xff]
    %v444 = vld [vmem:[%s1 + $0x8] sm:$0xff]
    %v445 = vld [vmem:[%s3] sm:$0xff]
    %v446 = vld [vmem:[%s3 + $0x8] sm:$0xff]
    %v447 = vld [vmem:[%s3 + $0x10] sm:$0xff]
    %v448 = vlaneseq
    %v449 = vand.u32 %v448, 127
    %450 = vset.pattern.permute.xlu0 0
    %451 = vperm.xlu0 %450, %v445
    %v452 = vpop.permute.xlu0 %451
    %453 = vset.pattern.permute.xlu0 0
    %454 = vperm.xlu0 %453, %v446
    %v455 = vpop.permute.xlu0 %454
    %456 = vset.pattern.permute.xlu0 0
    %457 = vperm.xlu0 %456, %v447
    %v458 = vpop.permute.xlu0 %457
    %vm459 = vcmp.eq.s32.totalorder %v449, %v452
    %vm460 = vcmp.eq.s32.totalorder %v449, %v455
    %vm461 = vcmp.eq.s32.totalorder %v449, %v458
    %v462 = vsel %vm459, 1.0, 0.0
    %v463 = vsel %vm460, 1.0, 0.0
    %v464 = vsel %vm461, 1.0, 0.0
    %465 = vset.pattern.permute.xlu0 1
    %466 = vperm.xlu0 %465, %v445
    %v467 = vpop.permute.xlu0 %466
    %468 = vset.pattern.permute.xlu0 1
    %469 = vperm.xlu0 %468, %v446
    %v470 = vpop.permute.xlu0 %469
    %471 = vset.pattern.permute.xlu0 1
    %472 = vperm.xlu0 %471, %v447
    %v473 = vpop.permute.xlu0 %472
    %vm474 = vcmp.eq.s32.totalorder %v449, %v467
    %vm475 = vcmp.eq.s32.totalorder %v449, %v470
    %vm476 = vcmp.eq.s32.totalorder %v449, %v473
    %v477 = vsel %vm474, 1.0, 0.0
    %v478 = vsel %vm475, 1.0, 0.0
    %v479 = vsel %vm476, 1.0, 0.0
    %v480 = vld [vmem:[#allocation2] sm:$0x7]
    %v481 = vld [vmem:[#allocation6] sm:$0x1]
    %v482 = vld [vmem:[#allocation4] sm:$0xf]
    %v483 = vld [vmem:[#allocation4 + $0x4] sm:$0xf]
    %v484 = vld [vmem:[#allocation4 + $0x8] sm:$0xf]
    %v485 = vld [vmem:[#allocation4 + $0xc] sm:$0xf]
    %v486 = vld [vmem:[#allocation6 + $0x1] sm:$0x1]
    %v487 = vpack.c.bf16 %v444, %v443
    %v488 = vperm.slane %v481, 0
    %vm489 = vcmask 48128
    %v491 = vsel %vm489, %v487, 0
    %vm493 = vcmask 1042432
    %v495 = vsel %vm493, %v480, 0
    %497 = vmatpush.bf16.msra.mxu0 0
    %498 = vmatpush.bf16.msra.mxu0 0
    %499 = vmatpush.bf16.msra.mxu0 0
    %500 = vmatpush.bf16.msra.mxu0 0
    %501 = vmatpush.bf16.msra.mxu0 0
    %502 = vmatpush.bf16.msra.mxu0 0
    %503 = vmatpush.bf16.msra.mxu0 0
    %504 = vmatpush.bf16.msra.mxu0 %v495
    %505 = vmatmul.bf16.gmra.mxu0 %v491
    %v506 = vpop.f32.mrf.mxu0
    %v507 = vadd.f32 %v488, %v506
    %v508 = vpop.f32.mrf.mxu0
    %v509 = vadd.f32 %v488, %v508
    %510 = vdwg.mxu0
    %v511 = vmax.f32 %v507, 0.0
    %v512 = vmax.f32 %v509, 0.0
    %v513 = vpack.c.bf16 %v512, %v511
    %v514 = vperm.slane %v486, 0
    %v519 = vunpack.c.l.b16 %v482
    %v520 = vunpack.c.l.b16 %v483
    %v521 = vunpack.c.l.b16 %v484
    %v522 = vunpack.c.l.b16 %v485
    %v523 = vpack.c.b16 %v520, %v519
    %v524 = vpack.c.b16 %v522, %v521
    %vm527 = vcmask 261120
    %v529 = vsel %vm527, %v513, 0
    %531 = vmatpush.bf16.msra.mxu0 0
    %532 = vmatpush.bf16.msra.mxu0 0
    %533 = vmatpush.bf16.msra.mxu0 0
    %534 = vmatpush.bf16.msra.mxu0 0
    %535 = vmatpush.bf16.msra.mxu0 0
    %536 = vmatpush.bf16.msra.mxu0 0
    %537 = vmatpush.bf16.msra.mxu0 %v524
    %538 = vmatpush.bf16.msra.mxu0 %v523
    %539 = vmatmul.bf16.gmra.mxu0 %v529
    %v540 = vpop.f32.mrf.mxu0
    %v541 = vadd.f32 %v514, %v540
    %v542 = vpop.f32.mrf.mxu0
    %v543 = vadd.f32 %v514, %v542
    %544 = vdwg.mxu0
    %vm545 = vcmask 130048
    %v547 = vsel %vm545, %v462, 0
    %v550 = vsel %vm545, %v463, 0
    %v553 = vsel %vm545, %v464, 0
    %555 = vmatpush.msra.mxu0 0.0
    %556 = vmatpush.msra.mxu0 0.0
    %557 = vmatpush.msra.mxu0 0.0
    %558 = vmatpush.msra.mxu0 0.0
    %559 = vmatpush.msra.mxu0 0.0
    %560 = vmatpush.msra.mxu0 0.0
    %561 = vmatpush.msra.mxu0 0.0
    %562 = vmatpush.msra.mxu0 0.0
    %563 = vmatpush.msra.mxu0 0.0
    %564 = vmatpush.msra.mxu0 0.0
    %565 = vmatpush.msra.mxu0 0.0
    %566 = vmatpush.msra.mxu0 0.0
    %567 = vmatpush.msra.mxu0 0.0
    %568 = vmatpush.msra.mxu0 0.0
    %569 = vmatpush.msra.mxu0 %v444
    %570 = vmatpush.msra.mxu0 %v443
    %571 = vmatmul.f32.gmra.mxu0 %v547
    %v572 = vpop.f32.mrf.mxu0
    %v573 = vadd.f32 0.0, %v572
    %574 = vmatmul.f32.gmra.mxu0 %v550
    %v575 = vpop.f32.mrf.mxu0
    %v576 = vadd.f32 0.0, %v575
    %577 = vmatmul.f32.gmra.mxu0 %v553
    %v578 = vpop.f32.mrf.mxu0
    %v579 = vadd.f32 0.0, %v578
    %580 = vdwg.mxu0
    %v582 = vsel %vm545, %v477, 0
    %v585 = vsel %vm545, %v478, 0
    %v588 = vsel %vm545, %v479, 0
    %590 = vmatpush.msra.mxu0 0.0
    %591 = vmatpush.msra.mxu0 0.0
    %592 = vmatpush.msra.mxu0 0.0
    %593 = vmatpush.msra.mxu0 0.0
    %594 = vmatpush.msra.mxu0 0.0
    %595 = vmatpush.msra.mxu0 0.0
    %596 = vmatpush.msra.mxu0 0.0
    %597 = vmatpush.msra.mxu0 0.0
    %598 = vmatpush.msra.mxu0 0.0
    %599 = vmatpush.msra.mxu0 0.0
    %600 = vmatpush.msra.mxu0 0.0
    %601 = vmatpush.msra.mxu0 0.0
    %602 = vmatpush.msra.mxu0 0.0
    %603 = vmatpush.msra.mxu0 0.0
    %604 = vmatpush.msra.mxu0 %v444
    %605 = vmatpush.msra.mxu0 %v443
    %606 = vmatmul.f32.gmra.mxu0 %v582
    %v607 = vpop.f32.mrf.mxu0
    %v608 = vadd.f32 0.0, %v607
    %609 = vmatmul.f32.gmra.mxu0 %v585
    %v610 = vpop.f32.mrf.mxu0
    %v611 = vadd.f32 0.0, %v610
    %612 = vmatmul.f32.gmra.mxu0 %v588
    %v613 = vpop.f32.mrf.mxu0
    %v614 = vadd.f32 0.0, %v613
    %615 = vdwg.mxu0
    %v616 = vsub.f32 %v608, %v573
    %v617 = vsub.f32 %v611, %v576
    %v618 = vsub.f32 %v614, %v579
    %v619 = vpack.c.bf16 %v617, %v616
    %v620 = vpack.c.bf16 %v618, %v618
    %v621 = vld [vmem:[#allocation7] sm:$0x7]
    %v622 = vpack.c.bf16 %v611, %v608
    %v623 = vpack.c.bf16 %v614, %v614
    %s624 = scalar_lea.vmem [#allocation7], 4
    %v625 = vld [vmem:[%s624] sm:$0x7]
    %v627 = vsel %vm489, %v622, 0
    %v630 = vsel %vm489, %v623, 0
    %v633 = vsel %vm493, %v625, 0
    %635 = vmatpush.bf16.msra.mxu0 0
    %636 = vmatpush.bf16.msra.mxu0 0
    %637 = vmatpush.bf16.msra.mxu0 0
    %638 = vmatpush.bf16.msra.mxu0 0
    %639 = vmatpush.bf16.msra.mxu0 0
    %640 = vmatpush.bf16.msra.mxu0 0
    %641 = vmatpush.bf16.msra.mxu0 0
    %642 = vmatpush.bf16.msra.mxu0 %v633
    %643 = vmatmul.bf16.gmra.mxu0 %v627
    %v644 = vpop.f32.mrf.mxu0
    %v645 = vadd.f32 0.0, %v644
    %v646 = vpop.f32.mrf.mxu0
    %v647 = vadd.f32 0.0, %v646
    %648 = vmatmul.bf16.gmra.mxu0 %v630
    %v649 = vpop.f32.mrf.mxu0
    %v650 = vadd.f32 0.0, %v649
    %v651 = vpop.f32.mrf.mxu0
    %652 = vdwg.mxu0
    %v654 = vsel %vm489, %v619, 0
    %v657 = vsel %vm489, %v620, 0
    %v660 = vsel %vm493, %v621, 0
    %662 = vmatpush.bf16.msra.mxu0 0
    %663 = vmatpush.bf16.msra.mxu0 0
    %664 = vmatpush.bf16.msra.mxu0 0
    %665 = vmatpush.bf16.msra.mxu0 0
    %666 = vmatpush.bf16.msra.mxu0 0
    %667 = vmatpush.bf16.msra.mxu0 0
    %668 = vmatpush.bf16.msra.mxu0 0
    %669 = vmatpush.bf16.msra.mxu0 %v660
    %670 = vmatmul.bf16.gmra.mxu0 %v654
    %v671 = vpop.f32.mrf.mxu0
    %v672 = vadd.f32 %v645, %v671
    %v673 = vpop.f32.mrf.mxu0
    %v674 = vadd.f32 %v647, %v673
    %675 = vmatmul.bf16.gmra.mxu0 %v657
    %v676 = vpop.f32.mrf.mxu0
    %v677 = vadd.f32 %v650, %v676
    %v678 = vpop.f32.mrf.mxu0
    %679 = vdwg.mxu0
    %v680 = vpack.c.bf16 %v576, %v573
    %v681 = vpack.c.bf16 %v579, %v579
    %s682 = scalar_lea.vmem [#allocation7], 8
    %v683 = vld [vmem:[%s682] sm:$0x7]
    %v685 = vsel %vm489, %v680, 0
    %v688 = vsel %vm489, %v681, 0
    %v691 = vsel %vm493, %v683, 0
    %693 = vmatpush.bf16.msra.mxu0 0
    %694 = vmatpush.bf16.msra.mxu0 0
    %695 = vmatpush.bf16.msra.mxu0 0
    %696 = vmatpush.bf16.msra.mxu0 0
    %697 = vmatpush.bf16.msra.mxu0 0
    %698 = vmatpush.bf16.msra.mxu0 0
    %699 = vmatpush.bf16.msra.mxu0 0
    %700 = vmatpush.bf16.msra.mxu0 %v691
    %701 = vmatmul.bf16.gmra.mxu0 %v685
    %v702 = vpop.f32.mrf.mxu0
    %v703 = vadd.f32 0.0, %v702
    %v704 = vpop.f32.mrf.mxu0
    %v705 = vadd.f32 0.0, %v704
    %706 = vmatmul.bf16.gmra.mxu0 %v688
    %v707 = vpop.f32.mrf.mxu0
    %v708 = vadd.f32 0.0, %v707
    %v709 = vpop.f32.mrf.mxu0
    %710 = vdwg.mxu0
    %v711 = vadd.f32 %v672, %v703
    %v712 = vadd.f32 %v674, %v705
    %v713 = vadd.f32 %v677, %v708
    %v714 = vld [vmem:[#allocation10] sm:$0x1]
    %v715 = vperm.slane %v714, 0
    %v716 = vadd.f32 %v711, %v715
    %v717 = vadd.f32 %v712, %v715
    %v718 = vadd.f32 %v713, %v715
    %v719 = vmax.f32 %v716, 0.0
    %v720 = vmax.f32 %v717, 0.0
    %v721 = vmax.f32 %v718, 0.0
    %v722 = vpack.c.bf16 %v720, %v719
    %v723 = vpack.c.bf16 %v721, %v721
    %v724 = vld [vmem:[#allocation9] sm:$0xf]
    %v725 = vld [vmem:[#allocation9 + $0x4] sm:$0xf]
    %v726 = vld [vmem:[#allocation9 + $0x8] sm:$0xf]
    %v727 = vld [vmem:[#allocation9 + $0xc] sm:$0xf]
    %v728 = vld [vmem:[#allocation10 + $0x1] sm:$0x1]
    %v729 = vperm.slane %v728, 0
    %v734 = vunpack.c.l.b16 %v724
    %v735 = vunpack.c.l.b16 %v725
    %v736 = vunpack.c.l.b16 %v726
    %v737 = vunpack.c.l.b16 %v727
    %v738 = vpack.c.b16 %v735, %v734
    %v739 = vpack.c.b16 %v737, %v736
    %v743 = vsel %vm527, %v722, 0
    %v746 = vsel %vm527, %v723, 0
    %748 = vmatpush.bf16.msra.mxu0 0
    %749 = vmatpush.bf16.msra.mxu0 0
    %750 = vmatpush.bf16.msra.mxu0 0
    %751 = vmatpush.bf16.msra.mxu0 0
    %752 = vmatpush.bf16.msra.mxu0 0
    %753 = vmatpush.bf16.msra.mxu0 0
    %754 = vmatpush.bf16.msra.mxu0 %v739
    %755 = vmatpush.bf16.msra.mxu0 %v738
    %756 = vmatmul.bf16.gmra.mxu0 %v743
    %v757 = vpop.f32.mrf.mxu0
    %v758 = vadd.f32 %v729, %v757
    %v759 = vpop.f32.mrf.mxu0
    %v760 = vadd.f32 %v729, %v759
    %761 = vmatmul.bf16.gmra.mxu0 %v746
    %v762 = vpop.f32.mrf.mxu0
    %v763 = vadd.f32 %v729, %v762
    %v764 = vpop.f32.mrf.mxu0
    %765 = vdwg.mxu0
    %v766 = vld [vmem:[%s5] sm:$0xff]
    %v767 = vld [vmem:[#allocation12] sm:$0xf]
    %v768 = vld [vmem:[#allocation12 + $0x4] sm:$0x1]
    %v769 = vld [vmem:[#allocation15] sm:$0x1]
    %v770 = vld [vmem:[#allocation13] sm:$0xf]
    %v771 = vld [vmem:[#allocation13 + $0x4] sm:$0xf]
    %v772 = vld [vmem:[#allocation13 + $0x8] sm:$0xf]
    %v773 = vld [vmem:[#allocation13 + $0xc] sm:$0xf]
    %v774 = vld [vmem:[#allocation15 + $0x1] sm:$0x1]
    %v775 = vpack.c.bf16 %v766, %v766
    %v776 = vperm.slane %v769, 0
    %v779 = vunpack.c.l.b16 %v767
    %v780 = vunpack.c.l.b16 %v768
    %v781 = vpack.c.b16 %v780, %v779
    %vm782 = vcmask 72704
    %v784 = vsel %vm782, %v775, 0
    %vm786 = vcmask 1043456
    %vm787 = vcmask 1044480
    %v788 = vsel %vm786, 4294967295, 65535
    %v789 = vsel %vm787, %v788, 0
    %v791 = vand.u32 %v781, %v789
    %793 = vmatpush.bf16.msra.mxu0 0
    %794 = vmatpush.bf16.msra.mxu0 0
    %795 = vmatpush.bf16.msra.mxu0 0
    %796 = vmatpush.bf16.msra.mxu0 0
    %797 = vmatpush.bf16.msra.mxu0 0
    %798 = vmatpush.bf16.msra.mxu0 0
    %799 = vmatpush.bf16.msra.mxu0 0
    %800 = vmatpush.bf16.msra.mxu0 %v791
    %801 = vmatmul.bf16.gmra.mxu0 %v784
    %v802 = vpop.f32.mrf.mxu0
    %v803 = vadd.f32 %v776, %v802
    %v804 = vpop.f32.mrf.mxu0
    %805 = vdwg.mxu0
    %v806 = vmax.f32 %v803, 0.0
    %v807 = vpack.c.bf16 %v806, %v806
    %v808 = vperm.slane %v774, 0
    %v813 = vunpack.c.l.b16 %v770
    %v814 = vunpack.c.l.b16 %v771
    %v815 = vunpack.c.l.b16 %v772
    %v816 = vunpack.c.l.b16 %v773
    %v817 = vpack.c.b16 %v814, %v813
    %v818 = vpack.c.b16 %v816, %v815
    %v822 = vsel %vm527, %v807, 0
    %824 = vmatpush.bf16.msra.mxu0 0
    %825 = vmatpush.bf16.msra.mxu0 0
    %826 = vmatpush.bf16.msra.mxu0 0
    %827 = vmatpush.bf16.msra.mxu0 0
    %828 = vmatpush.bf16.msra.mxu0 0
    %829 = vmatpush.bf16.msra.mxu0 0
    %830 = vmatpush.bf16.msra.mxu0 %v818
    %831 = vmatpush.bf16.msra.mxu0 %v817
    %832 = vmatmul.bf16.gmra.mxu0 %v822
    %v833 = vpop.f32.mrf.mxu0
    %v834 = vadd.f32 %v808, %v833
    %v835 = vpop.f32.mrf.mxu0
    %836 = vdwg.mxu0
    %v837 = vpack.c.bf16 %v834, %v834
    %v838 = vld [vmem:[#allocation16] sm:$0xf]
    %v839 = vld [vmem:[#allocation16 + $0x4] sm:$0x1]
    %v840 = vld [vmem:[#allocation18] sm:$0x1]
    %v841 = vld [vmem:[%s27] sm:$0xf]
    %v842 = vld [vmem:[%s27 + $0x4] sm:$0xf]
    %v843 = vld [vmem:[%s27 + $0x8] sm:$0xf]
    %v844 = vld [vmem:[%s27 + $0xc] sm:$0xf]
    %v845 = vld [vmem:[#allocation18 + $0x1] sm:$0x1]
    %v846 = vperm.slane %v840, 0
    %v849 = vunpack.c.l.b16 %v838
    %v850 = vunpack.c.l.b16 %v839
    %v851 = vpack.c.b16 %v850, %v849
    %v853 = vand.u32 %v851, %v789
    %855 = vmatpush.bf16.msra.mxu0 0
    %856 = vmatpush.bf16.msra.mxu0 0
    %857 = vmatpush.bf16.msra.mxu0 0
    %858 = vmatpush.bf16.msra.mxu0 0
    %859 = vmatpush.bf16.msra.mxu0 0
    %860 = vmatpush.bf16.msra.mxu0 0
    %861 = vmatpush.bf16.msra.mxu0 0
    %862 = vmatpush.bf16.msra.mxu0 %v853
    %863 = vmatmul.bf16.gmra.mxu0 %v784
    %v864 = vpop.f32.mrf.mxu0
    %v865 = vadd.f32 %v846, %v864
    %v866 = vpop.f32.mrf.mxu0
    %867 = vdwg.mxu0
    %v868 = vmax.f32 %v865, 0.0
    %v869 = vpack.c.bf16 %v868, %v868
    %v870 = vperm.slane %v845, 0
    %v875 = vunpack.c.l.b16 %v841
    %v876 = vunpack.c.l.b16 %v842
    %v877 = vunpack.c.l.b16 %v843
    %v878 = vunpack.c.l.b16 %v844
    %v879 = vpack.c.b16 %v876, %v875
    %v880 = vpack.c.b16 %v878, %v877
    %v884 = vsel %vm527, %v869, 0
    %886 = vmatpush.bf16.msra.mxu0 0
    %887 = vmatpush.bf16.msra.mxu0 0
    %888 = vmatpush.bf16.msra.mxu0 0
    %889 = vmatpush.bf16.msra.mxu0 0
    %890 = vmatpush.bf16.msra.mxu0 0
    %891 = vmatpush.bf16.msra.mxu0 0
    %892 = vmatpush.bf16.msra.mxu0 %v880
    %893 = vmatpush.bf16.msra.mxu0 %v879
    %894 = vmatmul.bf16.gmra.mxu0 %v884
    %v895 = vpop.f32.mrf.mxu0
    %v896 = vadd.f32 %v870, %v895
    %v897 = vpop.f32.mrf.mxu0
    %898 = vdwg.mxu0
    %v899 = vpack.c.bf16 %v896, %v896
    %v900 = vld [vmem:[#allocation19] sm:$0xf]
    %v901 = vld [vmem:[#allocation19 + $0x4] sm:$0xf]
    %v902 = vld [vmem:[#allocation19 + $0x8] sm:$0xf]
    %v903 = vld [vmem:[#allocation19 + $0xc] sm:$0xf]
    %s904 = scalar_lea.vmem [#allocation19], 16
    %v905 = vld [vmem:[%s904] sm:$0xf]
    %v906 = vld [vmem:[%s904 + $0x4] sm:$0xf]
    %v907 = vld [vmem:[%s904 + $0x8] sm:$0xf]
    %v908 = vld [vmem:[%s904 + $0xc] sm:$0xf]
    %s909 = scalar_lea.vmem [#allocation19], 32
    %v910 = vld [vmem:[%s909] sm:$0xf]
    %v911 = vld [vmem:[%s909 + $0x4] sm:$0xf]
    %v912 = vld [vmem:[%s909 + $0x8] sm:$0xf]
    %v913 = vld [vmem:[%s909 + $0xc] sm:$0xf]
    %v914 = vld [vmem:[#allocation22] sm:$0x1]
    %v915 = vld [vmem:[#allocation22 + $0x1] sm:$0x1]
    %v916 = vld [vmem:[#allocation21] sm:$0xf]
    %v917 = vld [vmem:[#allocation21 + $0x4] sm:$0xf]
    %v918 = vld [vmem:[#allocation21 + $0x8] sm:$0xf]
    %v919 = vld [vmem:[#allocation21 + $0xc] sm:$0xf]
    %v920 = vld [vmem:[#allocation22 + $0x2] sm:$0x1]
    %s921 = scalar_lea.vmem [#allocation21], 16
    %v922 = vld [vmem:[%s921] sm:$0xf]
    %v923 = vld [vmem:[%s921 + $0x4] sm:$0xf]
    %v924 = vld [vmem:[%s921 + $0x8] sm:$0xf]
    %v925 = vld [vmem:[%s921 + $0xc] sm:$0xf]
    %v926 = vld [vmem:[#allocation22 + $0x3] sm:$0x1]
    %v927 = vld [vmem:[#allocation22 + $0x4] sm:$0x1]
    %v928 = vld [vmem:[#allocation22 + $0x5] sm:$0x1]
    %v929 = vpack.c.bf16 %v543, %v541
    %v934 = vunpack.c.l.b16 %v900
    %v935 = vunpack.c.l.b16 %v901
    %v936 = vunpack.c.l.b16 %v902
    %v937 = vunpack.c.l.b16 %v903
    %v938 = vpack.c.b16 %v935, %v934
    %v939 = vpack.c.b16 %v937, %v936
    %v943 = vsel %vm527, %v929, 0
    %945 = vmatpush.bf16.msra.mxu0 0
    %946 = vmatpush.bf16.msra.mxu0 0
    %947 = vmatpush.bf16.msra.mxu0 0
    %948 = vmatpush.bf16.msra.mxu0 0
    %949 = vmatpush.bf16.msra.mxu0 0
    %950 = vmatpush.bf16.msra.mxu0 0
    %951 = vmatpush.bf16.msra.mxu0 %v939
    %952 = vmatpush.bf16.msra.mxu0 %v938
    %953 = vmatmul.bf16.gmra.mxu0 %v943
    %v954 = vpop.f32.mrf.mxu0
    %v955 = vadd.f32 0.0, %v954
    %v956 = vpop.f32.mrf.mxu0
    %v957 = vadd.f32 0.0, %v956
    %958 = vdwg.mxu0
    %v963 = vunpack.c.l.b16 %v905
    %v964 = vunpack.c.l.b16 %v906
    %v965 = vunpack.c.l.b16 %v907
    %v966 = vunpack.c.l.b16 %v908
    %v967 = vpack.c.b16 %v964, %v963
    %v968 = vpack.c.b16 %v966, %v965
    %971 = vmatpush.bf16.msra.mxu0 0
    %972 = vmatpush.bf16.msra.mxu0 0
    %973 = vmatpush.bf16.msra.mxu0 0
    %974 = vmatpush.bf16.msra.mxu0 0
    %975 = vmatpush.bf16.msra.mxu0 0
    %976 = vmatpush.bf16.msra.mxu0 0
    %977 = vmatpush.bf16.msra.mxu0 %v968
    %978 = vmatpush.bf16.msra.mxu0 %v967
    %979 = vmatmul.bf16.gmra.mxu0 %v943
    %v980 = vpop.f32.mrf.mxu0
    %v981 = vadd.f32 0.0, %v980
    %v982 = vpop.f32.mrf.mxu0
    %v983 = vadd.f32 0.0, %v982
    %984 = vdwg.mxu0
    %v989 = vunpack.c.l.b16 %v910
    %v990 = vunpack.c.l.b16 %v911
    %v991 = vunpack.c.l.b16 %v912
    %v992 = vunpack.c.l.b16 %v913
    %v993 = vpack.c.b16 %v990, %v989
    %v994 = vpack.c.b16 %v992, %v991
    %997 = vmatpush.bf16.msra.mxu0 0
    %998 = vmatpush.bf16.msra.mxu0 0
    %999 = vmatpush.bf16.msra.mxu0 0
    %1000 = vmatpush.bf16.msra.mxu0 0
    %1001 = vmatpush.bf16.msra.mxu0 0
    %1002 = vmatpush.bf16.msra.mxu0 0
    %1003 = vmatpush.bf16.msra.mxu0 %v994
    %1004 = vmatpush.bf16.msra.mxu0 %v993
    %1005 = vmatmul.bf16.gmra.mxu0 %v943
    %v1006 = vpop.f32.mrf.mxu0
    %v1007 = vadd.f32 0.0, %v1006
    %v1008 = vpop.f32.mrf.mxu0
    %v1009 = vadd.f32 0.0, %v1008
    %1010 = vdwg.mxu0
    %v1012 = vsel %vm527, %v837, 0
    %1014 = vmatpush.bf16.msra.mxu0 0
    %1015 = vmatpush.bf16.msra.mxu0 0
    %1016 = vmatpush.bf16.msra.mxu0 0
    %1017 = vmatpush.bf16.msra.mxu0 0
    %1018 = vmatpush.bf16.msra.mxu0 0
    %1019 = vmatpush.bf16.msra.mxu0 0
    %1020 = vmatpush.bf16.msra.mxu0 %v968
    %1021 = vmatpush.bf16.msra.mxu0 %v967
    %1022 = vmatmul.bf16.gmra.mxu0 %v1012
    %v1023 = vpop.f32.mrf.mxu0
    %v1024 = vadd.f32 0.0, %v1023
    %v1025 = vpop.f32.mrf.mxu0
    %1026 = vdwg.mxu0
    %1027 = vmatpush.bf16.msra.mxu0 0
    %1028 = vmatpush.bf16.msra.mxu0 0
    %1029 = vmatpush.bf16.msra.mxu0 0
    %1030 = vmatpush.bf16.msra.mxu0 0
    %1031 = vmatpush.bf16.msra.mxu0 0
    %1032 = vmatpush.bf16.msra.mxu0 0
    %1033 = vmatpush.bf16.msra.mxu0 %v994
    %1034 = vmatpush.bf16.msra.mxu0 %v993
    %1035 = vmatmul.bf16.gmra.mxu0 %v1012
    %v1036 = vpop.f32.mrf.mxu0
    %v1037 = vadd.f32 0.0, %v1036
    %v1038 = vpop.f32.mrf.mxu0
    %1039 = vdwg.mxu0
    %v1040 = vmul.f32 %v955, %v981
    %v1041 = vmul.f32 %v957, %v983
    %v1042 = vsel %vm527, %v1040, 0.0
    %1043 = vadd.xlane.f32.xlu0 %v1042
    %v1044 = vpop.xlane.xlu0 %1043
    %v1045 = vsel %vm527, %v1041, 0.0
    %1046 = vadd.xlane.f32.xlu0 %v1045
    %v1047 = vpop.xlane.xlu0 %1046
    %v1048 = vmul.f32 %v1044, 0.17677669
    %v1049 = vmul.f32 %v1047, 0.17677669
    %v1050 = vpack.c.bf16 %v957, %v955
    %v1051 = vpack.c.bf16 %v1024, %v1024
    %v1053 = vsel %vm527, %v1050, 0
    %v1056 = vsel %vm527, %v1051, 0
    %1058 = vmatpush.bf16.xpose.msra.mxu0 0
    %1059 = vmatpush.bf16.xpose.msra.mxu0 0
    %1060 = vmatpush.bf16.xpose.msra.mxu0 0
    %1061 = vmatpush.bf16.xpose.msra.mxu0 0
    %1062 = vmatpush.bf16.xpose.msra.mxu0 0
    %1063 = vmatpush.bf16.xpose.msra.mxu0 0
    %1064 = vmatpush.bf16.xpose.msra.mxu0 0
    %1065 = vmatpush.bf16.xpose.msra.mxu0 %v1056
    %1066 = vmatmul.bf16.gmra.mxu0 %v1053
    %v1067 = vpop.f32.mrf.mxu0
    %v1068 = vadd.f32 0.0, %v1067
    %v1069 = vpop.f32.mrf.mxu0
    %v1070 = vadd.f32 0.0, %v1069
    %1071 = vdwg.mxu0
    %v1072 = vmul.f32 %v1068, 0.17677669
    %v1073 = vmul.f32 %v1070, 0.17677669
    %vm1074 = vcmp.lt.s32.totalorder %v449, 5
    %v1075 = vsel %vm1074, %v1072, -1e+30
    %v1076 = vsel %vm1074, %v1073, -1e+30
    %vm1077 = vcmask 64512
    %v1078 = vsel %vm1077, %v1075, -inf
    %1079 = vmax.xlane.f32.xlu0 %v1078
    %v1080 = vpop.xlane.xlu0 %1079
    %v1081 = vsel %vm1077, %v1076, -inf
    %1082 = vmax.xlane.f32.xlu0 %v1081
    %v1083 = vpop.xlane.xlu0 %1082
    %v1084 = vmax.f32 %v1048, %v1080
    %v1085 = vmax.f32 %v1049, %v1083
    %v1086 = vsub.f32 %v1048, %v1084
    %v1087 = vsub.f32 %v1049, %v1085
    %v1088 = vmul.f32 %v1086, 1.442695
    %v1089 = vpow.pop %v1088
    %v1090 = vmul.f32 %v1087, 1.442695
    %v1091 = vpow.pop %v1090
    %v1092 = vsub.f32 %v1075, %v1084
    %v1093 = vsub.f32 %v1076, %v1085
    %v1094 = vmul.f32 %v1092, 1.442695
    %v1095 = vpow.pop %v1094
    %v1096 = vmul.f32 %v1093, 1.442695
    %v1097 = vpow.pop %v1096
    %v1098 = vsel %vm1077, %v1095, 0.0
    %1099 = vadd.xlane.f32.xlu0 %v1098
    %v1100 = vpop.xlane.xlu0 %1099
    %v1101 = vsel %vm1077, %v1097, 0.0
    %1102 = vadd.xlane.f32.xlu0 %v1101
    %v1103 = vpop.xlane.xlu0 %1102
    %v1104 = vadd.f32 %v1089, %v1100
    %v1105 = vadd.f32 %v1091, %v1103
    %v1106 = vmul.f32 %v1089, %v1007
    %v1107 = vmul.f32 %v1091, %v1009
    %v1108 = vpack.c.bf16 %v1097, %v1095
    %v1109 = vpack.c.bf16 %v1037, %v1037
    %v1111 = vsel %vm1077, %v1108, 0
    %v1114 = vsel %vm786, %v1109, 0
    %1116 = vmatpush.bf16.msra.mxu0 0
    %1117 = vmatpush.bf16.msra.mxu0 0
    %1118 = vmatpush.bf16.msra.mxu0 0
    %1119 = vmatpush.bf16.msra.mxu0 0
    %1120 = vmatpush.bf16.msra.mxu0 0
    %1121 = vmatpush.bf16.msra.mxu0 0
    %1122 = vmatpush.bf16.msra.mxu0 0
    %1123 = vmatpush.bf16.msra.mxu0 %v1114
    %1124 = vmatmul.bf16.gmra.mxu0 %v1111
    %v1125 = vpop.f32.mrf.mxu0
    %v1126 = vadd.f32 0.0, %v1125
    %v1127 = vpop.f32.mrf.mxu0
    %v1128 = vadd.f32 0.0, %v1127
    %1129 = vdwg.mxu0
    %v1130 = vadd.f32 %v1106, %v1126
    %v1131 = vadd.f32 %v1107, %v1128
    %v1132 = vrcp.pop %v1104
    %v1133 = vrcp.pop %v1105
    %v1134 = vmul.f32 %v1130, %v1132
    %v1135 = vmul.f32 %v1131, %v1133
    %v1136 = vadd.f32 %v1134, %v541
    %v1137 = vadd.f32 %v1135, %v543
    %v1138 = vsel %vm527, %v1136, 0.0
    %1139 = vadd.xlane.f32.xlu0 %v1138
    %v1140 = vpop.xlane.xlu0 %1139
    %v1141 = vsel %vm527, %v1137, 0.0
    %1142 = vadd.xlane.f32.xlu0 %v1141
    %v1143 = vpop.xlane.xlu0 %1142
    %v1144 = vrcp.pop 32.0
    %v1145 = vmul.f32 32.0, %v1144
    %v1146 = vsub.f32 1.0, %v1145
    %v1147 = vmul.f32 %v1144, %v1146
    %v1148 = vadd.f32 %v1144, %v1147
    %vm1149 = vweird.f32 %v1144
    %v1150 = vsel %vm1149, %v1144, %v1148
    %v1151 = vmul.f32 %v1140, %v1150
    %v1152 = vmul.f32 %v1143, %v1150
    %v1153 = vsub.f32 %v1136, %v1151
    %v1154 = vsub.f32 %v1137, %v1152
    %v1155 = vmul.f32 %v1153, %v1153
    %v1156 = vmul.f32 %v1154, %v1154
    %v1157 = vsel %vm527, %v1155, 0.0
    %1158 = vadd.xlane.f32.xlu0 %v1157
    %v1159 = vpop.xlane.xlu0 %1158
    %v1160 = vsel %vm527, %v1156, 0.0
    %1161 = vadd.xlane.f32.xlu0 %v1160
    %v1162 = vpop.xlane.xlu0 %1161
    %v1163 = vmul.f32 %v1159, %v1150
    %v1164 = vmul.f32 %v1162, %v1150
    %v1165 = vadd.f32 %v1163, 1e-06
    %v1166 = vadd.f32 %v1164, 1e-06
    %v1167 = vrsqrt.pop %v1165
    %v1168 = vmul.f32 %v1167, %v1165
    %v1169 = vmul.f32 %v1168, %v1167
    %v1170 = vmul.f32 0.5, %v1169
    %v1171 = vsub.f32 1.5, %v1170
    %v1172 = vmul.f32 %v1167, %v1171
    %vm1173 = vweird.f32 %v1165
    %vm1174 = vweird.f32 %v1167
    %vm1175 = vmor %vm1173, %vm1174
    %v1176 = vsel %vm1175, %v1167, %v1172
    %v1177 = vrsqrt.pop %v1166
    %v1178 = vmul.f32 %v1177, %v1166
    %v1179 = vmul.f32 %v1178, %v1177
    %v1180 = vmul.f32 0.5, %v1179
    %v1181 = vsub.f32 1.5, %v1180
    %v1182 = vmul.f32 %v1177, %v1181
    %vm1183 = vweird.f32 %v1166
    %vm1184 = vweird.f32 %v1177
    %vm1185 = vmor %vm1183, %vm1184
    %v1186 = vsel %vm1185, %v1177, %v1182
    %v1187 = vmul.f32 %v1153, %v1176
    %v1188 = vmul.f32 %v1154, %v1186
    %v1189 = vperm.slane %v914, 0
    %v1190 = vmul.f32 %v1187, %v1189
    %v1191 = vmul.f32 %v1188, %v1189
    %v1192 = vperm.slane %v915, 0
    %v1193 = vadd.f32 %v1190, %v1192
    %v1194 = vadd.f32 %v1191, %v1192
    %v1195 = vpack.c.bf16 %v1194, %v1193
    %v1196 = vperm.slane %v920, 0
    %v1201 = vunpack.c.l.b16 %v916
    %v1202 = vunpack.c.l.b16 %v917
    %v1203 = vunpack.c.l.b16 %v918
    %v1204 = vunpack.c.l.b16 %v919
    %v1205 = vpack.c.b16 %v1202, %v1201
    %v1206 = vpack.c.b16 %v1204, %v1203
    %v1210 = vsel %vm527, %v1195, 0
    %1212 = vmatpush.bf16.msra.mxu0 0
    %1213 = vmatpush.bf16.msra.mxu0 0
    %1214 = vmatpush.bf16.msra.mxu0 0
    %1215 = vmatpush.bf16.msra.mxu0 0
    %1216 = vmatpush.bf16.msra.mxu0 0
    %1217 = vmatpush.bf16.msra.mxu0 0
    %1218 = vmatpush.bf16.msra.mxu0 %v1206
    %1219 = vmatpush.bf16.msra.mxu0 %v1205
    %1220 = vmatmul.bf16.gmra.mxu0 %v1210
    %v1221 = vpop.f32.mrf.mxu0
    %v1222 = vadd.f32 %v1196, %v1221
    %v1223 = vpop.f32.mrf.mxu0
    %v1224 = vadd.f32 %v1196, %v1223
    %1225 = vdwg.mxu0
    %v1226 = vmax.f32 %v1222, 0.0
    %v1227 = vmax.f32 %v1224, 0.0
    %v1228 = vpack.c.bf16 %v1227, %v1226
    %v1229 = vperm.slane %v926, 0
    %v1234 = vunpack.c.l.b16 %v922
    %v1235 = vunpack.c.l.b16 %v923
    %v1236 = vunpack.c.l.b16 %v924
    %v1237 = vunpack.c.l.b16 %v925
    %v1238 = vpack.c.b16 %v1235, %v1234
    %v1239 = vpack.c.b16 %v1237, %v1236
    %v1243 = vsel %vm527, %v1228, 0
    %1245 = vmatpush.bf16.msra.mxu0 0
    %1246 = vmatpush.bf16.msra.mxu0 0
    %1247 = vmatpush.bf16.msra.mxu0 0
    %1248 = vmatpush.bf16.msra.mxu0 0
    %1249 = vmatpush.bf16.msra.mxu0 0
    %1250 = vmatpush.bf16.msra.mxu0 0
    %1251 = vmatpush.bf16.msra.mxu0 %v1239
    %1252 = vmatpush.bf16.msra.mxu0 %v1238
    %1253 = vmatmul.bf16.gmra.mxu0 %v1243
    %v1254 = vpop.f32.mrf.mxu0
    %v1255 = vadd.f32 %v1229, %v1254
    %v1256 = vpop.f32.mrf.mxu0
    %v1257 = vadd.f32 %v1229, %v1256
    %1258 = vdwg.mxu0
    %v1259 = vadd.f32 %v1255, %v1193
    %v1260 = vadd.f32 %v1257, %v1194
    %v1261 = vsel %vm527, %v1259, 0.0
    %1262 = vadd.xlane.f32.xlu0 %v1261
    %v1263 = vpop.xlane.xlu0 %1262
    %v1264 = vsel %vm527, %v1260, 0.0
    %1265 = vadd.xlane.f32.xlu0 %v1264
    %v1266 = vpop.xlane.xlu0 %1265
    %v1267 = vmul.f32 %v1263, %v1150
    %v1268 = vmul.f32 %v1266, %v1150
    %v1269 = vsub.f32 %v1259, %v1267
    %v1270 = vsub.f32 %v1260, %v1268
    %v1271 = vmul.f32 %v1269, %v1269
    %v1272 = vmul.f32 %v1270, %v1270
    %v1273 = vsel %vm527, %v1271, 0.0
    %1274 = vadd.xlane.f32.xlu0 %v1273
    %v1275 = vpop.xlane.xlu0 %1274
    %v1276 = vsel %vm527, %v1272, 0.0
    %1277 = vadd.xlane.f32.xlu0 %v1276
    %v1278 = vpop.xlane.xlu0 %1277
    %v1279 = vmul.f32 %v1275, %v1150
    %v1280 = vmul.f32 %v1278, %v1150
    %v1281 = vadd.f32 %v1279, 1e-06
    %v1282 = vadd.f32 %v1280, 1e-06
    %v1283 = vrsqrt.pop %v1281
    %v1284 = vmul.f32 %v1283, %v1281
    %v1285 = vmul.f32 %v1284, %v1283
    %v1286 = vmul.f32 0.5, %v1285
    %v1287 = vsub.f32 1.5, %v1286
    %v1288 = vmul.f32 %v1283, %v1287
    %vm1289 = vweird.f32 %v1281
    %vm1290 = vweird.f32 %v1283
    %vm1291 = vmor %vm1289, %vm1290
    %v1292 = vsel %vm1291, %v1283, %v1288
    %v1293 = vrsqrt.pop %v1282
    %v1294 = vmul.f32 %v1293, %v1282
    %v1295 = vmul.f32 %v1294, %v1293
    %v1296 = vmul.f32 0.5, %v1295
    %v1297 = vsub.f32 1.5, %v1296
    %v1298 = vmul.f32 %v1293, %v1297
    %vm1299 = vweird.f32 %v1282
    %vm1300 = vweird.f32 %v1293
    %vm1301 = vmor %vm1299, %vm1300
    %v1302 = vsel %vm1301, %v1293, %v1298
    %v1303 = vmul.f32 %v1269, %v1292
    %v1304 = vmul.f32 %v1270, %v1302
    %v1305 = vperm.slane %v927, 0
    %v1306 = vmul.f32 %v1303, %v1305
    %v1307 = vmul.f32 %v1304, %v1305
    %v1308 = vperm.slane %v928, 0
    %v1309 = vadd.f32 %v1306, %v1308
    %v1310 = vadd.f32 %v1307, %v1308
    %v1311 = vld [vmem:[#allocation24] sm:$0xf]
    %v1312 = vld [vmem:[#allocation24 + $0x4] sm:$0xf]
    %v1313 = vld [vmem:[#allocation24 + $0x8] sm:$0xf]
    %v1314 = vld [vmem:[#allocation24 + $0xc] sm:$0xf]
    %s1315 = scalar_lea.vmem [#allocation24], 16
    %v1316 = vld [vmem:[%s1315] sm:$0xf]
    %v1317 = vld [vmem:[%s1315 + $0x4] sm:$0xf]
    %v1318 = vld [vmem:[%s1315 + $0x8] sm:$0xf]
    %v1319 = vld [vmem:[%s1315 + $0xc] sm:$0xf]
    %s1320 = scalar_lea.vmem [#allocation24], 32
    %v1321 = vld [vmem:[%s1320] sm:$0xf]
    %v1322 = vld [vmem:[%s1320 + $0x4] sm:$0xf]
    %v1323 = vld [vmem:[%s1320 + $0x8] sm:$0xf]
    %v1324 = vld [vmem:[%s1320 + $0xc] sm:$0xf]
    %v1325 = vld [vmem:[#allocation27] sm:$0x1]
    %v1326 = vld [vmem:[#allocation27 + $0x1] sm:$0x1]
    %v1327 = vld [vmem:[#allocation25] sm:$0xf]
    %v1328 = vld [vmem:[#allocation25 + $0x4] sm:$0xf]
    %v1329 = vld [vmem:[#allocation25 + $0x8] sm:$0xf]
    %v1330 = vld [vmem:[#allocation25 + $0xc] sm:$0xf]
    %v1331 = vld [vmem:[#allocation27 + $0x2] sm:$0x1]
    %s1332 = scalar_lea.vmem [#allocation25], 16
    %v1333 = vld [vmem:[%s1332] sm:$0xf]
    %v1334 = vld [vmem:[%s1332 + $0x4] sm:$0xf]
    %v1335 = vld [vmem:[%s1332 + $0x8] sm:$0xf]
    %v1336 = vld [vmem:[%s1332 + $0xc] sm:$0xf]
    %v1337 = vld [vmem:[#allocation27 + $0x3] sm:$0x1]
    %v1338 = vld [vmem:[#allocation27 + $0x4] sm:$0x1]
    %v1339 = vld [vmem:[#allocation27 + $0x5] sm:$0x1]
    %v1340 = vpack.c.bf16 %v760, %v758
    %v1341 = vpack.c.bf16 %v763, %v763
    %v1346 = vunpack.c.l.b16 %v1311
    %v1347 = vunpack.c.l.b16 %v1312
    %v1348 = vunpack.c.l.b16 %v1313
    %v1349 = vunpack.c.l.b16 %v1314
    %v1350 = vpack.c.b16 %v1347, %v1346
    %v1351 = vpack.c.b16 %v1349, %v1348
    %v1355 = vsel %vm527, %v1340, 0
    %v1358 = vsel %vm527, %v1341, 0
    %1360 = vmatpush.bf16.msra.mxu0 0
    %1361 = vmatpush.bf16.msra.mxu0 0
    %1362 = vmatpush.bf16.msra.mxu0 0
    %1363 = vmatpush.bf16.msra.mxu0 0
    %1364 = vmatpush.bf16.msra.mxu0 0
    %1365 = vmatpush.bf16.msra.mxu0 0
    %1366 = vmatpush.bf16.msra.mxu0 %v1351
    %1367 = vmatpush.bf16.msra.mxu0 %v1350
    %1368 = vmatmul.bf16.gmra.mxu0 %v1355
    %v1369 = vpop.f32.mrf.mxu0
    %v1370 = vadd.f32 0.0, %v1369
    %v1371 = vpop.f32.mrf.mxu0
    %v1372 = vadd.f32 0.0, %v1371
    %1373 = vmatmul.bf16.gmra.mxu0 %v1358
    %v1374 = vpop.f32.mrf.mxu0
    %v1375 = vadd.f32 0.0, %v1374
    %v1376 = vpop.f32.mrf.mxu0
    %1377 = vdwg.mxu0
    %v1382 = vunpack.c.l.b16 %v1316
    %v1383 = vunpack.c.l.b16 %v1317
    %v1384 = vunpack.c.l.b16 %v1318
    %v1385 = vunpack.c.l.b16 %v1319
    %v1386 = vpack.c.b16 %v1383, %v1382
    %v1387 = vpack.c.b16 %v1385, %v1384
    %1390 = vmatpush.bf16.msra.mxu0 0
    %1391 = vmatpush.bf16.msra.mxu0 0
    %1392 = vmatpush.bf16.msra.mxu0 0
    %1393 = vmatpush.bf16.msra.mxu0 0
    %1394 = vmatpush.bf16.msra.mxu0 0
    %1395 = vmatpush.bf16.msra.mxu0 0
    %1396 = vmatpush.bf16.msra.mxu0 %v1387
    %1397 = vmatpush.bf16.msra.mxu0 %v1386
    %1398 = vmatmul.bf16.gmra.mxu0 %v1355
    %v1399 = vpop.f32.mrf.mxu0
    %v1400 = vadd.f32 0.0, %v1399
    %v1401 = vpop.f32.mrf.mxu0
    %v1402 = vadd.f32 0.0, %v1401
    %1403 = vmatmul.bf16.gmra.mxu0 %v1358
    %v1404 = vpop.f32.mrf.mxu0
    %v1405 = vadd.f32 0.0, %v1404
    %v1406 = vpop.f32.mrf.mxu0
    %1407 = vdwg.mxu0
    %v1412 = vunpack.c.l.b16 %v1321
    %v1413 = vunpack.c.l.b16 %v1322
    %v1414 = vunpack.c.l.b16 %v1323
    %v1415 = vunpack.c.l.b16 %v1324
    %v1416 = vpack.c.b16 %v1413, %v1412
    %v1417 = vpack.c.b16 %v1415, %v1414
    %1420 = vmatpush.bf16.msra.mxu0 0
    %1421 = vmatpush.bf16.msra.mxu0 0
    %1422 = vmatpush.bf16.msra.mxu0 0
    %1423 = vmatpush.bf16.msra.mxu0 0
    %1424 = vmatpush.bf16.msra.mxu0 0
    %1425 = vmatpush.bf16.msra.mxu0 0
    %1426 = vmatpush.bf16.msra.mxu0 %v1417
    %1427 = vmatpush.bf16.msra.mxu0 %v1416
    %1428 = vmatmul.bf16.gmra.mxu0 %v1355
    %v1429 = vpop.f32.mrf.mxu0
    %v1430 = vadd.f32 0.0, %v1429
    %v1431 = vpop.f32.mrf.mxu0
    %v1432 = vadd.f32 0.0, %v1431
    %1433 = vmatmul.bf16.gmra.mxu0 %v1358
    %v1434 = vpop.f32.mrf.mxu0
    %v1435 = vadd.f32 0.0, %v1434
    %v1436 = vpop.f32.mrf.mxu0
    %1437 = vdwg.mxu0
    %v1439 = vsel %vm527, %v899, 0
    %1441 = vmatpush.bf16.msra.mxu0 0
    %1442 = vmatpush.bf16.msra.mxu0 0
    %1443 = vmatpush.bf16.msra.mxu0 0
    %1444 = vmatpush.bf16.msra.mxu0 0
    %1445 = vmatpush.bf16.msra.mxu0 0
    %1446 = vmatpush.bf16.msra.mxu0 0
    %1447 = vmatpush.bf16.msra.mxu0 %v1387
    %1448 = vmatpush.bf16.msra.mxu0 %v1386
    %1449 = vmatmul.bf16.gmra.mxu0 %v1439
    %v1450 = vpop.f32.mrf.mxu0
    %v1451 = vadd.f32 0.0, %v1450
    %v1452 = vpop.f32.mrf.mxu0
    %1453 = vdwg.mxu0
    %1454 = vmatpush.bf16.msra.mxu0 0
    %1455 = vmatpush.bf16.msra.mxu0 0
    %1456 = vmatpush.bf16.msra.mxu0 0
    %1457 = vmatpush.bf16.msra.mxu0 0
    %1458 = vmatpush.bf16.msra.mxu0 0
    %1459 = vmatpush.bf16.msra.mxu0 0
    %1460 = vmatpush.bf16.msra.mxu0 %v1417
    %1461 = vmatpush.bf16.msra.mxu0 %v1416
    %1462 = vmatmul.bf16.gmra.mxu0 %v1439
    %v1463 = vpop.f32.mrf.mxu0
    %v1464 = vadd.f32 0.0, %v1463
    %v1465 = vpop.f32.mrf.mxu0
    %1466 = vdwg.mxu0
    %v1467 = vmul.f32 %v1370, %v1400
    %v1468 = vmul.f32 %v1372, %v1402
    %v1469 = vmul.f32 %v1375, %v1405
    %v1470 = vsel %vm527, %v1467, 0.0
    %1471 = vadd.xlane.f32.xlu0 %v1470
    %v1472 = vpop.xlane.xlu0 %1471
    %v1473 = vsel %vm527, %v1468, 0.0
    %1474 = vadd.xlane.f32.xlu0 %v1473
    %v1475 = vpop.xlane.xlu0 %1474
    %v1476 = vsel %vm527, %v1469, 0.0
    %1477 = vadd.xlane.f32.xlu0 %v1476
    %v1478 = vpop.xlane.xlu0 %1477
    %v1479 = vmul.f32 %v1472, 0.17677669
    %v1480 = vmul.f32 %v1475, 0.17677669
    %v1481 = vmul.f32 %v1478, 0.17677669
    %v1482 = vpack.c.bf16 %v1372, %v1370
    %v1483 = vpack.c.bf16 %v1375, %v1375
    %v1484 = vpack.c.bf16 %v1451, %v1451
    %v1486 = vsel %vm527, %v1482, 0
    %v1489 = vsel %vm527, %v1483, 0
    %v1492 = vsel %vm527, %v1484, 0
    %1494 = vmatpush.bf16.xpose.msra.mxu0 0
    %1495 = vmatpush.bf16.xpose.msra.mxu0 0
    %1496 = vmatpush.bf16.xpose.msra.mxu0 0
    %1497 = vmatpush.bf16.xpose.msra.mxu0 0
    %1498 = vmatpush.bf16.xpose.msra.mxu0 0
    %1499 = vmatpush.bf16.xpose.msra.mxu0 0
    %1500 = vmatpush.bf16.xpose.msra.mxu0 0
    %1501 = vmatpush.bf16.xpose.msra.mxu0 %v1492
    %1502 = vmatmul.bf16.gmra.mxu0 %v1486
    %v1503 = vpop.f32.mrf.mxu0
    %v1504 = vadd.f32 0.0, %v1503
    %v1505 = vpop.f32.mrf.mxu0
    %v1506 = vadd.f32 0.0, %v1505
    %1507 = vmatmul.bf16.gmra.mxu0 %v1489
    %v1508 = vpop.f32.mrf.mxu0
    %v1509 = vadd.f32 0.0, %v1508
    %v1510 = vpop.f32.mrf.mxu0
    %1511 = vdwg.mxu0
    %v1512 = vmul.f32 %v1504, 0.17677669
    %v1513 = vmul.f32 %v1506, 0.17677669
    %v1514 = vmul.f32 %v1509, 0.17677669
    %v1515 = vsel %vm1074, %v1512, -1e+30
    %v1516 = vsel %vm1074, %v1513, -1e+30
    %v1517 = vsel %vm1074, %v1514, -1e+30
    %v1518 = vsel %vm1077, %v1515, -inf
    %1519 = vmax.xlane.f32.xlu0 %v1518
    %v1520 = vpop.xlane.xlu0 %1519
    %v1521 = vsel %vm1077, %v1516, -inf
    %1522 = vmax.xlane.f32.xlu0 %v1521
    %v1523 = vpop.xlane.xlu0 %1522
    %v1524 = vsel %vm1077, %v1517, -inf
    %1525 = vmax.xlane.f32.xlu0 %v1524
    %v1526 = vpop.xlane.xlu0 %1525
    %v1527 = vmax.f32 %v1479, %v1520
    %v1528 = vmax.f32 %v1480, %v1523
    %v1529 = vmax.f32 %v1481, %v1526
    %v1530 = vsub.f32 %v1479, %v1527
    %v1531 = vsub.f32 %v1480, %v1528
    %v1532 = vsub.f32 %v1481, %v1529
    %v1533 = vmul.f32 %v1530, 1.442695
    %v1534 = vpow.pop %v1533
    %v1535 = vmul.f32 %v1531, 1.442695
    %v1536 = vpow.pop %v1535
    %v1537 = vmul.f32 %v1532, 1.442695
    %v1538 = vpow.pop %v1537
    %v1539 = vsub.f32 %v1515, %v1527
    %v1540 = vsub.f32 %v1516, %v1528
    %v1541 = vsub.f32 %v1517, %v1529
    %v1542 = vmul.f32 %v1539, 1.442695
    %v1543 = vpow.pop %v1542
    %v1544 = vmul.f32 %v1540, 1.442695
    %v1545 = vpow.pop %v1544
    %v1546 = vmul.f32 %v1541, 1.442695
    %v1547 = vpow.pop %v1546
    %v1548 = vsel %vm1077, %v1543, 0.0
    %1549 = vadd.xlane.f32.xlu0 %v1548
    %v1550 = vpop.xlane.xlu0 %1549
    %v1551 = vsel %vm1077, %v1545, 0.0
    %1552 = vadd.xlane.f32.xlu0 %v1551
    %v1553 = vpop.xlane.xlu0 %1552
    %v1554 = vsel %vm1077, %v1547, 0.0
    %1555 = vadd.xlane.f32.xlu0 %v1554
    %v1556 = vpop.xlane.xlu0 %1555
    %v1557 = vadd.f32 %v1534, %v1550
    %v1558 = vadd.f32 %v1536, %v1553
    %v1559 = vadd.f32 %v1538, %v1556
    %v1560 = vmul.f32 %v1534, %v1430
    %v1561 = vmul.f32 %v1536, %v1432
    %v1562 = vmul.f32 %v1538, %v1435
    %v1563 = vpack.c.bf16 %v1545, %v1543
    %v1564 = vpack.c.bf16 %v1547, %v1547
    %v1565 = vpack.c.bf16 %v1464, %v1464
    %v1567 = vsel %vm1077, %v1563, 0
    %v1570 = vsel %vm1077, %v1564, 0
    %v1573 = vsel %vm786, %v1565, 0
    %1575 = vmatpush.bf16.msra.mxu0 0
    %1576 = vmatpush.bf16.msra.mxu0 0
    %1577 = vmatpush.bf16.msra.mxu0 0
    %1578 = vmatpush.bf16.msra.mxu0 0
    %1579 = vmatpush.bf16.msra.mxu0 0
    %1580 = vmatpush.bf16.msra.mxu0 0
    %1581 = vmatpush.bf16.msra.mxu0 0
    %1582 = vmatpush.bf16.msra.mxu0 %v1573
    %1583 = vmatmul.bf16.gmra.mxu0 %v1567
    %v1584 = vpop.f32.mrf.mxu0
    %v1585 = vadd.f32 0.0, %v1584
    %v1586 = vpop.f32.mrf.mxu0
    %v1587 = vadd.f32 0.0, %v1586
    %1588 = vmatmul.bf16.gmra.mxu0 %v1570
    %v1589 = vpop.f32.mrf.mxu0
    %v1590 = vadd.f32 0.0, %v1589
    %v1591 = vpop.f32.mrf.mxu0
    %1592 = vdwg.mxu0
    %v1593 = vadd.f32 %v1560, %v1585
    %v1594 = vadd.f32 %v1561, %v1587
    %v1595 = vadd.f32 %v1562, %v1590
    %v1596 = vrcp.pop %v1557
    %v1597 = vrcp.pop %v1558
    %v1598 = vrcp.pop %v1559
    %v1599 = vmul.f32 %v1593, %v1596
    %v1600 = vmul.f32 %v1594, %v1597
    %v1601 = vmul.f32 %v1595, %v1598
    %v1602 = vadd.f32 %v1599, %v758
    %v1603 = vadd.f32 %v1600, %v760
    %v1604 = vadd.f32 %v1601, %v763
    %v1605 = vsel %vm527, %v1602, 0.0
    %1606 = vadd.xlane.f32.xlu0 %v1605
    %v1607 = vpop.xlane.xlu0 %1606
    %v1608 = vsel %vm527, %v1603, 0.0
    %1609 = vadd.xlane.f32.xlu0 %v1608
    %v1610 = vpop.xlane.xlu0 %1609
    %v1611 = vsel %vm527, %v1604, 0.0
    %1612 = vadd.xlane.f32.xlu0 %v1611
    %v1613 = vpop.xlane.xlu0 %1612
    %v1614 = vmul.f32 %v1607, %v1150
    %v1615 = vmul.f32 %v1610, %v1150
    %v1616 = vmul.f32 %v1613, %v1150
    %v1617 = vsub.f32 %v1602, %v1614
    %v1618 = vsub.f32 %v1603, %v1615
    %v1619 = vsub.f32 %v1604, %v1616
    %v1620 = vmul.f32 %v1617, %v1617
    %v1621 = vmul.f32 %v1618, %v1618
    %v1622 = vmul.f32 %v1619, %v1619
    %v1623 = vsel %vm527, %v1620, 0.0
    %1624 = vadd.xlane.f32.xlu0 %v1623
    %v1625 = vpop.xlane.xlu0 %1624
    %v1626 = vsel %vm527, %v1621, 0.0
    %1627 = vadd.xlane.f32.xlu0 %v1626
    %v1628 = vpop.xlane.xlu0 %1627
    %v1629 = vsel %vm527, %v1622, 0.0
    %1630 = vadd.xlane.f32.xlu0 %v1629
    %v1631 = vpop.xlane.xlu0 %1630
    %v1632 = vmul.f32 %v1625, %v1150
    %v1633 = vmul.f32 %v1628, %v1150
    %v1634 = vmul.f32 %v1631, %v1150
    %v1635 = vadd.f32 %v1632, 1e-06
    %v1636 = vadd.f32 %v1633, 1e-06
    %v1637 = vadd.f32 %v1634, 1e-06
    %v1638 = vrsqrt.pop %v1635
    %v1639 = vmul.f32 %v1638, %v1635
    %v1640 = vmul.f32 %v1639, %v1638
    %v1641 = vmul.f32 0.5, %v1640
    %v1642 = vsub.f32 1.5, %v1641
    %v1643 = vmul.f32 %v1638, %v1642
    %vm1644 = vweird.f32 %v1635
    %vm1645 = vweird.f32 %v1638
    %vm1646 = vmor %vm1644, %vm1645
    %v1647 = vsel %vm1646, %v1638, %v1643
    %v1648 = vrsqrt.pop %v1636
    %v1649 = vmul.f32 %v1648, %v1636
    %v1650 = vmul.f32 %v1649, %v1648
    %v1651 = vmul.f32 0.5, %v1650
    %v1652 = vsub.f32 1.5, %v1651
    %v1653 = vmul.f32 %v1648, %v1652
    %vm1654 = vweird.f32 %v1636
    %vm1655 = vweird.f32 %v1648
    %vm1656 = vmor %vm1654, %vm1655
    %v1657 = vsel %vm1656, %v1648, %v1653
    %v1658 = vrsqrt.pop %v1637
    %v1659 = vmul.f32 %v1658, %v1637
    %v1660 = vmul.f32 %v1659, %v1658
    %v1661 = vmul.f32 0.5, %v1660
    %v1662 = vsub.f32 1.5, %v1661
    %v1663 = vmul.f32 %v1658, %v1662
    %vm1664 = vweird.f32 %v1637
    %vm1665 = vweird.f32 %v1658
    %vm1666 = vmor %vm1664, %vm1665
    %v1667 = vsel %vm1666, %v1658, %v1663
    %v1668 = vmul.f32 %v1617, %v1647
    %v1669 = vmul.f32 %v1618, %v1657
    %v1670 = vmul.f32 %v1619, %v1667
    %v1671 = vperm.slane %v1325, 0
    %v1672 = vmul.f32 %v1668, %v1671
    %v1673 = vmul.f32 %v1669, %v1671
    %v1674 = vmul.f32 %v1670, %v1671
    %v1675 = vperm.slane %v1326, 0
    %v1676 = vadd.f32 %v1672, %v1675
    %v1677 = vadd.f32 %v1673, %v1675
    %v1678 = vadd.f32 %v1674, %v1675
    %v1679 = vpack.c.bf16 %v1677, %v1676
    %v1680 = vpack.c.bf16 %v1678, %v1678
    %v1681 = vperm.slane %v1331, 0
    %v1686 = vunpack.c.l.b16 %v1327
    %v1687 = vunpack.c.l.b16 %v1328
    %v1688 = vunpack.c.l.b16 %v1329
    %v1689 = vunpack.c.l.b16 %v1330
    %v1690 = vpack.c.b16 %v1687, %v1686
    %v1691 = vpack.c.b16 %v1689, %v1688
    %v1695 = vsel %vm527, %v1679, 0
    %v1698 = vsel %vm527, %v1680, 0
    %1700 = vmatpush.bf16.msra.mxu0 0
    %1701 = vmatpush.bf16.msra.mxu0 0
    %1702 = vmatpush.bf16.msra.mxu0 0
    %1703 = vmatpush.bf16.msra.mxu0 0
    %1704 = vmatpush.bf16.msra.mxu0 0
    %1705 = vmatpush.bf16.msra.mxu0 0
    %1706 = vmatpush.bf16.msra.mxu0 %v1691
    %1707 = vmatpush.bf16.msra.mxu0 %v1690
    %1708 = vmatmul.bf16.gmra.mxu0 %v1695
    %v1709 = vpop.f32.mrf.mxu0
    %v1710 = vadd.f32 %v1681, %v1709
    %v1711 = vpop.f32.mrf.mxu0
    %v1712 = vadd.f32 %v1681, %v1711
    %1713 = vmatmul.bf16.gmra.mxu0 %v1698
    %v1714 = vpop.f32.mrf.mxu0
    %v1715 = vadd.f32 %v1681, %v1714
    %v1716 = vpop.f32.mrf.mxu0
    %1717 = vdwg.mxu0
    %v1718 = vmax.f32 %v1710, 0.0
    %v1719 = vmax.f32 %v1712, 0.0
    %v1720 = vmax.f32 %v1715, 0.0
    %v1721 = vpack.c.bf16 %v1719, %v1718
    %v1722 = vpack.c.bf16 %v1720, %v1720
    %v1723 = vperm.slane %v1337, 0
    %v1728 = vunpack.c.l.b16 %v1333
    %v1729 = vunpack.c.l.b16 %v1334
    %v1730 = vunpack.c.l.b16 %v1335
    %v1731 = vunpack.c.l.b16 %v1336
    %v1732 = vpack.c.b16 %v1729, %v1728
    %v1733 = vpack.c.b16 %v1731, %v1730
    %v1737 = vsel %vm527, %v1721, 0
    %v1740 = vsel %vm527, %v1722, 0
    %1742 = vmatpush.bf16.msra.mxu0 0
    %1743 = vmatpush.bf16.msra.mxu0 0
    %1744 = vmatpush.bf16.msra.mxu0 0
    %1745 = vmatpush.bf16.msra.mxu0 0
    %1746 = vmatpush.bf16.msra.mxu0 0
    %1747 = vmatpush.bf16.msra.mxu0 0
    %1748 = vmatpush.bf16.msra.mxu0 %v1733
    %1749 = vmatpush.bf16.msra.mxu0 %v1732
    %1750 = vmatmul.bf16.gmra.mxu0 %v1737
    %v1751 = vpop.f32.mrf.mxu0
    %v1752 = vadd.f32 %v1723, %v1751
    %v1753 = vpop.f32.mrf.mxu0
    %v1754 = vadd.f32 %v1723, %v1753
    %1755 = vmatmul.bf16.gmra.mxu0 %v1740
    %v1756 = vpop.f32.mrf.mxu0
    %v1757 = vadd.f32 %v1723, %v1756
    %v1758 = vpop.f32.mrf.mxu0
    %1759 = vdwg.mxu0
    %v1760 = vadd.f32 %v1752, %v1676
    %v1761 = vadd.f32 %v1754, %v1677
    %v1762 = vadd.f32 %v1757, %v1678
    %v1763 = vsel %vm527, %v1760, 0.0
    %1764 = vadd.xlane.f32.xlu0 %v1763
    %v1765 = vpop.xlane.xlu0 %1764
    %v1766 = vsel %vm527, %v1761, 0.0
    %1767 = vadd.xlane.f32.xlu0 %v1766
    %v1768 = vpop.xlane.xlu0 %1767
    %v1769 = vsel %vm527, %v1762, 0.0
    %1770 = vadd.xlane.f32.xlu0 %v1769
    %v1771 = vpop.xlane.xlu0 %1770
    %v1772 = vmul.f32 %v1765, %v1150
    %v1773 = vmul.f32 %v1768, %v1150
    %v1774 = vmul.f32 %v1771, %v1150
    %v1775 = vsub.f32 %v1760, %v1772
    %v1776 = vsub.f32 %v1761, %v1773
    %v1777 = vsub.f32 %v1762, %v1774
    %v1778 = vmul.f32 %v1775, %v1775
    %v1779 = vmul.f32 %v1776, %v1776
    %v1780 = vmul.f32 %v1777, %v1777
    %v1781 = vsel %vm527, %v1778, 0.0
    %1782 = vadd.xlane.f32.xlu0 %v1781
    %v1783 = vpop.xlane.xlu0 %1782
    %v1784 = vsel %vm527, %v1779, 0.0
    %1785 = vadd.xlane.f32.xlu0 %v1784
    %v1786 = vpop.xlane.xlu0 %1785
    %v1787 = vsel %vm527, %v1780, 0.0
    %1788 = vadd.xlane.f32.xlu0 %v1787
    %v1789 = vpop.xlane.xlu0 %1788
    %v1790 = vmul.f32 %v1783, %v1150
    %v1791 = vmul.f32 %v1786, %v1150
    %v1792 = vmul.f32 %v1789, %v1150
    %v1793 = vadd.f32 %v1790, 1e-06
    %v1794 = vadd.f32 %v1791, 1e-06
    %v1795 = vadd.f32 %v1792, 1e-06
    %v1796 = vrsqrt.pop %v1793
    %v1797 = vmul.f32 %v1796, %v1793
    %v1798 = vmul.f32 %v1797, %v1796
    %v1799 = vmul.f32 0.5, %v1798
    %v1800 = vsub.f32 1.5, %v1799
    %v1801 = vmul.f32 %v1796, %v1800
    %vm1802 = vweird.f32 %v1793
    %vm1803 = vweird.f32 %v1796
    %vm1804 = vmor %vm1802, %vm1803
    %v1805 = vsel %vm1804, %v1796, %v1801
    %v1806 = vrsqrt.pop %v1794
    %v1807 = vmul.f32 %v1806, %v1794
    %v1808 = vmul.f32 %v1807, %v1806
    %v1809 = vmul.f32 0.5, %v1808
    %v1810 = vsub.f32 1.5, %v1809
    %v1811 = vmul.f32 %v1806, %v1810
    %vm1812 = vweird.f32 %v1794
    %vm1813 = vweird.f32 %v1806
    %vm1814 = vmor %vm1812, %vm1813
    %v1815 = vsel %vm1814, %v1806, %v1811
    %v1816 = vrsqrt.pop %v1795
    %v1817 = vmul.f32 %v1816, %v1795
    %v1818 = vmul.f32 %v1817, %v1816
    %v1819 = vmul.f32 0.5, %v1818
    %v1820 = vsub.f32 1.5, %v1819
    %v1821 = vmul.f32 %v1816, %v1820
    %vm1822 = vweird.f32 %v1795
    %vm1823 = vweird.f32 %v1816
    %vm1824 = vmor %vm1822, %vm1823
    %v1825 = vsel %vm1824, %v1816, %v1821
    %v1826 = vmul.f32 %v1775, %v1805
    %v1827 = vmul.f32 %v1776, %v1815
    %v1828 = vmul.f32 %v1777, %v1825
    %v1829 = vperm.slane %v1338, 0
    %v1830 = vmul.f32 %v1826, %v1829
    %v1831 = vmul.f32 %v1827, %v1829
    %v1832 = vmul.f32 %v1828, %v1829
    %v1833 = vperm.slane %v1339, 0
    %v1834 = vadd.f32 %v1830, %v1833
    %v1835 = vadd.f32 %v1831, %v1833
    %v1836 = vadd.f32 %v1832, %v1833
    %s1837 = scalar_lea.vmem [#allocation19], 48
    %v1838 = vld [vmem:[%s1837] sm:$0xf]
    %v1839 = vld [vmem:[%s1837 + $0x4] sm:$0xf]
    %v1840 = vld [vmem:[%s1837 + $0x8] sm:$0xf]
    %v1841 = vld [vmem:[%s1837 + $0xc] sm:$0xf]
    %s1842 = scalar_lea.vmem [#allocation19], 64
    %v1843 = vld [vmem:[%s1842] sm:$0xf]
    %v1844 = vld [vmem:[%s1842 + $0x4] sm:$0xf]
    %v1845 = vld [vmem:[%s1842 + $0x8] sm:$0xf]
    %v1846 = vld [vmem:[%s1842 + $0xc] sm:$0xf]
    %s1847 = scalar_lea.vmem [#allocation19], 80
    %v1848 = vld [vmem:[%s1847] sm:$0xf]
    %v1849 = vld [vmem:[%s1847 + $0x4] sm:$0xf]
    %v1850 = vld [vmem:[%s1847 + $0x8] sm:$0xf]
    %v1851 = vld [vmem:[%s1847 + $0xc] sm:$0xf]
    %v1852 = vld [vmem:[#allocation22 + $0x6] sm:$0x1]
    %v1853 = vld [vmem:[#allocation22 + $0x7] sm:$0x1]
    %s1854 = scalar_lea.vmem [#allocation21], 32
    %v1855 = vld [vmem:[%s1854] sm:$0xf]
    %v1856 = vld [vmem:[%s1854 + $0x4] sm:$0xf]
    %v1857 = vld [vmem:[%s1854 + $0x8] sm:$0xf]
    %v1858 = vld [vmem:[%s1854 + $0xc] sm:$0xf]
    %v1859 = vld [vmem:[#allocation22 + $0x8] sm:$0x1]
    %s1860 = scalar_lea.vmem [#allocation21], 48
    %v1861 = vld [vmem:[%s1860] sm:$0xf]
    %v1862 = vld [vmem:[%s1860 + $0x4] sm:$0xf]
    %v1863 = vld [vmem:[%s1860 + $0x8] sm:$0xf]
    %v1864 = vld [vmem:[%s1860 + $0xc] sm:$0xf]
    %v1865 = vld [vmem:[#allocation22 + $0x9] sm:$0x1]
    %v1866 = vld [vmem:[#allocation22 + $0xa] sm:$0x1]
    %v1867 = vld [vmem:[#allocation22 + $0xb] sm:$0x1]
    %v1868 = vpack.c.bf16 %v1310, %v1309
    %v1873 = vunpack.c.l.b16 %v1838
    %v1874 = vunpack.c.l.b16 %v1839
    %v1875 = vunpack.c.l.b16 %v1840
    %v1876 = vunpack.c.l.b16 %v1841
    %v1877 = vpack.c.b16 %v1874, %v1873
    %v1878 = vpack.c.b16 %v1876, %v1875
    %v1882 = vsel %vm527, %v1868, 0
    %1884 = vmatpush.bf16.msra.mxu0 0
    %1885 = vmatpush.bf16.msra.mxu0 0
    %1886 = vmatpush.bf16.msra.mxu0 0
    %1887 = vmatpush.bf16.msra.mxu0 0
    %1888 = vmatpush.bf16.msra.mxu0 0
    %1889 = vmatpush.bf16.msra.mxu0 0
    %1890 = vmatpush.bf16.msra.mxu0 %v1878
    %1891 = vmatpush.bf16.msra.mxu0 %v1877
    %1892 = vmatmul.bf16.gmra.mxu0 %v1882
    %v1893 = vpop.f32.mrf.mxu0
    %v1894 = vadd.f32 0.0, %v1893
    %v1895 = vpop.f32.mrf.mxu0
    %v1896 = vadd.f32 0.0, %v1895
    %1897 = vdwg.mxu0
    %v1902 = vunpack.c.l.b16 %v1843
    %v1903 = vunpack.c.l.b16 %v1844
    %v1904 = vunpack.c.l.b16 %v1845
    %v1905 = vunpack.c.l.b16 %v1846
    %v1906 = vpack.c.b16 %v1903, %v1902
    %v1907 = vpack.c.b16 %v1905, %v1904
    %1910 = vmatpush.bf16.msra.mxu0 0
    %1911 = vmatpush.bf16.msra.mxu0 0
    %1912 = vmatpush.bf16.msra.mxu0 0
    %1913 = vmatpush.bf16.msra.mxu0 0
    %1914 = vmatpush.bf16.msra.mxu0 0
    %1915 = vmatpush.bf16.msra.mxu0 0
    %1916 = vmatpush.bf16.msra.mxu0 %v1907
    %1917 = vmatpush.bf16.msra.mxu0 %v1906
    %1918 = vmatmul.bf16.gmra.mxu0 %v1882
    %v1919 = vpop.f32.mrf.mxu0
    %v1920 = vadd.f32 0.0, %v1919
    %v1921 = vpop.f32.mrf.mxu0
    %v1922 = vadd.f32 0.0, %v1921
    %1923 = vdwg.mxu0
    %v1928 = vunpack.c.l.b16 %v1848
    %v1929 = vunpack.c.l.b16 %v1849
    %v1930 = vunpack.c.l.b16 %v1850
    %v1931 = vunpack.c.l.b16 %v1851
    %v1932 = vpack.c.b16 %v1929, %v1928
    %v1933 = vpack.c.b16 %v1931, %v1930
    %1936 = vmatpush.bf16.msra.mxu0 0
    %1937 = vmatpush.bf16.msra.mxu0 0
    %1938 = vmatpush.bf16.msra.mxu0 0
    %1939 = vmatpush.bf16.msra.mxu0 0
    %1940 = vmatpush.bf16.msra.mxu0 0
    %1941 = vmatpush.bf16.msra.mxu0 0
    %1942 = vmatpush.bf16.msra.mxu0 %v1933
    %1943 = vmatpush.bf16.msra.mxu0 %v1932
    %1944 = vmatmul.bf16.gmra.mxu0 %v1882
    %v1945 = vpop.f32.mrf.mxu0
    %v1946 = vadd.f32 0.0, %v1945
    %v1947 = vpop.f32.mrf.mxu0
    %v1948 = vadd.f32 0.0, %v1947
    %1949 = vdwg.mxu0
    %1950 = vmatpush.bf16.msra.mxu0 0
    %1951 = vmatpush.bf16.msra.mxu0 0
    %1952 = vmatpush.bf16.msra.mxu0 0
    %1953 = vmatpush.bf16.msra.mxu0 0
    %1954 = vmatpush.bf16.msra.mxu0 0
    %1955 = vmatpush.bf16.msra.mxu0 0
    %1956 = vmatpush.bf16.msra.mxu0 %v1907
    %1957 = vmatpush.bf16.msra.mxu0 %v1906
    %1958 = vmatmul.bf16.gmra.mxu0 %v1012
    %v1959 = vpop.f32.mrf.mxu0
    %v1960 = vadd.f32 0.0, %v1959
    %v1961 = vpop.f32.mrf.mxu0
    %1962 = vdwg.mxu0
    %1963 = vmatpush.bf16.msra.mxu0 0
    %1964 = vmatpush.bf16.msra.mxu0 0
    %1965 = vmatpush.bf16.msra.mxu0 0
    %1966 = vmatpush.bf16.msra.mxu0 0
    %1967 = vmatpush.bf16.msra.mxu0 0
    %1968 = vmatpush.bf16.msra.mxu0 0
    %1969 = vmatpush.bf16.msra.mxu0 %v1933
    %1970 = vmatpush.bf16.msra.mxu0 %v1932
    %1971 = vmatmul.bf16.gmra.mxu0 %v1012
    %v1972 = vpop.f32.mrf.mxu0
    %v1973 = vadd.f32 0.0, %v1972
    %v1974 = vpop.f32.mrf.mxu0
    %1975 = vdwg.mxu0
    %v1976 = vmul.f32 %v1894, %v1920
    %v1977 = vmul.f32 %v1896, %v1922
    %v1978 = vsel %vm527, %v1976, 0.0
    %1979 = vadd.xlane.f32.xlu0 %v1978
    %v1980 = vpop.xlane.xlu0 %1979
    %v1981 = vsel %vm527, %v1977, 0.0
    %1982 = vadd.xlane.f32.xlu0 %v1981
    %v1983 = vpop.xlane.xlu0 %1982
    %v1984 = vmul.f32 %v1980, 0.17677669
    %v1985 = vmul.f32 %v1983, 0.17677669
    %v1986 = vpack.c.bf16 %v1896, %v1894
    %v1987 = vpack.c.bf16 %v1960, %v1960
    %v1989 = vsel %vm527, %v1986, 0
    %v1992 = vsel %vm527, %v1987, 0
    %1994 = vmatpush.bf16.xpose.msra.mxu0 0
    %1995 = vmatpush.bf16.xpose.msra.mxu0 0
    %1996 = vmatpush.bf16.xpose.msra.mxu0 0
    %1997 = vmatpush.bf16.xpose.msra.mxu0 0
    %1998 = vmatpush.bf16.xpose.msra.mxu0 0
    %1999 = vmatpush.bf16.xpose.msra.mxu0 0
    %2000 = vmatpush.bf16.xpose.msra.mxu0 0
    %2001 = vmatpush.bf16.xpose.msra.mxu0 %v1992
    %2002 = vmatmul.bf16.gmra.mxu0 %v1989
    %v2003 = vpop.f32.mrf.mxu0
    %v2004 = vadd.f32 0.0, %v2003
    %v2005 = vpop.f32.mrf.mxu0
    %v2006 = vadd.f32 0.0, %v2005
    %2007 = vdwg.mxu0
    %v2008 = vmul.f32 %v2004, 0.17677669
    %v2009 = vmul.f32 %v2006, 0.17677669
    %v2010 = vsel %vm1074, %v2008, -1e+30
    %v2011 = vsel %vm1074, %v2009, -1e+30
    %v2012 = vsel %vm1077, %v2010, -inf
    %2013 = vmax.xlane.f32.xlu0 %v2012
    %v2014 = vpop.xlane.xlu0 %2013
    %v2015 = vsel %vm1077, %v2011, -inf
    %2016 = vmax.xlane.f32.xlu0 %v2015
    %v2017 = vpop.xlane.xlu0 %2016
    %v2018 = vmax.f32 %v1984, %v2014
    %v2019 = vmax.f32 %v1985, %v2017
    %v2020 = vsub.f32 %v1984, %v2018
    %v2021 = vsub.f32 %v1985, %v2019
    %v2022 = vmul.f32 %v2020, 1.442695
    %v2023 = vpow.pop %v2022
    %v2024 = vmul.f32 %v2021, 1.442695
    %v2025 = vpow.pop %v2024
    %v2026 = vsub.f32 %v2010, %v2018
    %v2027 = vsub.f32 %v2011, %v2019
    %v2028 = vmul.f32 %v2026, 1.442695
    %v2029 = vpow.pop %v2028
    %v2030 = vmul.f32 %v2027, 1.442695
    %v2031 = vpow.pop %v2030
    %v2032 = vsel %vm1077, %v2029, 0.0
    %2033 = vadd.xlane.f32.xlu0 %v2032
    %v2034 = vpop.xlane.xlu0 %2033
    %v2035 = vsel %vm1077, %v2031, 0.0
    %2036 = vadd.xlane.f32.xlu0 %v2035
    %v2037 = vpop.xlane.xlu0 %2036
    %v2038 = vadd.f32 %v2023, %v2034
    %v2039 = vadd.f32 %v2025, %v2037
    %v2040 = vmul.f32 %v2023, %v1946
    %v2041 = vmul.f32 %v2025, %v1948
    %v2042 = vpack.c.bf16 %v2031, %v2029
    %v2043 = vpack.c.bf16 %v1973, %v1973
    %v2045 = vsel %vm1077, %v2042, 0
    %v2048 = vsel %vm786, %v2043, 0
    %2050 = vmatpush.bf16.msra.mxu0 0
    %2051 = vmatpush.bf16.msra.mxu0 0
    %2052 = vmatpush.bf16.msra.mxu0 0
    %2053 = vmatpush.bf16.msra.mxu0 0
    %2054 = vmatpush.bf16.msra.mxu0 0
    %2055 = vmatpush.bf16.msra.mxu0 0
    %2056 = vmatpush.bf16.msra.mxu0 0
    %2057 = vmatpush.bf16.msra.mxu0 %v2048
    %2058 = vmatmul.bf16.gmra.mxu0 %v2045
    %v2059 = vpop.f32.mrf.mxu0
    %v2060 = vadd.f32 0.0, %v2059
    %v2061 = vpop.f32.mrf.mxu0
    %v2062 = vadd.f32 0.0, %v2061
    %2063 = vdwg.mxu0
    %v2064 = vadd.f32 %v2040, %v2060
    %v2065 = vadd.f32 %v2041, %v2062
    %v2066 = vrcp.pop %v2038
    %v2067 = vrcp.pop %v2039
    %v2068 = vmul.f32 %v2064, %v2066
    %v2069 = vmul.f32 %v2065, %v2067
    %v2070 = vadd.f32 %v2068, %v1309
    %v2071 = vadd.f32 %v2069, %v1310
    %v2072 = vsel %vm527, %v2070, 0.0
    %2073 = vadd.xlane.f32.xlu0 %v2072
    %v2074 = vpop.xlane.xlu0 %2073
    %v2075 = vsel %vm527, %v2071, 0.0
    %2076 = vadd.xlane.f32.xlu0 %v2075
    %v2077 = vpop.xlane.xlu0 %2076
    %v2078 = vmul.f32 %v2074, %v1150
    %v2079 = vmul.f32 %v2077, %v1150
    %v2080 = vsub.f32 %v2070, %v2078
    %v2081 = vsub.f32 %v2071, %v2079
    %v2082 = vmul.f32 %v2080, %v2080
    %v2083 = vmul.f32 %v2081, %v2081
    %v2084 = vsel %vm527, %v2082, 0.0
    %2085 = vadd.xlane.f32.xlu0 %v2084
    %v2086 = vpop.xlane.xlu0 %2085
    %v2087 = vsel %vm527, %v2083, 0.0
    %2088 = vadd.xlane.f32.xlu0 %v2087
    %v2089 = vpop.xlane.xlu0 %2088
    %v2090 = vmul.f32 %v2086, %v1150
    %v2091 = vmul.f32 %v2089, %v1150
    %v2092 = vadd.f32 %v2090, 1e-06
    %v2093 = vadd.f32 %v2091, 1e-06
    %v2094 = vrsqrt.pop %v2092
    %v2095 = vmul.f32 %v2094, %v2092
    %v2096 = vmul.f32 %v2095, %v2094
    %v2097 = vmul.f32 0.5, %v2096
    %v2098 = vsub.f32 1.5, %v2097
    %v2099 = vmul.f32 %v2094, %v2098
    %vm2100 = vweird.f32 %v2092
    %vm2101 = vweird.f32 %v2094
    %vm2102 = vmor %vm2100, %vm2101
    %v2103 = vsel %vm2102, %v2094, %v2099
    %v2104 = vrsqrt.pop %v2093
    %v2105 = vmul.f32 %v2104, %v2093
    %v2106 = vmul.f32 %v2105, %v2104
    %v2107 = vmul.f32 0.5, %v2106
    %v2108 = vsub.f32 1.5, %v2107
    %v2109 = vmul.f32 %v2104, %v2108
    %vm2110 = vweird.f32 %v2093
    %vm2111 = vweird.f32 %v2104
    %vm2112 = vmor %vm2110, %vm2111
    %v2113 = vsel %vm2112, %v2104, %v2109
    %v2114 = vmul.f32 %v2080, %v2103
    %v2115 = vmul.f32 %v2081, %v2113
    %v2116 = vperm.slane %v1852, 0
    %v2117 = vmul.f32 %v2114, %v2116
    %v2118 = vmul.f32 %v2115, %v2116
    %v2119 = vperm.slane %v1853, 0
    %v2120 = vadd.f32 %v2117, %v2119
    %v2121 = vadd.f32 %v2118, %v2119
    %v2122 = vpack.c.bf16 %v2121, %v2120
    %v2123 = vperm.slane %v1859, 0
    %v2128 = vunpack.c.l.b16 %v1855
    %v2129 = vunpack.c.l.b16 %v1856
    %v2130 = vunpack.c.l.b16 %v1857
    %v2131 = vunpack.c.l.b16 %v1858
    %v2132 = vpack.c.b16 %v2129, %v2128
    %v2133 = vpack.c.b16 %v2131, %v2130
    %v2137 = vsel %vm527, %v2122, 0
    %2139 = vmatpush.bf16.msra.mxu0 0
    %2140 = vmatpush.bf16.msra.mxu0 0
    %2141 = vmatpush.bf16.msra.mxu0 0
    %2142 = vmatpush.bf16.msra.mxu0 0
    %2143 = vmatpush.bf16.msra.mxu0 0
    %2144 = vmatpush.bf16.msra.mxu0 0
    %2145 = vmatpush.bf16.msra.mxu0 %v2133
    %2146 = vmatpush.bf16.msra.mxu0 %v2132
    %2147 = vmatmul.bf16.gmra.mxu0 %v2137
    %v2148 = vpop.f32.mrf.mxu0
    %v2149 = vadd.f32 %v2123, %v2148
    %v2150 = vpop.f32.mrf.mxu0
    %v2151 = vadd.f32 %v2123, %v2150
    %2152 = vdwg.mxu0
    %v2153 = vmax.f32 %v2149, 0.0
    %v2154 = vmax.f32 %v2151, 0.0
    %v2155 = vpack.c.bf16 %v2154, %v2153
    %v2156 = vperm.slane %v1865, 0
    %v2161 = vunpack.c.l.b16 %v1861
    %v2162 = vunpack.c.l.b16 %v1862
    %v2163 = vunpack.c.l.b16 %v1863
    %v2164 = vunpack.c.l.b16 %v1864
    %v2165 = vpack.c.b16 %v2162, %v2161
    %v2166 = vpack.c.b16 %v2164, %v2163
    %v2170 = vsel %vm527, %v2155, 0
    %2172 = vmatpush.bf16.msra.mxu0 0
    %2173 = vmatpush.bf16.msra.mxu0 0
    %2174 = vmatpush.bf16.msra.mxu0 0
    %2175 = vmatpush.bf16.msra.mxu0 0
    %2176 = vmatpush.bf16.msra.mxu0 0
    %2177 = vmatpush.bf16.msra.mxu0 0
    %2178 = vmatpush.bf16.msra.mxu0 %v2166
    %2179 = vmatpush.bf16.msra.mxu0 %v2165
    %2180 = vmatmul.bf16.gmra.mxu0 %v2170
    %v2181 = vpop.f32.mrf.mxu0
    %v2182 = vadd.f32 %v2156, %v2181
    %v2183 = vpop.f32.mrf.mxu0
    %v2184 = vadd.f32 %v2156, %v2183
    %2185 = vdwg.mxu0
    %v2186 = vadd.f32 %v2182, %v2120
    %v2187 = vadd.f32 %v2184, %v2121
    %v2188 = vsel %vm527, %v2186, 0.0
    %2189 = vadd.xlane.f32.xlu0 %v2188
    %v2190 = vpop.xlane.xlu0 %2189
    %v2191 = vsel %vm527, %v2187, 0.0
    %2192 = vadd.xlane.f32.xlu0 %v2191
    %v2193 = vpop.xlane.xlu0 %2192
    %v2194 = vmul.f32 %v2190, %v1150
    %v2195 = vmul.f32 %v2193, %v1150
    %v2196 = vsub.f32 %v2186, %v2194
    %v2197 = vsub.f32 %v2187, %v2195
    %v2198 = vmul.f32 %v2196, %v2196
    %v2199 = vmul.f32 %v2197, %v2197
    %v2200 = vsel %vm527, %v2198, 0.0
    %2201 = vadd.xlane.f32.xlu0 %v2200
    %v2202 = vpop.xlane.xlu0 %2201
    %v2203 = vsel %vm527, %v2199, 0.0
    %2204 = vadd.xlane.f32.xlu0 %v2203
    %v2205 = vpop.xlane.xlu0 %2204
    %v2206 = vmul.f32 %v2202, %v1150
    %v2207 = vmul.f32 %v2205, %v1150
    %v2208 = vadd.f32 %v2206, 1e-06
    %v2209 = vadd.f32 %v2207, 1e-06
    %v2210 = vrsqrt.pop %v2208
    %v2211 = vmul.f32 %v2210, %v2208
    %v2212 = vmul.f32 %v2211, %v2210
    %v2213 = vmul.f32 0.5, %v2212
    %v2214 = vsub.f32 1.5, %v2213
    %v2215 = vmul.f32 %v2210, %v2214
    %vm2216 = vweird.f32 %v2208
    %vm2217 = vweird.f32 %v2210
    %vm2218 = vmor %vm2216, %vm2217
    %v2219 = vsel %vm2218, %v2210, %v2215
    %v2220 = vrsqrt.pop %v2209
    %v2221 = vmul.f32 %v2220, %v2209
    %v2222 = vmul.f32 %v2221, %v2220
    %v2223 = vmul.f32 0.5, %v2222
    %v2224 = vsub.f32 1.5, %v2223
    %v2225 = vmul.f32 %v2220, %v2224
    %vm2226 = vweird.f32 %v2209
    %vm2227 = vweird.f32 %v2220
    %vm2228 = vmor %vm2226, %vm2227
    %v2229 = vsel %vm2228, %v2220, %v2225
    %v2230 = vmul.f32 %v2196, %v2219
    %v2231 = vmul.f32 %v2197, %v2229
    %v2232 = vperm.slane %v1866, 0
    %v2233 = vmul.f32 %v2230, %v2232
    %v2234 = vmul.f32 %v2231, %v2232
    %v2235 = vperm.slane %v1867, 0
    %v2236 = vadd.f32 %v2233, %v2235
    %v2237 = vadd.f32 %v2234, %v2235
    %s2238 = scalar_lea.vmem [#allocation24], 48
    %v2239 = vld [vmem:[%s2238] sm:$0xf]
    %v2240 = vld [vmem:[%s2238 + $0x4] sm:$0xf]
    %v2241 = vld [vmem:[%s2238 + $0x8] sm:$0xf]
    %v2242 = vld [vmem:[%s2238 + $0xc] sm:$0xf]
    %s2243 = scalar_lea.vmem [#allocation24], 64
    %v2244 = vld [vmem:[%s2243] sm:$0xf]
    %v2245 = vld [vmem:[%s2243 + $0x4] sm:$0xf]
    %v2246 = vld [vmem:[%s2243 + $0x8] sm:$0xf]
    %v2247 = vld [vmem:[%s2243 + $0xc] sm:$0xf]
    %s2248 = scalar_lea.vmem [#allocation24], 80
    %v2249 = vld [vmem:[%s2248] sm:$0xf]
    %v2250 = vld [vmem:[%s2248 + $0x4] sm:$0xf]
    %v2251 = vld [vmem:[%s2248 + $0x8] sm:$0xf]
    %v2252 = vld [vmem:[%s2248 + $0xc] sm:$0xf]
    %v2253 = vld [vmem:[#allocation27 + $0x6] sm:$0x1]
    %v2254 = vld [vmem:[#allocation27 + $0x7] sm:$0x1]
    %s2255 = scalar_lea.vmem [#allocation25], 32
    %v2256 = vld [vmem:[%s2255] sm:$0xf]
    %v2257 = vld [vmem:[%s2255 + $0x4] sm:$0xf]
    %v2258 = vld [vmem:[%s2255 + $0x8] sm:$0xf]
    %v2259 = vld [vmem:[%s2255 + $0xc] sm:$0xf]
    %v2260 = vld [vmem:[#allocation27 + $0x8] sm:$0x1]
    %s2261 = scalar_lea.vmem [#allocation25], 48
    %v2262 = vld [vmem:[%s2261] sm:$0xf]
    %v2263 = vld [vmem:[%s2261 + $0x4] sm:$0xf]
    %v2264 = vld [vmem:[%s2261 + $0x8] sm:$0xf]
    %v2265 = vld [vmem:[%s2261 + $0xc] sm:$0xf]
    %v2266 = vld [vmem:[#allocation27 + $0x9] sm:$0x1]
    %v2267 = vld [vmem:[#allocation27 + $0xa] sm:$0x1]
    %v2268 = vld [vmem:[#allocation27 + $0xb] sm:$0x1]
    %v2269 = vpack.c.bf16 %v1835, %v1834
    %v2270 = vpack.c.bf16 %v1836, %v1836
    %v2275 = vunpack.c.l.b16 %v2239
    %v2276 = vunpack.c.l.b16 %v2240
    %v2277 = vunpack.c.l.b16 %v2241
    %v2278 = vunpack.c.l.b16 %v2242
    %v2279 = vpack.c.b16 %v2276, %v2275
    %v2280 = vpack.c.b16 %v2278, %v2277
    %v2284 = vsel %vm527, %v2269, 0
    %v2287 = vsel %vm527, %v2270, 0
    %2289 = vmatpush.bf16.msra.mxu0 0
    %2290 = vmatpush.bf16.msra.mxu0 0
    %2291 = vmatpush.bf16.msra.mxu0 0
    %2292 = vmatpush.bf16.msra.mxu0 0
    %2293 = vmatpush.bf16.msra.mxu0 0
    %2294 = vmatpush.bf16.msra.mxu0 0
    %2295 = vmatpush.bf16.msra.mxu0 %v2280
    %2296 = vmatpush.bf16.msra.mxu0 %v2279
    %2297 = vmatmul.bf16.gmra.mxu0 %v2284
    %v2298 = vpop.f32.mrf.mxu0
    %v2299 = vadd.f32 0.0, %v2298
    %v2300 = vpop.f32.mrf.mxu0
    %v2301 = vadd.f32 0.0, %v2300
    %2302 = vmatmul.bf16.gmra.mxu0 %v2287
    %v2303 = vpop.f32.mrf.mxu0
    %v2304 = vadd.f32 0.0, %v2303
    %v2305 = vpop.f32.mrf.mxu0
    %2306 = vdwg.mxu0
    %v2311 = vunpack.c.l.b16 %v2244
    %v2312 = vunpack.c.l.b16 %v2245
    %v2313 = vunpack.c.l.b16 %v2246
    %v2314 = vunpack.c.l.b16 %v2247
    %v2315 = vpack.c.b16 %v2312, %v2311
    %v2316 = vpack.c.b16 %v2314, %v2313
    %2319 = vmatpush.bf16.msra.mxu0 0
    %2320 = vmatpush.bf16.msra.mxu0 0
    %2321 = vmatpush.bf16.msra.mxu0 0
    %2322 = vmatpush.bf16.msra.mxu0 0
    %2323 = vmatpush.bf16.msra.mxu0 0
    %2324 = vmatpush.bf16.msra.mxu0 0
    %2325 = vmatpush.bf16.msra.mxu0 %v2316
    %2326 = vmatpush.bf16.msra.mxu0 %v2315
    %2327 = vmatmul.bf16.gmra.mxu0 %v2284
    %v2328 = vpop.f32.mrf.mxu0
    %v2329 = vadd.f32 0.0, %v2328
    %v2330 = vpop.f32.mrf.mxu0
    %v2331 = vadd.f32 0.0, %v2330
    %2332 = vmatmul.bf16.gmra.mxu0 %v2287
    %v2333 = vpop.f32.mrf.mxu0
    %v2334 = vadd.f32 0.0, %v2333
    %v2335 = vpop.f32.mrf.mxu0
    %2336 = vdwg.mxu0
    %v2341 = vunpack.c.l.b16 %v2249
    %v2342 = vunpack.c.l.b16 %v2250
    %v2343 = vunpack.c.l.b16 %v2251
    %v2344 = vunpack.c.l.b16 %v2252
    %v2345 = vpack.c.b16 %v2342, %v2341
    %v2346 = vpack.c.b16 %v2344, %v2343
    %2349 = vmatpush.bf16.msra.mxu0 0
    %2350 = vmatpush.bf16.msra.mxu0 0
    %2351 = vmatpush.bf16.msra.mxu0 0
    %2352 = vmatpush.bf16.msra.mxu0 0
    %2353 = vmatpush.bf16.msra.mxu0 0
    %2354 = vmatpush.bf16.msra.mxu0 0
    %2355 = vmatpush.bf16.msra.mxu0 %v2346
    %2356 = vmatpush.bf16.msra.mxu0 %v2345
    %2357 = vmatmul.bf16.gmra.mxu0 %v2284
    %v2358 = vpop.f32.mrf.mxu0
    %v2359 = vadd.f32 0.0, %v2358
    %v2360 = vpop.f32.mrf.mxu0
    %v2361 = vadd.f32 0.0, %v2360
    %2362 = vmatmul.bf16.gmra.mxu0 %v2287
    %v2363 = vpop.f32.mrf.mxu0
    %v2364 = vadd.f32 0.0, %v2363
    %v2365 = vpop.f32.mrf.mxu0
    %2366 = vdwg.mxu0
    %2367 = vmatpush.bf16.msra.mxu0 0
    %2368 = vmatpush.bf16.msra.mxu0 0
    %2369 = vmatpush.bf16.msra.mxu0 0
    %2370 = vmatpush.bf16.msra.mxu0 0
    %2371 = vmatpush.bf16.msra.mxu0 0
    %2372 = vmatpush.bf16.msra.mxu0 0
    %2373 = vmatpush.bf16.msra.mxu0 %v2316
    %2374 = vmatpush.bf16.msra.mxu0 %v2315
    %2375 = vmatmul.bf16.gmra.mxu0 %v1439
    %v2376 = vpop.f32.mrf.mxu0
    %v2377 = vadd.f32 0.0, %v2376
    %v2378 = vpop.f32.mrf.mxu0
    %2379 = vdwg.mxu0
    %2380 = vmatpush.bf16.msra.mxu0 0
    %2381 = vmatpush.bf16.msra.mxu0 0
    %2382 = vmatpush.bf16.msra.mxu0 0
    %2383 = vmatpush.bf16.msra.mxu0 0
    %2384 = vmatpush.bf16.msra.mxu0 0
    %2385 = vmatpush.bf16.msra.mxu0 0
    %2386 = vmatpush.bf16.msra.mxu0 %v2346
    %2387 = vmatpush.bf16.msra.mxu0 %v2345
    %2388 = vmatmul.bf16.gmra.mxu0 %v1439
    %v2389 = vpop.f32.mrf.mxu0
    %v2390 = vadd.f32 0.0, %v2389
    %v2391 = vpop.f32.mrf.mxu0
    %2392 = vdwg.mxu0
    %v2393 = vmul.f32 %v2299, %v2329
    %v2394 = vmul.f32 %v2301, %v2331
    %v2395 = vmul.f32 %v2304, %v2334
    %v2396 = vsel %vm527, %v2393, 0.0
    %2397 = vadd.xlane.f32.xlu0 %v2396
    %v2398 = vpop.xlane.xlu0 %2397
    %v2399 = vsel %vm527, %v2394, 0.0
    %2400 = vadd.xlane.f32.xlu0 %v2399
    %v2401 = vpop.xlane.xlu0 %2400
    %v2402 = vsel %vm527, %v2395, 0.0
    %2403 = vadd.xlane.f32.xlu0 %v2402
    %v2404 = vpop.xlane.xlu0 %2403
    %v2405 = vmul.f32 %v2398, 0.17677669
    %v2406 = vmul.f32 %v2401, 0.17677669
    %v2407 = vmul.f32 %v2404, 0.17677669
    %v2408 = vpack.c.bf16 %v2301, %v2299
    %v2409 = vpack.c.bf16 %v2304, %v2304
    %v2410 = vpack.c.bf16 %v2377, %v2377
    %v2412 = vsel %vm527, %v2408, 0
    %v2415 = vsel %vm527, %v2409, 0
    %v2418 = vsel %vm527, %v2410, 0
    %2420 = vmatpush.bf16.xpose.msra.mxu0 0
    %2421 = vmatpush.bf16.xpose.msra.mxu0 0
    %2422 = vmatpush.bf16.xpose.msra.mxu0 0
    %2423 = vmatpush.bf16.xpose.msra.mxu0 0
    %2424 = vmatpush.bf16.xpose.msra.mxu0 0
    %2425 = vmatpush.bf16.xpose.msra.mxu0 0
    %2426 = vmatpush.bf16.xpose.msra.mxu0 0
    %2427 = vmatpush.bf16.xpose.msra.mxu0 %v2418
    %2428 = vmatmul.bf16.gmra.mxu0 %v2412
    %v2429 = vpop.f32.mrf.mxu0
    %v2430 = vadd.f32 0.0, %v2429
    %v2431 = vpop.f32.mrf.mxu0
    %v2432 = vadd.f32 0.0, %v2431
    %2433 = vmatmul.bf16.gmra.mxu0 %v2415
    %v2434 = vpop.f32.mrf.mxu0
    %v2435 = vadd.f32 0.0, %v2434
    %v2436 = vpop.f32.mrf.mxu0
    %2437 = vdwg.mxu0
    %v2438 = vmul.f32 %v2430, 0.17677669
    %v2439 = vmul.f32 %v2432, 0.17677669
    %v2440 = vmul.f32 %v2435, 0.17677669
    %v2441 = vsel %vm1074, %v2438, -1e+30
    %v2442 = vsel %vm1074, %v2439, -1e+30
    %v2443 = vsel %vm1074, %v2440, -1e+30
    %v2444 = vsel %vm1077, %v2441, -inf
    %2445 = vmax.xlane.f32.xlu0 %v2444
    %v2446 = vpop.xlane.xlu0 %2445
    %v2447 = vsel %vm1077, %v2442, -inf
    %2448 = vmax.xlane.f32.xlu0 %v2447
    %v2449 = vpop.xlane.xlu0 %2448
    %v2450 = vsel %vm1077, %v2443, -inf
    %2451 = vmax.xlane.f32.xlu0 %v2450
    %v2452 = vpop.xlane.xlu0 %2451
    %v2453 = vmax.f32 %v2405, %v2446
    %v2454 = vmax.f32 %v2406, %v2449
    %v2455 = vmax.f32 %v2407, %v2452
    %v2456 = vsub.f32 %v2405, %v2453
    %v2457 = vsub.f32 %v2406, %v2454
    %v2458 = vsub.f32 %v2407, %v2455
    %v2459 = vmul.f32 %v2456, 1.442695
    %v2460 = vpow.pop %v2459
    %v2461 = vmul.f32 %v2457, 1.442695
    %v2462 = vpow.pop %v2461
    %v2463 = vmul.f32 %v2458, 1.442695
    %v2464 = vpow.pop %v2463
    %v2465 = vsub.f32 %v2441, %v2453
    %v2466 = vsub.f32 %v2442, %v2454
    %v2467 = vsub.f32 %v2443, %v2455
    %v2468 = vmul.f32 %v2465, 1.442695
    %v2469 = vpow.pop %v2468
    %v2470 = vmul.f32 %v2466, 1.442695
    %v2471 = vpow.pop %v2470
    %v2472 = vmul.f32 %v2467, 1.442695
    %v2473 = vpow.pop %v2472
    %v2474 = vsel %vm1077, %v2469, 0.0
    %2475 = vadd.xlane.f32.xlu0 %v2474
    %v2476 = vpop.xlane.xlu0 %2475
    %v2477 = vsel %vm1077, %v2471, 0.0
    %2478 = vadd.xlane.f32.xlu0 %v2477
    %v2479 = vpop.xlane.xlu0 %2478
    %v2480 = vsel %vm1077, %v2473, 0.0
    %2481 = vadd.xlane.f32.xlu0 %v2480
    %v2482 = vpop.xlane.xlu0 %2481
    %v2483 = vadd.f32 %v2460, %v2476
    %v2484 = vadd.f32 %v2462, %v2479
    %v2485 = vadd.f32 %v2464, %v2482
    %v2486 = vmul.f32 %v2460, %v2359
    %v2487 = vmul.f32 %v2462, %v2361
    %v2488 = vmul.f32 %v2464, %v2364
    %v2489 = vpack.c.bf16 %v2471, %v2469
    %v2490 = vpack.c.bf16 %v2473, %v2473
    %v2491 = vpack.c.bf16 %v2390, %v2390
    %v2493 = vsel %vm1077, %v2489, 0
    %v2496 = vsel %vm1077, %v2490, 0
    %v2499 = vsel %vm786, %v2491, 0
    %2501 = vmatpush.bf16.msra.mxu0 0
    %2502 = vmatpush.bf16.msra.mxu0 0
    %2503 = vmatpush.bf16.msra.mxu0 0
    %2504 = vmatpush.bf16.msra.mxu0 0
    %2505 = vmatpush.bf16.msra.mxu0 0
    %2506 = vmatpush.bf16.msra.mxu0 0
    %2507 = vmatpush.bf16.msra.mxu0 0
    %2508 = vmatpush.bf16.msra.mxu0 %v2499
    %2509 = vmatmul.bf16.gmra.mxu0 %v2493
    %v2510 = vpop.f32.mrf.mxu0
    %v2511 = vadd.f32 0.0, %v2510
    %v2512 = vpop.f32.mrf.mxu0
    %v2513 = vadd.f32 0.0, %v2512
    %2514 = vmatmul.bf16.gmra.mxu0 %v2496
    %v2515 = vpop.f32.mrf.mxu0
    %v2516 = vadd.f32 0.0, %v2515
    %v2517 = vpop.f32.mrf.mxu0
    %2518 = vdwg.mxu0
    %v2519 = vadd.f32 %v2486, %v2511
    %v2520 = vadd.f32 %v2487, %v2513
    %v2521 = vadd.f32 %v2488, %v2516
    %v2522 = vrcp.pop %v2483
    %v2523 = vrcp.pop %v2484
    %v2524 = vrcp.pop %v2485
    %v2525 = vmul.f32 %v2519, %v2522
    %v2526 = vmul.f32 %v2520, %v2523
    %v2527 = vmul.f32 %v2521, %v2524
    %v2528 = vadd.f32 %v2525, %v1834
    %v2529 = vadd.f32 %v2526, %v1835
    %v2530 = vadd.f32 %v2527, %v1836
    %v2531 = vsel %vm527, %v2528, 0.0
    %2532 = vadd.xlane.f32.xlu0 %v2531
    %v2533 = vpop.xlane.xlu0 %2532
    %v2534 = vsel %vm527, %v2529, 0.0
    %2535 = vadd.xlane.f32.xlu0 %v2534
    %v2536 = vpop.xlane.xlu0 %2535
    %v2537 = vsel %vm527, %v2530, 0.0
    %2538 = vadd.xlane.f32.xlu0 %v2537
    %v2539 = vpop.xlane.xlu0 %2538
    %v2540 = vmul.f32 %v2533, %v1150
    %v2541 = vmul.f32 %v2536, %v1150
    %v2542 = vmul.f32 %v2539, %v1150
    %v2543 = vsub.f32 %v2528, %v2540
    %v2544 = vsub.f32 %v2529, %v2541
    %v2545 = vsub.f32 %v2530, %v2542
    %v2546 = vmul.f32 %v2543, %v2543
    %v2547 = vmul.f32 %v2544, %v2544
    %v2548 = vmul.f32 %v2545, %v2545
    %v2549 = vsel %vm527, %v2546, 0.0
    %2550 = vadd.xlane.f32.xlu0 %v2549
    %v2551 = vpop.xlane.xlu0 %2550
    %v2552 = vsel %vm527, %v2547, 0.0
    %2553 = vadd.xlane.f32.xlu0 %v2552
    %v2554 = vpop.xlane.xlu0 %2553
    %v2555 = vsel %vm527, %v2548, 0.0
    %2556 = vadd.xlane.f32.xlu0 %v2555
    %v2557 = vpop.xlane.xlu0 %2556
    %v2558 = vmul.f32 %v2551, %v1150
    %v2559 = vmul.f32 %v2554, %v1150
    %v2560 = vmul.f32 %v2557, %v1150
    %v2561 = vadd.f32 %v2558, 1e-06
    %v2562 = vadd.f32 %v2559, 1e-06
    %v2563 = vadd.f32 %v2560, 1e-06
    %v2564 = vrsqrt.pop %v2561
    %v2565 = vmul.f32 %v2564, %v2561
    %v2566 = vmul.f32 %v2565, %v2564
    %v2567 = vmul.f32 0.5, %v2566
    %v2568 = vsub.f32 1.5, %v2567
    %v2569 = vmul.f32 %v2564, %v2568
    %vm2570 = vweird.f32 %v2561
    %vm2571 = vweird.f32 %v2564
    %vm2572 = vmor %vm2570, %vm2571
    %v2573 = vsel %vm2572, %v2564, %v2569
    %v2574 = vrsqrt.pop %v2562
    %v2575 = vmul.f32 %v2574, %v2562
    %v2576 = vmul.f32 %v2575, %v2574
    %v2577 = vmul.f32 0.5, %v2576
    %v2578 = vsub.f32 1.5, %v2577
    %v2579 = vmul.f32 %v2574, %v2578
    %vm2580 = vweird.f32 %v2562
    %vm2581 = vweird.f32 %v2574
    %vm2582 = vmor %vm2580, %vm2581
    %v2583 = vsel %vm2582, %v2574, %v2579
    %v2584 = vrsqrt.pop %v2563
    %v2585 = vmul.f32 %v2584, %v2563
    %v2586 = vmul.f32 %v2585, %v2584
    %v2587 = vmul.f32 0.5, %v2586
    %v2588 = vsub.f32 1.5, %v2587
    %v2589 = vmul.f32 %v2584, %v2588
    %vm2590 = vweird.f32 %v2563
    %vm2591 = vweird.f32 %v2584
    %vm2592 = vmor %vm2590, %vm2591
    %v2593 = vsel %vm2592, %v2584, %v2589
    %v2594 = vmul.f32 %v2543, %v2573
    %v2595 = vmul.f32 %v2544, %v2583
    %v2596 = vmul.f32 %v2545, %v2593
    %v2597 = vperm.slane %v2253, 0
    %v2598 = vmul.f32 %v2594, %v2597
    %v2599 = vmul.f32 %v2595, %v2597
    %v2600 = vmul.f32 %v2596, %v2597
    %v2601 = vperm.slane %v2254, 0
    %v2602 = vadd.f32 %v2598, %v2601
    %v2603 = vadd.f32 %v2599, %v2601
    %v2604 = vadd.f32 %v2600, %v2601
    %v2605 = vpack.c.bf16 %v2603, %v2602
    %v2606 = vpack.c.bf16 %v2604, %v2604
    %v2607 = vperm.slane %v2260, 0
    %v2612 = vunpack.c.l.b16 %v2256
    %v2613 = vunpack.c.l.b16 %v2257
    %v2614 = vunpack.c.l.b16 %v2258
    %v2615 = vunpack.c.l.b16 %v2259
    %v2616 = vpack.c.b16 %v2613, %v2612
    %v2617 = vpack.c.b16 %v2615, %v2614
    %v2621 = vsel %vm527, %v2605, 0
    %v2624 = vsel %vm527, %v2606, 0
    %2626 = vmatpush.bf16.msra.mxu0 0
    %2627 = vmatpush.bf16.msra.mxu0 0
    %2628 = vmatpush.bf16.msra.mxu0 0
    %2629 = vmatpush.bf16.msra.mxu0 0
    %2630 = vmatpush.bf16.msra.mxu0 0
    %2631 = vmatpush.bf16.msra.mxu0 0
    %2632 = vmatpush.bf16.msra.mxu0 %v2617
    %2633 = vmatpush.bf16.msra.mxu0 %v2616
    %2634 = vmatmul.bf16.gmra.mxu0 %v2621
    %v2635 = vpop.f32.mrf.mxu0
    %v2636 = vadd.f32 %v2607, %v2635
    %v2637 = vpop.f32.mrf.mxu0
    %v2638 = vadd.f32 %v2607, %v2637
    %2639 = vmatmul.bf16.gmra.mxu0 %v2624
    %v2640 = vpop.f32.mrf.mxu0
    %v2641 = vadd.f32 %v2607, %v2640
    %v2642 = vpop.f32.mrf.mxu0
    %2643 = vdwg.mxu0
    %v2644 = vmax.f32 %v2636, 0.0
    %v2645 = vmax.f32 %v2638, 0.0
    %v2646 = vmax.f32 %v2641, 0.0
    %v2647 = vpack.c.bf16 %v2645, %v2644
    %v2648 = vpack.c.bf16 %v2646, %v2646
    %v2649 = vperm.slane %v2266, 0
    %v2654 = vunpack.c.l.b16 %v2262
    %v2655 = vunpack.c.l.b16 %v2263
    %v2656 = vunpack.c.l.b16 %v2264
    %v2657 = vunpack.c.l.b16 %v2265
    %v2658 = vpack.c.b16 %v2655, %v2654
    %v2659 = vpack.c.b16 %v2657, %v2656
    %v2663 = vsel %vm527, %v2647, 0
    %v2666 = vsel %vm527, %v2648, 0
    %2668 = vmatpush.bf16.msra.mxu0 0
    %2669 = vmatpush.bf16.msra.mxu0 0
    %2670 = vmatpush.bf16.msra.mxu0 0
    %2671 = vmatpush.bf16.msra.mxu0 0
    %2672 = vmatpush.bf16.msra.mxu0 0
    %2673 = vmatpush.bf16.msra.mxu0 0
    %2674 = vmatpush.bf16.msra.mxu0 %v2659
    %2675 = vmatpush.bf16.msra.mxu0 %v2658
    %2676 = vmatmul.bf16.gmra.mxu0 %v2663
    %v2677 = vpop.f32.mrf.mxu0
    %v2678 = vadd.f32 %v2649, %v2677
    %v2679 = vpop.f32.mrf.mxu0
    %v2680 = vadd.f32 %v2649, %v2679
    %2681 = vmatmul.bf16.gmra.mxu0 %v2666
    %v2682 = vpop.f32.mrf.mxu0
    %v2683 = vadd.f32 %v2649, %v2682
    %v2684 = vpop.f32.mrf.mxu0
    %2685 = vdwg.mxu0
    %v2686 = vadd.f32 %v2678, %v2602
    %v2687 = vadd.f32 %v2680, %v2603
    %v2688 = vadd.f32 %v2683, %v2604
    %v2689 = vsel %vm527, %v2686, 0.0
    %2690 = vadd.xlane.f32.xlu0 %v2689
    %v2691 = vpop.xlane.xlu0 %2690
    %v2692 = vsel %vm527, %v2687, 0.0
    %2693 = vadd.xlane.f32.xlu0 %v2692
    %v2694 = vpop.xlane.xlu0 %2693
    %v2695 = vsel %vm527, %v2688, 0.0
    %2696 = vadd.xlane.f32.xlu0 %v2695
    %v2697 = vpop.xlane.xlu0 %2696
    %v2698 = vmul.f32 %v2691, %v1150
    %v2699 = vmul.f32 %v2694, %v1150
    %v2700 = vmul.f32 %v2697, %v1150
    %v2701 = vsub.f32 %v2686, %v2698
    %v2702 = vsub.f32 %v2687, %v2699
    %v2703 = vsub.f32 %v2688, %v2700
    %v2704 = vmul.f32 %v2701, %v2701
    %v2705 = vmul.f32 %v2702, %v2702
    %v2706 = vmul.f32 %v2703, %v2703
    %v2707 = vsel %vm527, %v2704, 0.0
    %2708 = vadd.xlane.f32.xlu0 %v2707
    %v2709 = vpop.xlane.xlu0 %2708
    %v2710 = vsel %vm527, %v2705, 0.0
    %2711 = vadd.xlane.f32.xlu0 %v2710
    %v2712 = vpop.xlane.xlu0 %2711
    %v2713 = vsel %vm527, %v2706, 0.0
    %2714 = vadd.xlane.f32.xlu0 %v2713
    %v2715 = vpop.xlane.xlu0 %2714
    %v2716 = vmul.f32 %v2709, %v1150
    %v2717 = vmul.f32 %v2712, %v1150
    %v2718 = vmul.f32 %v2715, %v1150
    %v2719 = vadd.f32 %v2716, 1e-06
    %v2720 = vadd.f32 %v2717, 1e-06
    %v2721 = vadd.f32 %v2718, 1e-06
    %v2722 = vrsqrt.pop %v2719
    %v2723 = vmul.f32 %v2722, %v2719
    %v2724 = vmul.f32 %v2723, %v2722
    %v2725 = vmul.f32 0.5, %v2724
    %v2726 = vsub.f32 1.5, %v2725
    %v2727 = vmul.f32 %v2722, %v2726
    %vm2728 = vweird.f32 %v2719
    %vm2729 = vweird.f32 %v2722
    %vm2730 = vmor %vm2728, %vm2729
    %v2731 = vsel %vm2730, %v2722, %v2727
    %v2732 = vrsqrt.pop %v2720
    %v2733 = vmul.f32 %v2732, %v2720
    %v2734 = vmul.f32 %v2733, %v2732
    %v2735 = vmul.f32 0.5, %v2734
    %v2736 = vsub.f32 1.5, %v2735
    %v2737 = vmul.f32 %v2732, %v2736
    %vm2738 = vweird.f32 %v2720
    %vm2739 = vweird.f32 %v2732
    %vm2740 = vmor %vm2738, %vm2739
    %v2741 = vsel %vm2740, %v2732, %v2737
    %v2742 = vrsqrt.pop %v2721
    %v2743 = vmul.f32 %v2742, %v2721
    %v2744 = vmul.f32 %v2743, %v2742
    %v2745 = vmul.f32 0.5, %v2744
    %v2746 = vsub.f32 1.5, %v2745
    %v2747 = vmul.f32 %v2742, %v2746
    %vm2748 = vweird.f32 %v2721
    %vm2749 = vweird.f32 %v2742
    %vm2750 = vmor %vm2748, %vm2749
    %v2751 = vsel %vm2750, %v2742, %v2747
    %v2752 = vmul.f32 %v2701, %v2731
    %v2753 = vmul.f32 %v2702, %v2741
    %v2754 = vmul.f32 %v2703, %v2751
    %v2755 = vperm.slane %v2267, 0
    %v2756 = vmul.f32 %v2752, %v2755
    %v2757 = vmul.f32 %v2753, %v2755
    %v2758 = vmul.f32 %v2754, %v2755
    %v2759 = vperm.slane %v2268, 0
    %v2760 = vadd.f32 %v2756, %v2759
    %v2761 = vadd.f32 %v2757, %v2759
    %v2762 = vadd.f32 %v2758, %v2759
    %s2763 = scalar_lea.vmem [#allocation19], 96
    %v2764 = vld [vmem:[%s2763] sm:$0xf]
    %v2765 = vld [vmem:[%s2763 + $0x4] sm:$0xf]
    %v2766 = vld [vmem:[%s2763 + $0x8] sm:$0xf]
    %v2767 = vld [vmem:[%s2763 + $0xc] sm:$0xf]
    %s2768 = scalar_lea.vmem [#allocation19], 112
    %v2769 = vld [vmem:[%s2768] sm:$0xf]
    %v2770 = vld [vmem:[%s2768 + $0x4] sm:$0xf]
    %v2771 = vld [vmem:[%s2768 + $0x8] sm:$0xf]
    %v2772 = vld [vmem:[%s2768 + $0xc] sm:$0xf]
    %s2773 = scalar_lea.vmem [#allocation19], 128
    %v2774 = vld [vmem:[%s2773] sm:$0xf]
    %v2775 = vld [vmem:[%s2773 + $0x4] sm:$0xf]
    %v2776 = vld [vmem:[%s2773 + $0x8] sm:$0xf]
    %v2777 = vld [vmem:[%s2773 + $0xc] sm:$0xf]
    %v2778 = vld [vmem:[#allocation22 + $0xc] sm:$0x1]
    %v2779 = vld [vmem:[#allocation22 + $0xd] sm:$0x1]
    %s2780 = scalar_lea.vmem [#allocation21], 64
    %v2781 = vld [vmem:[%s2780] sm:$0xf]
    %v2782 = vld [vmem:[%s2780 + $0x4] sm:$0xf]
    %v2783 = vld [vmem:[%s2780 + $0x8] sm:$0xf]
    %v2784 = vld [vmem:[%s2780 + $0xc] sm:$0xf]
    %v2785 = vld [vmem:[#allocation22 + $0xe] sm:$0x1]
    %s2786 = scalar_lea.vmem [#allocation21], 80
    %v2787 = vld [vmem:[%s2786] sm:$0xf]
    %v2788 = vld [vmem:[%s2786 + $0x4] sm:$0xf]
    %v2789 = vld [vmem:[%s2786 + $0x8] sm:$0xf]
    %v2790 = vld [vmem:[%s2786 + $0xc] sm:$0xf]
    %v2791 = vld [vmem:[#allocation22 + $0xf] sm:$0x1]
    %v2792 = vld [vmem:[#allocation22 + $0x10] sm:$0x1]
    %v2793 = vld [vmem:[#allocation22 + $0x11] sm:$0x1]
    %v2794 = vpack.c.bf16 %v2237, %v2236
    %v2799 = vunpack.c.l.b16 %v2764
    %v2800 = vunpack.c.l.b16 %v2765
    %v2801 = vunpack.c.l.b16 %v2766
    %v2802 = vunpack.c.l.b16 %v2767
    %v2803 = vpack.c.b16 %v2800, %v2799
    %v2804 = vpack.c.b16 %v2802, %v2801
    %v2808 = vsel %vm527, %v2794, 0
    %2810 = vmatpush.bf16.msra.mxu0 0
    %2811 = vmatpush.bf16.msra.mxu0 0
    %2812 = vmatpush.bf16.msra.mxu0 0
    %2813 = vmatpush.bf16.msra.mxu0 0
    %2814 = vmatpush.bf16.msra.mxu0 0
    %2815 = vmatpush.bf16.msra.mxu0 0
    %2816 = vmatpush.bf16.msra.mxu0 %v2804
    %2817 = vmatpush.bf16.msra.mxu0 %v2803
    %2818 = vmatmul.bf16.gmra.mxu0 %v2808
    %v2819 = vpop.f32.mrf.mxu0
    %v2820 = vadd.f32 0.0, %v2819
    %v2821 = vpop.f32.mrf.mxu0
    %v2822 = vadd.f32 0.0, %v2821
    %2823 = vdwg.mxu0
    %v2828 = vunpack.c.l.b16 %v2769
    %v2829 = vunpack.c.l.b16 %v2770
    %v2830 = vunpack.c.l.b16 %v2771
    %v2831 = vunpack.c.l.b16 %v2772
    %v2832 = vpack.c.b16 %v2829, %v2828
    %v2833 = vpack.c.b16 %v2831, %v2830
    %2836 = vmatpush.bf16.msra.mxu0 0
    %2837 = vmatpush.bf16.msra.mxu0 0
    %2838 = vmatpush.bf16.msra.mxu0 0
    %2839 = vmatpush.bf16.msra.mxu0 0
    %2840 = vmatpush.bf16.msra.mxu0 0
    %2841 = vmatpush.bf16.msra.mxu0 0
    %2842 = vmatpush.bf16.msra.mxu0 %v2833
    %2843 = vmatpush.bf16.msra.mxu0 %v2832
    %2844 = vmatmul.bf16.gmra.mxu0 %v2808
    %v2845 = vpop.f32.mrf.mxu0
    %v2846 = vadd.f32 0.0, %v2845
    %v2847 = vpop.f32.mrf.mxu0
    %v2848 = vadd.f32 0.0, %v2847
    %2849 = vdwg.mxu0
    %v2854 = vunpack.c.l.b16 %v2774
    %v2855 = vunpack.c.l.b16 %v2775
    %v2856 = vunpack.c.l.b16 %v2776
    %v2857 = vunpack.c.l.b16 %v2777
    %v2858 = vpack.c.b16 %v2855, %v2854
    %v2859 = vpack.c.b16 %v2857, %v2856
    %2862 = vmatpush.bf16.msra.mxu0 0
    %2863 = vmatpush.bf16.msra.mxu0 0
    %2864 = vmatpush.bf16.msra.mxu0 0
    %2865 = vmatpush.bf16.msra.mxu0 0
    %2866 = vmatpush.bf16.msra.mxu0 0
    %2867 = vmatpush.bf16.msra.mxu0 0
    %2868 = vmatpush.bf16.msra.mxu0 %v2859
    %2869 = vmatpush.bf16.msra.mxu0 %v2858
    %2870 = vmatmul.bf16.gmra.mxu0 %v2808
    %v2871 = vpop.f32.mrf.mxu0
    %v2872 = vadd.f32 0.0, %v2871
    %v2873 = vpop.f32.mrf.mxu0
    %v2874 = vadd.f32 0.0, %v2873
    %2875 = vdwg.mxu0
    %2876 = vmatpush.bf16.msra.mxu0 0
    %2877 = vmatpush.bf16.msra.mxu0 0
    %2878 = vmatpush.bf16.msra.mxu0 0
    %2879 = vmatpush.bf16.msra.mxu0 0
    %2880 = vmatpush.bf16.msra.mxu0 0
    %2881 = vmatpush.bf16.msra.mxu0 0
    %2882 = vmatpush.bf16.msra.mxu0 %v2833
    %2883 = vmatpush.bf16.msra.mxu0 %v2832
    %2884 = vmatmul.bf16.gmra.mxu0 %v1012
    %v2885 = vpop.f32.mrf.mxu0
    %v2886 = vadd.f32 0.0, %v2885
    %v2887 = vpop.f32.mrf.mxu0
    %2888 = vdwg.mxu0
    %2889 = vmatpush.bf16.msra.mxu0 0
    %2890 = vmatpush.bf16.msra.mxu0 0
    %2891 = vmatpush.bf16.msra.mxu0 0
    %2892 = vmatpush.bf16.msra.mxu0 0
    %2893 = vmatpush.bf16.msra.mxu0 0
    %2894 = vmatpush.bf16.msra.mxu0 0
    %2895 = vmatpush.bf16.msra.mxu0 %v2859
    %2896 = vmatpush.bf16.msra.mxu0 %v2858
    %2897 = vmatmul.bf16.gmra.mxu0 %v1012
    %v2898 = vpop.f32.mrf.mxu0
    %v2899 = vadd.f32 0.0, %v2898
    %v2900 = vpop.f32.mrf.mxu0
    %2901 = vdwg.mxu0
    %v2902 = vmul.f32 %v2820, %v2846
    %v2903 = vmul.f32 %v2822, %v2848
    %v2904 = vsel %vm527, %v2902, 0.0
    %2905 = vadd.xlane.f32.xlu0 %v2904
    %v2906 = vpop.xlane.xlu0 %2905
    %v2907 = vsel %vm527, %v2903, 0.0
    %2908 = vadd.xlane.f32.xlu0 %v2907
    %v2909 = vpop.xlane.xlu0 %2908
    %v2910 = vmul.f32 %v2906, 0.17677669
    %v2911 = vmul.f32 %v2909, 0.17677669
    %v2912 = vpack.c.bf16 %v2822, %v2820
    %v2913 = vpack.c.bf16 %v2886, %v2886
    %v2915 = vsel %vm527, %v2912, 0
    %v2918 = vsel %vm527, %v2913, 0
    %2920 = vmatpush.bf16.xpose.msra.mxu0 0
    %2921 = vmatpush.bf16.xpose.msra.mxu0 0
    %2922 = vmatpush.bf16.xpose.msra.mxu0 0
    %2923 = vmatpush.bf16.xpose.msra.mxu0 0
    %2924 = vmatpush.bf16.xpose.msra.mxu0 0
    %2925 = vmatpush.bf16.xpose.msra.mxu0 0
    %2926 = vmatpush.bf16.xpose.msra.mxu0 0
    %2927 = vmatpush.bf16.xpose.msra.mxu0 %v2918
    %2928 = vmatmul.bf16.gmra.mxu0 %v2915
    %v2929 = vpop.f32.mrf.mxu0
    %v2930 = vadd.f32 0.0, %v2929
    %v2931 = vpop.f32.mrf.mxu0
    %v2932 = vadd.f32 0.0, %v2931
    %2933 = vdwg.mxu0
    %v2934 = vmul.f32 %v2930, 0.17677669
    %v2935 = vmul.f32 %v2932, 0.17677669
    %v2936 = vsel %vm1074, %v2934, -1e+30
    %v2937 = vsel %vm1074, %v2935, -1e+30
    %v2938 = vsel %vm1077, %v2936, -inf
    %2939 = vmax.xlane.f32.xlu0 %v2938
    %v2940 = vpop.xlane.xlu0 %2939
    %v2941 = vsel %vm1077, %v2937, -inf
    %2942 = vmax.xlane.f32.xlu0 %v2941
    %v2943 = vpop.xlane.xlu0 %2942
    %v2944 = vmax.f32 %v2910, %v2940
    %v2945 = vmax.f32 %v2911, %v2943
    %v2946 = vsub.f32 %v2910, %v2944
    %v2947 = vsub.f32 %v2911, %v2945
    %v2948 = vmul.f32 %v2946, 1.442695
    %v2949 = vpow.pop %v2948
    %v2950 = vmul.f32 %v2947, 1.442695
    %v2951 = vpow.pop %v2950
    %v2952 = vsub.f32 %v2936, %v2944
    %v2953 = vsub.f32 %v2937, %v2945
    %v2954 = vmul.f32 %v2952, 1.442695
    %v2955 = vpow.pop %v2954
    %v2956 = vmul.f32 %v2953, 1.442695
    %v2957 = vpow.pop %v2956
    %v2958 = vsel %vm1077, %v2955, 0.0
    %2959 = vadd.xlane.f32.xlu0 %v2958
    %v2960 = vpop.xlane.xlu0 %2959
    %v2961 = vsel %vm1077, %v2957, 0.0
    %2962 = vadd.xlane.f32.xlu0 %v2961
    %v2963 = vpop.xlane.xlu0 %2962
    %v2964 = vadd.f32 %v2949, %v2960
    %v2965 = vadd.f32 %v2951, %v2963
    %v2966 = vmul.f32 %v2949, %v2872
    %v2967 = vmul.f32 %v2951, %v2874
    %v2968 = vpack.c.bf16 %v2957, %v2955
    %v2969 = vpack.c.bf16 %v2899, %v2899
    %v2971 = vsel %vm1077, %v2968, 0
    %v2974 = vsel %vm786, %v2969, 0
    %2976 = vmatpush.bf16.msra.mxu0 0
    %2977 = vmatpush.bf16.msra.mxu0 0
    %2978 = vmatpush.bf16.msra.mxu0 0
    %2979 = vmatpush.bf16.msra.mxu0 0
    %2980 = vmatpush.bf16.msra.mxu0 0
    %2981 = vmatpush.bf16.msra.mxu0 0
    %2982 = vmatpush.bf16.msra.mxu0 0
    %2983 = vmatpush.bf16.msra.mxu0 %v2974
    %2984 = vmatmul.bf16.gmra.mxu0 %v2971
    %v2985 = vpop.f32.mrf.mxu0
    %v2986 = vadd.f32 0.0, %v2985
    %v2987 = vpop.f32.mrf.mxu0
    %v2988 = vadd.f32 0.0, %v2987
    %2989 = vdwg.mxu0
    %v2990 = vadd.f32 %v2966, %v2986
    %v2991 = vadd.f32 %v2967, %v2988
    %v2992 = vrcp.pop %v2964
    %v2993 = vrcp.pop %v2965
    %v2994 = vmul.f32 %v2990, %v2992
    %v2995 = vmul.f32 %v2991, %v2993
    %v2996 = vadd.f32 %v2994, %v2236
    %v2997 = vadd.f32 %v2995, %v2237
    %v2998 = vsel %vm527, %v2996, 0.0
    %2999 = vadd.xlane.f32.xlu0 %v2998
    %v3000 = vpop.xlane.xlu0 %2999
    %v3001 = vsel %vm527, %v2997, 0.0
    %3002 = vadd.xlane.f32.xlu0 %v3001
    %v3003 = vpop.xlane.xlu0 %3002
    %v3004 = vmul.f32 %v3000, %v1150
    %v3005 = vmul.f32 %v3003, %v1150
    %v3006 = vsub.f32 %v2996, %v3004
    %v3007 = vsub.f32 %v2997, %v3005
    %v3008 = vmul.f32 %v3006, %v3006
    %v3009 = vmul.f32 %v3007, %v3007
    %v3010 = vsel %vm527, %v3008, 0.0
    %3011 = vadd.xlane.f32.xlu0 %v3010
    %v3012 = vpop.xlane.xlu0 %3011
    %v3013 = vsel %vm527, %v3009, 0.0
    %3014 = vadd.xlane.f32.xlu0 %v3013
    %v3015 = vpop.xlane.xlu0 %3014
    %v3016 = vmul.f32 %v3012, %v1150
    %v3017 = vmul.f32 %v3015, %v1150
    %v3018 = vadd.f32 %v3016, 1e-06
    %v3019 = vadd.f32 %v3017, 1e-06
    %v3020 = vrsqrt.pop %v3018
    %v3021 = vmul.f32 %v3020, %v3018
    %v3022 = vmul.f32 %v3021, %v3020
    %v3023 = vmul.f32 0.5, %v3022
    %v3024 = vsub.f32 1.5, %v3023
    %v3025 = vmul.f32 %v3020, %v3024
    %vm3026 = vweird.f32 %v3018
    %vm3027 = vweird.f32 %v3020
    %vm3028 = vmor %vm3026, %vm3027
    %v3029 = vsel %vm3028, %v3020, %v3025
    %v3030 = vrsqrt.pop %v3019
    %v3031 = vmul.f32 %v3030, %v3019
    %v3032 = vmul.f32 %v3031, %v3030
    %v3033 = vmul.f32 0.5, %v3032
    %v3034 = vsub.f32 1.5, %v3033
    %v3035 = vmul.f32 %v3030, %v3034
    %vm3036 = vweird.f32 %v3019
    %vm3037 = vweird.f32 %v3030
    %vm3038 = vmor %vm3036, %vm3037
    %v3039 = vsel %vm3038, %v3030, %v3035
    %v3040 = vmul.f32 %v3006, %v3029
    %v3041 = vmul.f32 %v3007, %v3039
    %v3042 = vperm.slane %v2778, 0
    %v3043 = vmul.f32 %v3040, %v3042
    %v3044 = vmul.f32 %v3041, %v3042
    %v3045 = vperm.slane %v2779, 0
    %v3046 = vadd.f32 %v3043, %v3045
    %v3047 = vadd.f32 %v3044, %v3045
    %v3048 = vpack.c.bf16 %v3047, %v3046
    %v3049 = vperm.slane %v2785, 0
    %v3054 = vunpack.c.l.b16 %v2781
    %v3055 = vunpack.c.l.b16 %v2782
    %v3056 = vunpack.c.l.b16 %v2783
    %v3057 = vunpack.c.l.b16 %v2784
    %v3058 = vpack.c.b16 %v3055, %v3054
    %v3059 = vpack.c.b16 %v3057, %v3056
    %v3063 = vsel %vm527, %v3048, 0
    %3065 = vmatpush.bf16.msra.mxu0 0
    %3066 = vmatpush.bf16.msra.mxu0 0
    %3067 = vmatpush.bf16.msra.mxu0 0
    %3068 = vmatpush.bf16.msra.mxu0 0
    %3069 = vmatpush.bf16.msra.mxu0 0
    %3070 = vmatpush.bf16.msra.mxu0 0
    %3071 = vmatpush.bf16.msra.mxu0 %v3059
    %3072 = vmatpush.bf16.msra.mxu0 %v3058
    %3073 = vmatmul.bf16.gmra.mxu0 %v3063
    %v3074 = vpop.f32.mrf.mxu0
    %v3075 = vadd.f32 %v3049, %v3074
    %v3076 = vpop.f32.mrf.mxu0
    %v3077 = vadd.f32 %v3049, %v3076
    %3078 = vdwg.mxu0
    %v3079 = vmax.f32 %v3075, 0.0
    %v3080 = vmax.f32 %v3077, 0.0
    %v3081 = vpack.c.bf16 %v3080, %v3079
    %v3082 = vperm.slane %v2791, 0
    %v3087 = vunpack.c.l.b16 %v2787
    %v3088 = vunpack.c.l.b16 %v2788
    %v3089 = vunpack.c.l.b16 %v2789
    %v3090 = vunpack.c.l.b16 %v2790
    %v3091 = vpack.c.b16 %v3088, %v3087
    %v3092 = vpack.c.b16 %v3090, %v3089
    %v3096 = vsel %vm527, %v3081, 0
    %3098 = vmatpush.bf16.msra.mxu0 0
    %3099 = vmatpush.bf16.msra.mxu0 0
    %3100 = vmatpush.bf16.msra.mxu0 0
    %3101 = vmatpush.bf16.msra.mxu0 0
    %3102 = vmatpush.bf16.msra.mxu0 0
    %3103 = vmatpush.bf16.msra.mxu0 0
    %3104 = vmatpush.bf16.msra.mxu0 %v3092
    %3105 = vmatpush.bf16.msra.mxu0 %v3091
    %3106 = vmatmul.bf16.gmra.mxu0 %v3096
    %v3107 = vpop.f32.mrf.mxu0
    %v3108 = vadd.f32 %v3082, %v3107
    %v3109 = vpop.f32.mrf.mxu0
    %v3110 = vadd.f32 %v3082, %v3109
    %3111 = vdwg.mxu0
    %v3112 = vadd.f32 %v3108, %v3046
    %v3113 = vadd.f32 %v3110, %v3047
    %v3114 = vsel %vm527, %v3112, 0.0
    %3115 = vadd.xlane.f32.xlu0 %v3114
    %v3116 = vpop.xlane.xlu0 %3115
    %v3117 = vsel %vm527, %v3113, 0.0
    %3118 = vadd.xlane.f32.xlu0 %v3117
    %v3119 = vpop.xlane.xlu0 %3118
    %v3120 = vmul.f32 %v3116, %v1150
    %v3121 = vmul.f32 %v3119, %v1150
    %v3122 = vsub.f32 %v3112, %v3120
    %v3123 = vsub.f32 %v3113, %v3121
    %v3124 = vmul.f32 %v3122, %v3122
    %v3125 = vmul.f32 %v3123, %v3123
    %v3126 = vsel %vm527, %v3124, 0.0
    %3127 = vadd.xlane.f32.xlu0 %v3126
    %v3128 = vpop.xlane.xlu0 %3127
    %v3129 = vsel %vm527, %v3125, 0.0
    %3130 = vadd.xlane.f32.xlu0 %v3129
    %v3131 = vpop.xlane.xlu0 %3130
    %v3132 = vmul.f32 %v3128, %v1150
    %v3133 = vmul.f32 %v3131, %v1150
    %v3134 = vadd.f32 %v3132, 1e-06
    %v3135 = vadd.f32 %v3133, 1e-06
    %v3136 = vrsqrt.pop %v3134
    %v3137 = vmul.f32 %v3136, %v3134
    %v3138 = vmul.f32 %v3137, %v3136
    %v3139 = vmul.f32 0.5, %v3138
    %v3140 = vsub.f32 1.5, %v3139
    %v3141 = vmul.f32 %v3136, %v3140
    %vm3142 = vweird.f32 %v3134
    %vm3143 = vweird.f32 %v3136
    %vm3144 = vmor %vm3142, %vm3143
    %v3145 = vsel %vm3144, %v3136, %v3141
    %v3146 = vrsqrt.pop %v3135
    %v3147 = vmul.f32 %v3146, %v3135
    %v3148 = vmul.f32 %v3147, %v3146
    %v3149 = vmul.f32 0.5, %v3148
    %v3150 = vsub.f32 1.5, %v3149
    %v3151 = vmul.f32 %v3146, %v3150
    %vm3152 = vweird.f32 %v3135
    %vm3153 = vweird.f32 %v3146
    %vm3154 = vmor %vm3152, %vm3153
    %v3155 = vsel %vm3154, %v3146, %v3151
    %v3156 = vmul.f32 %v3122, %v3145
    %v3157 = vmul.f32 %v3123, %v3155
    %v3158 = vperm.slane %v2792, 0
    %v3159 = vmul.f32 %v3156, %v3158
    %v3160 = vmul.f32 %v3157, %v3158
    %v3161 = vperm.slane %v2793, 0
    %v3162 = vadd.f32 %v3159, %v3161
    %v3163 = vadd.f32 %v3160, %v3161
    %s3164 = scalar_lea.vmem [#allocation24], 96
    %v3165 = vld [vmem:[%s3164] sm:$0xf]
    %v3166 = vld [vmem:[%s3164 + $0x4] sm:$0xf]
    %v3167 = vld [vmem:[%s3164 + $0x8] sm:$0xf]
    %v3168 = vld [vmem:[%s3164 + $0xc] sm:$0xf]
    %s3169 = scalar_lea.vmem [#allocation24], 112
    %v3170 = vld [vmem:[%s3169] sm:$0xf]
    %v3171 = vld [vmem:[%s3169 + $0x4] sm:$0xf]
    %v3172 = vld [vmem:[%s3169 + $0x8] sm:$0xf]
    %v3173 = vld [vmem:[%s3169 + $0xc] sm:$0xf]
    %s3174 = scalar_lea.vmem [#allocation24], 128
    %v3175 = vld [vmem:[%s3174] sm:$0xf]
    %v3176 = vld [vmem:[%s3174 + $0x4] sm:$0xf]
    %v3177 = vld [vmem:[%s3174 + $0x8] sm:$0xf]
    %v3178 = vld [vmem:[%s3174 + $0xc] sm:$0xf]
    %v3179 = vld [vmem:[#allocation27 + $0xc] sm:$0x1]
    %v3180 = vld [vmem:[#allocation27 + $0xd] sm:$0x1]
    %s3181 = scalar_lea.vmem [#allocation25], 64
    %v3182 = vld [vmem:[%s3181] sm:$0xf]
    %v3183 = vld [vmem:[%s3181 + $0x4] sm:$0xf]
    %v3184 = vld [vmem:[%s3181 + $0x8] sm:$0xf]
    %v3185 = vld [vmem:[%s3181 + $0xc] sm:$0xf]
    %v3186 = vld [vmem:[#allocation27 + $0xe] sm:$0x1]
    %s3187 = scalar_lea.vmem [#allocation25], 80
    %v3188 = vld [vmem:[%s3187] sm:$0xf]
    %v3189 = vld [vmem:[%s3187 + $0x4] sm:$0xf]
    %v3190 = vld [vmem:[%s3187 + $0x8] sm:$0xf]
    %v3191 = vld [vmem:[%s3187 + $0xc] sm:$0xf]
    %v3192 = vld [vmem:[#allocation27 + $0xf] sm:$0x1]
    %v3193 = vld [vmem:[#allocation27 + $0x10] sm:$0x1]
    %v3194 = vld [vmem:[#allocation27 + $0x11] sm:$0x1]
    %v3195 = vpack.c.bf16 %v2761, %v2760
    %v3196 = vpack.c.bf16 %v2762, %v2762
    %v3201 = vunpack.c.l.b16 %v3165
    %v3202 = vunpack.c.l.b16 %v3166
    %v3203 = vunpack.c.l.b16 %v3167
    %v3204 = vunpack.c.l.b16 %v3168
    %v3205 = vpack.c.b16 %v3202, %v3201
    %v3206 = vpack.c.b16 %v3204, %v3203
    %v3210 = vsel %vm527, %v3195, 0
    %v3213 = vsel %vm527, %v3196, 0
    %3215 = vmatpush.bf16.msra.mxu0 0
    %3216 = vmatpush.bf16.msra.mxu0 0
    %3217 = vmatpush.bf16.msra.mxu0 0
    %3218 = vmatpush.bf16.msra.mxu0 0
    %3219 = vmatpush.bf16.msra.mxu0 0
    %3220 = vmatpush.bf16.msra.mxu0 0
    %3221 = vmatpush.bf16.msra.mxu0 %v3206
    %3222 = vmatpush.bf16.msra.mxu0 %v3205
    %3223 = vmatmul.bf16.gmra.mxu0 %v3210
    %v3224 = vpop.f32.mrf.mxu0
    %v3225 = vadd.f32 0.0, %v3224
    %v3226 = vpop.f32.mrf.mxu0
    %v3227 = vadd.f32 0.0, %v3226
    %3228 = vmatmul.bf16.gmra.mxu0 %v3213
    %v3229 = vpop.f32.mrf.mxu0
    %v3230 = vadd.f32 0.0, %v3229
    %v3231 = vpop.f32.mrf.mxu0
    %3232 = vdwg.mxu0
    %v3237 = vunpack.c.l.b16 %v3170
    %v3238 = vunpack.c.l.b16 %v3171
    %v3239 = vunpack.c.l.b16 %v3172
    %v3240 = vunpack.c.l.b16 %v3173
    %v3241 = vpack.c.b16 %v3238, %v3237
    %v3242 = vpack.c.b16 %v3240, %v3239
    %3245 = vmatpush.bf16.msra.mxu0 0
    %3246 = vmatpush.bf16.msra.mxu0 0
    %3247 = vmatpush.bf16.msra.mxu0 0
    %3248 = vmatpush.bf16.msra.mxu0 0
    %3249 = vmatpush.bf16.msra.mxu0 0
    %3250 = vmatpush.bf16.msra.mxu0 0
    %3251 = vmatpush.bf16.msra.mxu0 %v3242
    %3252 = vmatpush.bf16.msra.mxu0 %v3241
    %3253 = vmatmul.bf16.gmra.mxu0 %v3210
    %v3254 = vpop.f32.mrf.mxu0
    %v3255 = vadd.f32 0.0, %v3254
    %v3256 = vpop.f32.mrf.mxu0
    %v3257 = vadd.f32 0.0, %v3256
    %3258 = vmatmul.bf16.gmra.mxu0 %v3213
    %v3259 = vpop.f32.mrf.mxu0
    %v3260 = vadd.f32 0.0, %v3259
    %v3261 = vpop.f32.mrf.mxu0
    %3262 = vdwg.mxu0
    %v3267 = vunpack.c.l.b16 %v3175
    %v3268 = vunpack.c.l.b16 %v3176
    %v3269 = vunpack.c.l.b16 %v3177
    %v3270 = vunpack.c.l.b16 %v3178
    %v3271 = vpack.c.b16 %v3268, %v3267
    %v3272 = vpack.c.b16 %v3270, %v3269
    %3275 = vmatpush.bf16.msra.mxu0 0
    %3276 = vmatpush.bf16.msra.mxu0 0
    %3277 = vmatpush.bf16.msra.mxu0 0
    %3278 = vmatpush.bf16.msra.mxu0 0
    %3279 = vmatpush.bf16.msra.mxu0 0
    %3280 = vmatpush.bf16.msra.mxu0 0
    %3281 = vmatpush.bf16.msra.mxu0 %v3272
    %3282 = vmatpush.bf16.msra.mxu0 %v3271
    %3283 = vmatmul.bf16.gmra.mxu0 %v3210
    %v3284 = vpop.f32.mrf.mxu0
    %v3285 = vadd.f32 0.0, %v3284
    %v3286 = vpop.f32.mrf.mxu0
    %v3287 = vadd.f32 0.0, %v3286
    %3288 = vmatmul.bf16.gmra.mxu0 %v3213
    %v3289 = vpop.f32.mrf.mxu0
    %v3290 = vadd.f32 0.0, %v3289
    %v3291 = vpop.f32.mrf.mxu0
    %3292 = vdwg.mxu0
    %3293 = vmatpush.bf16.msra.mxu0 0
    %3294 = vmatpush.bf16.msra.mxu0 0
    %3295 = vmatpush.bf16.msra.mxu0 0
    %3296 = vmatpush.bf16.msra.mxu0 0
    %3297 = vmatpush.bf16.msra.mxu0 0
    %3298 = vmatpush.bf16.msra.mxu0 0
    %3299 = vmatpush.bf16.msra.mxu0 %v3242
    %3300 = vmatpush.bf16.msra.mxu0 %v3241
    %3301 = vmatmul.bf16.gmra.mxu0 %v1439
    %v3302 = vpop.f32.mrf.mxu0
    %v3303 = vadd.f32 0.0, %v3302
    %v3304 = vpop.f32.mrf.mxu0
    %3305 = vdwg.mxu0
    %3306 = vmatpush.bf16.msra.mxu0 0
    %3307 = vmatpush.bf16.msra.mxu0 0
    %3308 = vmatpush.bf16.msra.mxu0 0
    %3309 = vmatpush.bf16.msra.mxu0 0
    %3310 = vmatpush.bf16.msra.mxu0 0
    %3311 = vmatpush.bf16.msra.mxu0 0
    %3312 = vmatpush.bf16.msra.mxu0 %v3272
    %3313 = vmatpush.bf16.msra.mxu0 %v3271
    %3314 = vmatmul.bf16.gmra.mxu0 %v1439
    %v3315 = vpop.f32.mrf.mxu0
    %v3316 = vadd.f32 0.0, %v3315
    %v3317 = vpop.f32.mrf.mxu0
    %3318 = vdwg.mxu0
    %v3319 = vmul.f32 %v3225, %v3255
    %v3320 = vmul.f32 %v3227, %v3257
    %v3321 = vmul.f32 %v3230, %v3260
    %v3322 = vsel %vm527, %v3319, 0.0
    %3323 = vadd.xlane.f32.xlu0 %v3322
    %v3324 = vpop.xlane.xlu0 %3323
    %v3325 = vsel %vm527, %v3320, 0.0
    %3326 = vadd.xlane.f32.xlu0 %v3325
    %v3327 = vpop.xlane.xlu0 %3326
    %v3328 = vsel %vm527, %v3321, 0.0
    %3329 = vadd.xlane.f32.xlu0 %v3328
    %v3330 = vpop.xlane.xlu0 %3329
    %v3331 = vmul.f32 %v3324, 0.17677669
    %v3332 = vmul.f32 %v3327, 0.17677669
    %v3333 = vmul.f32 %v3330, 0.17677669
    %v3334 = vpack.c.bf16 %v3227, %v3225
    %v3335 = vpack.c.bf16 %v3230, %v3230
    %v3336 = vpack.c.bf16 %v3303, %v3303
    %v3338 = vsel %vm527, %v3334, 0
    %v3341 = vsel %vm527, %v3335, 0
    %v3344 = vsel %vm527, %v3336, 0
    %3346 = vmatpush.bf16.xpose.msra.mxu0 0
    %3347 = vmatpush.bf16.xpose.msra.mxu0 0
    %3348 = vmatpush.bf16.xpose.msra.mxu0 0
    %3349 = vmatpush.bf16.xpose.msra.mxu0 0
    %3350 = vmatpush.bf16.xpose.msra.mxu0 0
    %3351 = vmatpush.bf16.xpose.msra.mxu0 0
    %3352 = vmatpush.bf16.xpose.msra.mxu0 0
    %3353 = vmatpush.bf16.xpose.msra.mxu0 %v3344
    %3354 = vmatmul.bf16.gmra.mxu0 %v3338
    %v3355 = vpop.f32.mrf.mxu0
    %v3356 = vadd.f32 0.0, %v3355
    %v3357 = vpop.f32.mrf.mxu0
    %v3358 = vadd.f32 0.0, %v3357
    %3359 = vmatmul.bf16.gmra.mxu0 %v3341
    %v3360 = vpop.f32.mrf.mxu0
    %v3361 = vadd.f32 0.0, %v3360
    %v3362 = vpop.f32.mrf.mxu0
    %3363 = vdwg.mxu0
    %v3364 = vmul.f32 %v3356, 0.17677669
    %v3365 = vmul.f32 %v3358, 0.17677669
    %v3366 = vmul.f32 %v3361, 0.17677669
    %v3367 = vsel %vm1074, %v3364, -1e+30
    %v3368 = vsel %vm1074, %v3365, -1e+30
    %v3369 = vsel %vm1074, %v3366, -1e+30
    %v3370 = vsel %vm1077, %v3367, -inf
    %3371 = vmax.xlane.f32.xlu0 %v3370
    %v3372 = vpop.xlane.xlu0 %3371
    %v3373 = vsel %vm1077, %v3368, -inf
    %3374 = vmax.xlane.f32.xlu0 %v3373
    %v3375 = vpop.xlane.xlu0 %3374
    %v3376 = vsel %vm1077, %v3369, -inf
    %3377 = vmax.xlane.f32.xlu0 %v3376
    %v3378 = vpop.xlane.xlu0 %3377
    %v3379 = vmax.f32 %v3331, %v3372
    %v3380 = vmax.f32 %v3332, %v3375
    %v3381 = vmax.f32 %v3333, %v3378
    %v3382 = vsub.f32 %v3331, %v3379
    %v3383 = vsub.f32 %v3332, %v3380
    %v3384 = vsub.f32 %v3333, %v3381
    %v3385 = vmul.f32 %v3382, 1.442695
    %v3386 = vpow.pop %v3385
    %v3387 = vmul.f32 %v3383, 1.442695
    %v3388 = vpow.pop %v3387
    %v3389 = vmul.f32 %v3384, 1.442695
    %v3390 = vpow.pop %v3389
    %v3391 = vsub.f32 %v3367, %v3379
    %v3392 = vsub.f32 %v3368, %v3380
    %v3393 = vsub.f32 %v3369, %v3381
    %v3394 = vmul.f32 %v3391, 1.442695
    %v3395 = vpow.pop %v3394
    %v3396 = vmul.f32 %v3392, 1.442695
    %v3397 = vpow.pop %v3396
    %v3398 = vmul.f32 %v3393, 1.442695
    %v3399 = vpow.pop %v3398
    %v3400 = vsel %vm1077, %v3395, 0.0
    %3401 = vadd.xlane.f32.xlu0 %v3400
    %v3402 = vpop.xlane.xlu0 %3401
    %v3403 = vsel %vm1077, %v3397, 0.0
    %3404 = vadd.xlane.f32.xlu0 %v3403
    %v3405 = vpop.xlane.xlu0 %3404
    %v3406 = vsel %vm1077, %v3399, 0.0
    %3407 = vadd.xlane.f32.xlu0 %v3406
    %v3408 = vpop.xlane.xlu0 %3407
    %v3409 = vadd.f32 %v3386, %v3402
    %v3410 = vadd.f32 %v3388, %v3405
    %v3411 = vadd.f32 %v3390, %v3408
    %v3412 = vmul.f32 %v3386, %v3285
    %v3413 = vmul.f32 %v3388, %v3287
    %v3414 = vmul.f32 %v3390, %v3290
    %v3415 = vpack.c.bf16 %v3397, %v3395
    %v3416 = vpack.c.bf16 %v3399, %v3399
    %v3417 = vpack.c.bf16 %v3316, %v3316
    %v3419 = vsel %vm1077, %v3415, 0
    %v3422 = vsel %vm1077, %v3416, 0
    %v3425 = vsel %vm786, %v3417, 0
    %3427 = vmatpush.bf16.msra.mxu0 0
    %3428 = vmatpush.bf16.msra.mxu0 0
    %3429 = vmatpush.bf16.msra.mxu0 0
    %3430 = vmatpush.bf16.msra.mxu0 0
    %3431 = vmatpush.bf16.msra.mxu0 0
    %3432 = vmatpush.bf16.msra.mxu0 0
    %3433 = vmatpush.bf16.msra.mxu0 0
    %3434 = vmatpush.bf16.msra.mxu0 %v3425
    %3435 = vmatmul.bf16.gmra.mxu0 %v3419
    %v3436 = vpop.f32.mrf.mxu0
    %v3437 = vadd.f32 0.0, %v3436
    %v3438 = vpop.f32.mrf.mxu0
    %v3439 = vadd.f32 0.0, %v3438
    %3440 = vmatmul.bf16.gmra.mxu0 %v3422
    %v3441 = vpop.f32.mrf.mxu0
    %v3442 = vadd.f32 0.0, %v3441
    %v3443 = vpop.f32.mrf.mxu0
    %3444 = vdwg.mxu0
    %v3445 = vadd.f32 %v3412, %v3437
    %v3446 = vadd.f32 %v3413, %v3439
    %v3447 = vadd.f32 %v3414, %v3442
    %v3448 = vrcp.pop %v3409
    %v3449 = vrcp.pop %v3410
    %v3450 = vrcp.pop %v3411
    %v3451 = vmul.f32 %v3445, %v3448
    %v3452 = vmul.f32 %v3446, %v3449
    %v3453 = vmul.f32 %v3447, %v3450
    %v3454 = vadd.f32 %v3451, %v2760
    %v3455 = vadd.f32 %v3452, %v2761
    %v3456 = vadd.f32 %v3453, %v2762
    %v3457 = vsel %vm527, %v3454, 0.0
    %3458 = vadd.xlane.f32.xlu0 %v3457
    %v3459 = vpop.xlane.xlu0 %3458
    %v3460 = vsel %vm527, %v3455, 0.0
    %3461 = vadd.xlane.f32.xlu0 %v3460
    %v3462 = vpop.xlane.xlu0 %3461
    %v3463 = vsel %vm527, %v3456, 0.0
    %3464 = vadd.xlane.f32.xlu0 %v3463
    %v3465 = vpop.xlane.xlu0 %3464
    %v3466 = vmul.f32 %v3459, %v1150
    %v3467 = vmul.f32 %v3462, %v1150
    %v3468 = vmul.f32 %v3465, %v1150
    %v3469 = vsub.f32 %v3454, %v3466
    %v3470 = vsub.f32 %v3455, %v3467
    %v3471 = vsub.f32 %v3456, %v3468
    %v3472 = vmul.f32 %v3469, %v3469
    %v3473 = vmul.f32 %v3470, %v3470
    %v3474 = vmul.f32 %v3471, %v3471
    %v3475 = vsel %vm527, %v3472, 0.0
    %3476 = vadd.xlane.f32.xlu0 %v3475
    %v3477 = vpop.xlane.xlu0 %3476
    %v3478 = vsel %vm527, %v3473, 0.0
    %3479 = vadd.xlane.f32.xlu0 %v3478
    %v3480 = vpop.xlane.xlu0 %3479
    %v3481 = vsel %vm527, %v3474, 0.0
    %3482 = vadd.xlane.f32.xlu0 %v3481
    %v3483 = vpop.xlane.xlu0 %3482
    %v3484 = vmul.f32 %v3477, %v1150
    %v3485 = vmul.f32 %v3480, %v1150
    %v3486 = vmul.f32 %v3483, %v1150
    %v3487 = vadd.f32 %v3484, 1e-06
    %v3488 = vadd.f32 %v3485, 1e-06
    %v3489 = vadd.f32 %v3486, 1e-06
    %v3490 = vrsqrt.pop %v3487
    %v3491 = vmul.f32 %v3490, %v3487
    %v3492 = vmul.f32 %v3491, %v3490
    %v3493 = vmul.f32 0.5, %v3492
    %v3494 = vsub.f32 1.5, %v3493
    %v3495 = vmul.f32 %v3490, %v3494
    %vm3496 = vweird.f32 %v3487
    %vm3497 = vweird.f32 %v3490
    %vm3498 = vmor %vm3496, %vm3497
    %v3499 = vsel %vm3498, %v3490, %v3495
    %v3500 = vrsqrt.pop %v3488
    %v3501 = vmul.f32 %v3500, %v3488
    %v3502 = vmul.f32 %v3501, %v3500
    %v3503 = vmul.f32 0.5, %v3502
    %v3504 = vsub.f32 1.5, %v3503
    %v3505 = vmul.f32 %v3500, %v3504
    %vm3506 = vweird.f32 %v3488
    %vm3507 = vweird.f32 %v3500
    %vm3508 = vmor %vm3506, %vm3507
    %v3509 = vsel %vm3508, %v3500, %v3505
    %v3510 = vrsqrt.pop %v3489
    %v3511 = vmul.f32 %v3510, %v3489
    %v3512 = vmul.f32 %v3511, %v3510
    %v3513 = vmul.f32 0.5, %v3512
    %v3514 = vsub.f32 1.5, %v3513
    %v3515 = vmul.f32 %v3510, %v3514
    %vm3516 = vweird.f32 %v3489
    %vm3517 = vweird.f32 %v3510
    %vm3518 = vmor %vm3516, %vm3517
    %v3519 = vsel %vm3518, %v3510, %v3515
    %v3520 = vmul.f32 %v3469, %v3499
    %v3521 = vmul.f32 %v3470, %v3509
    %v3522 = vmul.f32 %v3471, %v3519
    %v3523 = vperm.slane %v3179, 0
    %v3524 = vmul.f32 %v3520, %v3523
    %v3525 = vmul.f32 %v3521, %v3523
    %v3526 = vmul.f32 %v3522, %v3523
    %v3527 = vperm.slane %v3180, 0
    %v3528 = vadd.f32 %v3524, %v3527
    %v3529 = vadd.f32 %v3525, %v3527
    %v3530 = vadd.f32 %v3526, %v3527
    %v3531 = vpack.c.bf16 %v3529, %v3528
    %v3532 = vpack.c.bf16 %v3530, %v3530
    %v3533 = vperm.slane %v3186, 0
    %v3538 = vunpack.c.l.b16 %v3182
    %v3539 = vunpack.c.l.b16 %v3183
    %v3540 = vunpack.c.l.b16 %v3184
    %v3541 = vunpack.c.l.b16 %v3185
    %v3542 = vpack.c.b16 %v3539, %v3538
    %v3543 = vpack.c.b16 %v3541, %v3540
    %v3547 = vsel %vm527, %v3531, 0
    %v3550 = vsel %vm527, %v3532, 0
    %3552 = vmatpush.bf16.msra.mxu0 0
    %3553 = vmatpush.bf16.msra.mxu0 0
    %3554 = vmatpush.bf16.msra.mxu0 0
    %3555 = vmatpush.bf16.msra.mxu0 0
    %3556 = vmatpush.bf16.msra.mxu0 0
    %3557 = vmatpush.bf16.msra.mxu0 0
    %3558 = vmatpush.bf16.msra.mxu0 %v3543
    %3559 = vmatpush.bf16.msra.mxu0 %v3542
    %3560 = vmatmul.bf16.gmra.mxu0 %v3547
    %v3561 = vpop.f32.mrf.mxu0
    %v3562 = vadd.f32 %v3533, %v3561
    %v3563 = vpop.f32.mrf.mxu0
    %v3564 = vadd.f32 %v3533, %v3563
    %3565 = vmatmul.bf16.gmra.mxu0 %v3550
    %v3566 = vpop.f32.mrf.mxu0
    %v3567 = vadd.f32 %v3533, %v3566
    %v3568 = vpop.f32.mrf.mxu0
    %3569 = vdwg.mxu0
    %v3570 = vmax.f32 %v3562, 0.0
    %v3571 = vmax.f32 %v3564, 0.0
    %v3572 = vmax.f32 %v3567, 0.0
    %v3573 = vpack.c.bf16 %v3571, %v3570
    %v3574 = vpack.c.bf16 %v3572, %v3572
    %v3575 = vperm.slane %v3192, 0
    %v3580 = vunpack.c.l.b16 %v3188
    %v3581 = vunpack.c.l.b16 %v3189
    %v3582 = vunpack.c.l.b16 %v3190
    %v3583 = vunpack.c.l.b16 %v3191
    %v3584 = vpack.c.b16 %v3581, %v3580
    %v3585 = vpack.c.b16 %v3583, %v3582
    %v3589 = vsel %vm527, %v3573, 0
    %v3592 = vsel %vm527, %v3574, 0
    %3594 = vmatpush.bf16.msra.mxu0 0
    %3595 = vmatpush.bf16.msra.mxu0 0
    %3596 = vmatpush.bf16.msra.mxu0 0
    %3597 = vmatpush.bf16.msra.mxu0 0
    %3598 = vmatpush.bf16.msra.mxu0 0
    %3599 = vmatpush.bf16.msra.mxu0 0
    %3600 = vmatpush.bf16.msra.mxu0 %v3585
    %3601 = vmatpush.bf16.msra.mxu0 %v3584
    %3602 = vmatmul.bf16.gmra.mxu0 %v3589
    %v3603 = vpop.f32.mrf.mxu0
    %v3604 = vadd.f32 %v3575, %v3603
    %v3605 = vpop.f32.mrf.mxu0
    %v3606 = vadd.f32 %v3575, %v3605
    %3607 = vmatmul.bf16.gmra.mxu0 %v3592
    %v3608 = vpop.f32.mrf.mxu0
    %v3609 = vadd.f32 %v3575, %v3608
    %v3610 = vpop.f32.mrf.mxu0
    %3611 = vdwg.mxu0
    %v3612 = vadd.f32 %v3604, %v3528
    %v3613 = vadd.f32 %v3606, %v3529
    %v3614 = vadd.f32 %v3609, %v3530
    %v3615 = vsel %vm527, %v3612, 0.0
    %3616 = vadd.xlane.f32.xlu0 %v3615
    %v3617 = vpop.xlane.xlu0 %3616
    %v3618 = vsel %vm527, %v3613, 0.0
    %3619 = vadd.xlane.f32.xlu0 %v3618
    %v3620 = vpop.xlane.xlu0 %3619
    %v3621 = vsel %vm527, %v3614, 0.0
    %3622 = vadd.xlane.f32.xlu0 %v3621
    %v3623 = vpop.xlane.xlu0 %3622
    %v3624 = vmul.f32 %v3617, %v1150
    %v3625 = vmul.f32 %v3620, %v1150
    %v3626 = vmul.f32 %v3623, %v1150
    %v3627 = vsub.f32 %v3612, %v3624
    %v3628 = vsub.f32 %v3613, %v3625
    %v3629 = vsub.f32 %v3614, %v3626
    %v3630 = vmul.f32 %v3627, %v3627
    %v3631 = vmul.f32 %v3628, %v3628
    %v3632 = vmul.f32 %v3629, %v3629
    %v3633 = vsel %vm527, %v3630, 0.0
    %3634 = vadd.xlane.f32.xlu0 %v3633
    %v3635 = vpop.xlane.xlu0 %3634
    %v3636 = vsel %vm527, %v3631, 0.0
    %3637 = vadd.xlane.f32.xlu0 %v3636
    %v3638 = vpop.xlane.xlu0 %3637
    %v3639 = vsel %vm527, %v3632, 0.0
    %3640 = vadd.xlane.f32.xlu0 %v3639
    %v3641 = vpop.xlane.xlu0 %3640
    %v3642 = vmul.f32 %v3635, %v1150
    %v3643 = vmul.f32 %v3638, %v1150
    %v3644 = vmul.f32 %v3641, %v1150
    %v3645 = vadd.f32 %v3642, 1e-06
    %v3646 = vadd.f32 %v3643, 1e-06
    %v3647 = vadd.f32 %v3644, 1e-06
    %v3648 = vrsqrt.pop %v3645
    %v3649 = vmul.f32 %v3648, %v3645
    %v3650 = vmul.f32 %v3649, %v3648
    %v3651 = vmul.f32 0.5, %v3650
    %v3652 = vsub.f32 1.5, %v3651
    %v3653 = vmul.f32 %v3648, %v3652
    %vm3654 = vweird.f32 %v3645
    %vm3655 = vweird.f32 %v3648
    %vm3656 = vmor %vm3654, %vm3655
    %v3657 = vsel %vm3656, %v3648, %v3653
    %v3658 = vrsqrt.pop %v3646
    %v3659 = vmul.f32 %v3658, %v3646
    %v3660 = vmul.f32 %v3659, %v3658
    %v3661 = vmul.f32 0.5, %v3660
    %v3662 = vsub.f32 1.5, %v3661
    %v3663 = vmul.f32 %v3658, %v3662
    %vm3664 = vweird.f32 %v3646
    %vm3665 = vweird.f32 %v3658
    %vm3666 = vmor %vm3664, %vm3665
    %v3667 = vsel %vm3666, %v3658, %v3663
    %v3668 = vrsqrt.pop %v3647
    %v3669 = vmul.f32 %v3668, %v3647
    %v3670 = vmul.f32 %v3669, %v3668
    %v3671 = vmul.f32 0.5, %v3670
    %v3672 = vsub.f32 1.5, %v3671
    %v3673 = vmul.f32 %v3668, %v3672
    %vm3674 = vweird.f32 %v3647
    %vm3675 = vweird.f32 %v3668
    %vm3676 = vmor %vm3674, %vm3675
    %v3677 = vsel %vm3676, %v3668, %v3673
    %v3678 = vmul.f32 %v3627, %v3657
    %v3679 = vmul.f32 %v3628, %v3667
    %v3680 = vmul.f32 %v3629, %v3677
    %v3681 = vperm.slane %v3193, 0
    %v3682 = vmul.f32 %v3678, %v3681
    %v3683 = vmul.f32 %v3679, %v3681
    %v3684 = vmul.f32 %v3680, %v3681
    %v3685 = vperm.slane %v3194, 0
    %v3686 = vadd.f32 %v3682, %v3685
    %v3687 = vadd.f32 %v3683, %v3685
    %v3688 = vadd.f32 %v3684, %v3685
    %3689 = vmatpush.msra.mxu0 0.0
    %3690 = vmatpush.msra.mxu0 0.0
    %3691 = vmatpush.msra.mxu0 0.0
    %3692 = vmatpush.msra.mxu0 0.0
    %3693 = vmatpush.msra.mxu0 0.0
    %3694 = vmatpush.msra.mxu0 0.0
    %3695 = vmatpush.msra.mxu0 0.0
    %3696 = vmatpush.msra.mxu0 0.0
    %3697 = vmatpush.msra.mxu0 0.0
    %3698 = vmatpush.msra.mxu0 0.0
    %3699 = vmatpush.msra.mxu0 0.0
    %3700 = vmatpush.msra.mxu0 0.0
    %3701 = vmatpush.msra.mxu0 0.0
    %3702 = vmatpush.msra.mxu0 0.0
    %3703 = vmatpush.msra.mxu0 %v3163
    %3704 = vmatpush.msra.mxu0 %v3162
    %3705 = vmatmul.f32.gmra.mxu0 %v547
    %v3706 = vpop.f32.mrf.mxu0
    %v3707 = vadd.f32 0.0, %v3706
    %3708 = vmatmul.f32.gmra.mxu0 %v550
    %v3709 = vpop.f32.mrf.mxu0
    %v3710 = vadd.f32 0.0, %v3709
    %3711 = vmatmul.f32.gmra.mxu0 %v553
    %v3712 = vpop.f32.mrf.mxu0
    %v3713 = vadd.f32 0.0, %v3712
    %3714 = vdwg.mxu0
    %3715 = vmatpush.msra.mxu0 0.0
    %3716 = vmatpush.msra.mxu0 0.0
    %3717 = vmatpush.msra.mxu0 0.0
    %3718 = vmatpush.msra.mxu0 0.0
    %3719 = vmatpush.msra.mxu0 0.0
    %3720 = vmatpush.msra.mxu0 0.0
    %3721 = vmatpush.msra.mxu0 0.0
    %3722 = vmatpush.msra.mxu0 0.0
    %3723 = vmatpush.msra.mxu0 0.0
    %3724 = vmatpush.msra.mxu0 0.0
    %3725 = vmatpush.msra.mxu0 0.0
    %3726 = vmatpush.msra.mxu0 0.0
    %3727 = vmatpush.msra.mxu0 0.0
    %3728 = vmatpush.msra.mxu0 0.0
    %3729 = vmatpush.msra.mxu0 %v3163
    %3730 = vmatpush.msra.mxu0 %v3162
    %3731 = vmatmul.f32.gmra.mxu0 %v582
    %v3732 = vpop.f32.mrf.mxu0
    %v3733 = vadd.f32 0.0, %v3732
    %3734 = vmatmul.f32.gmra.mxu0 %v585
    %v3735 = vpop.f32.mrf.mxu0
    %v3736 = vadd.f32 0.0, %v3735
    %3737 = vmatmul.f32.gmra.mxu0 %v588
    %v3738 = vpop.f32.mrf.mxu0
    %v3739 = vadd.f32 0.0, %v3738
    %3740 = vdwg.mxu0
    %v3741 = vsub.f32 %v3733, %v3707
    %v3742 = vsub.f32 %v3736, %v3710
    %v3743 = vsub.f32 %v3739, %v3713
    %v3744 = vpack.c.bf16 %v3742, %v3741
    %v3745 = vpack.c.bf16 %v3743, %v3743
    %v3746 = vld [vmem:[%s43] sm:$0xf]
    %v3747 = vld [vmem:[%s43 + $0x4] sm:$0xf]
    %v3748 = vld [vmem:[%s43 + $0x8] sm:$0xf]
    %v3749 = vld [vmem:[%s43 + $0xc] sm:$0xf]
    %v3750 = vpack.c.bf16 %v3736, %v3733
    %v3751 = vpack.c.bf16 %v3739, %v3739
    %s3752 = scalar_lea.vmem %s43, 16
    %v3753 = vld [vmem:[%s3752] sm:$0xf]
    %v3754 = vld [vmem:[%s3752 + $0x4] sm:$0xf]
    %v3755 = vld [vmem:[%s3752 + $0x8] sm:$0xf]
    %v3756 = vld [vmem:[%s3752 + $0xc] sm:$0xf]
    %v3761 = vunpack.c.l.b16 %v3753
    %v3762 = vunpack.c.l.b16 %v3754
    %v3763 = vunpack.c.l.b16 %v3755
    %v3764 = vunpack.c.l.b16 %v3756
    %v3765 = vpack.c.b16 %v3762, %v3761
    %v3766 = vpack.c.b16 %v3764, %v3763
    %v3770 = vsel %vm527, %v3750, 0
    %v3773 = vsel %vm527, %v3751, 0
    %3775 = vmatpush.bf16.msra.mxu0 0
    %3776 = vmatpush.bf16.msra.mxu0 0
    %3777 = vmatpush.bf16.msra.mxu0 0
    %3778 = vmatpush.bf16.msra.mxu0 0
    %3779 = vmatpush.bf16.msra.mxu0 0
    %3780 = vmatpush.bf16.msra.mxu0 0
    %3781 = vmatpush.bf16.msra.mxu0 %v3766
    %3782 = vmatpush.bf16.msra.mxu0 %v3765
    %3783 = vmatmul.bf16.gmra.mxu0 %v3770
    %v3784 = vpop.f32.mrf.mxu0
    %v3785 = vadd.f32 0.0, %v3784
    %v3786 = vpop.f32.mrf.mxu0
    %v3787 = vadd.f32 0.0, %v3786
    %3788 = vmatmul.bf16.gmra.mxu0 %v3773
    %v3789 = vpop.f32.mrf.mxu0
    %v3790 = vadd.f32 0.0, %v3789
    %v3791 = vpop.f32.mrf.mxu0
    %3792 = vdwg.mxu0
    %v3797 = vunpack.c.l.b16 %v3746
    %v3798 = vunpack.c.l.b16 %v3747
    %v3799 = vunpack.c.l.b16 %v3748
    %v3800 = vunpack.c.l.b16 %v3749
    %v3801 = vpack.c.b16 %v3798, %v3797
    %v3802 = vpack.c.b16 %v3800, %v3799
    %v3806 = vsel %vm527, %v3744, 0
    %v3809 = vsel %vm527, %v3745, 0
    %3811 = vmatpush.bf16.msra.mxu0 0
    %3812 = vmatpush.bf16.msra.mxu0 0
    %3813 = vmatpush.bf16.msra.mxu0 0
    %3814 = vmatpush.bf16.msra.mxu0 0
    %3815 = vmatpush.bf16.msra.mxu0 0
    %3816 = vmatpush.bf16.msra.mxu0 0
    %3817 = vmatpush.bf16.msra.mxu0 %v3802
    %3818 = vmatpush.bf16.msra.mxu0 %v3801
    %3819 = vmatmul.bf16.gmra.mxu0 %v3806
    %v3820 = vpop.f32.mrf.mxu0
    %v3821 = vadd.f32 %v3785, %v3820
    %v3822 = vpop.f32.mrf.mxu0
    %v3823 = vadd.f32 %v3787, %v3822
    %3824 = vmatmul.bf16.gmra.mxu0 %v3809
    %v3825 = vpop.f32.mrf.mxu0
    %v3826 = vadd.f32 %v3790, %v3825
    %v3827 = vpop.f32.mrf.mxu0
    %3828 = vdwg.mxu0
    %v3829 = vpack.c.bf16 %v3710, %v3707
    %v3830 = vpack.c.bf16 %v3713, %v3713
    %s3831 = scalar_lea.vmem %s43, 32
    %v3832 = vld [vmem:[%s3831] sm:$0xf]
    %v3833 = vld [vmem:[%s3831 + $0x4] sm:$0xf]
    %v3834 = vld [vmem:[%s3831 + $0x8] sm:$0xf]
    %v3835 = vld [vmem:[%s3831 + $0xc] sm:$0xf]
    %v3840 = vunpack.c.l.b16 %v3832
    %v3841 = vunpack.c.l.b16 %v3833
    %v3842 = vunpack.c.l.b16 %v3834
    %v3843 = vunpack.c.l.b16 %v3835
    %v3844 = vpack.c.b16 %v3841, %v3840
    %v3845 = vpack.c.b16 %v3843, %v3842
    %v3849 = vsel %vm527, %v3829, 0
    %v3852 = vsel %vm527, %v3830, 0
    %3854 = vmatpush.bf16.msra.mxu0 0
    %3855 = vmatpush.bf16.msra.mxu0 0
    %3856 = vmatpush.bf16.msra.mxu0 0
    %3857 = vmatpush.bf16.msra.mxu0 0
    %3858 = vmatpush.bf16.msra.mxu0 0
    %3859 = vmatpush.bf16.msra.mxu0 0
    %3860 = vmatpush.bf16.msra.mxu0 %v3845
    %3861 = vmatpush.bf16.msra.mxu0 %v3844
    %3862 = vmatmul.bf16.gmra.mxu0 %v3849
    %v3863 = vpop.f32.mrf.mxu0
    %v3864 = vadd.f32 0.0, %v3863
    %v3865 = vpop.f32.mrf.mxu0
    %v3866 = vadd.f32 0.0, %v3865
    %3867 = vmatmul.bf16.gmra.mxu0 %v3852
    %v3868 = vpop.f32.mrf.mxu0
    %v3869 = vadd.f32 0.0, %v3868
    %v3870 = vpop.f32.mrf.mxu0
    %3871 = vdwg.mxu0
    %v3872 = vadd.f32 %v3821, %v3864
    %v3873 = vadd.f32 %v3823, %v3866
    %v3874 = vadd.f32 %v3826, %v3869
    %v3875 = vld [vmem:[%s47] sm:$0x1]
    %v3876 = vperm.slane %v3875, 0
    %v3877 = vadd.f32 %v3872, %v3876
    %v3878 = vadd.f32 %v3873, %v3876
    %v3879 = vadd.f32 %v3874, %v3876
    %v3880 = vmax.f32 %v3877, 0.0
    %v3881 = vmax.f32 %v3878, 0.0
    %v3882 = vmax.f32 %v3879, 0.0
    %v3883 = vpack.c.bf16 %v3881, %v3880
    %v3884 = vpack.c.bf16 %v3882, %v3882
    %v3885 = vld [vmem:[#allocation28] sm:$0xf]
    %v3886 = vld [vmem:[#allocation28 + $0x4] sm:$0xf]
    %v3887 = vld [vmem:[#allocation28 + $0x8] sm:$0xf]
    %v3888 = vld [vmem:[#allocation28 + $0xc] sm:$0xf]
    %v3889 = vld [vmem:[%s47 + $0x1] sm:$0x1]
    %v3890 = vperm.slane %v3889, 0
    %v3895 = vunpack.c.l.b16 %v3885
    %v3896 = vunpack.c.l.b16 %v3886
    %v3897 = vunpack.c.l.b16 %v3887
    %v3898 = vunpack.c.l.b16 %v3888
    %v3899 = vpack.c.b16 %v3896, %v3895
    %v3900 = vpack.c.b16 %v3898, %v3897
    %v3904 = vsel %vm527, %v3883, 0
    %v3907 = vsel %vm527, %v3884, 0
    %3909 = vmatpush.bf16.msra.mxu0 0
    %3910 = vmatpush.bf16.msra.mxu0 0
    %3911 = vmatpush.bf16.msra.mxu0 0
    %3912 = vmatpush.bf16.msra.mxu0 0
    %3913 = vmatpush.bf16.msra.mxu0 0
    %3914 = vmatpush.bf16.msra.mxu0 0
    %3915 = vmatpush.bf16.msra.mxu0 %v3900
    %3916 = vmatpush.bf16.msra.mxu0 %v3899
    %3917 = vmatmul.bf16.gmra.mxu0 %v3904
    %v3918 = vpop.f32.mrf.mxu0
    %v3919 = vadd.f32 %v3890, %v3918
    %v3920 = vpop.f32.mrf.mxu0
    %v3921 = vadd.f32 %v3890, %v3920
    %3922 = vmatmul.bf16.gmra.mxu0 %v3907
    %v3923 = vpop.f32.mrf.mxu0
    %v3924 = vadd.f32 %v3890, %v3923
    %v3925 = vpop.f32.mrf.mxu0
    %3926 = vdwg.mxu0
    %v3927 = vmax.f32 %v3686, %v3919
    %v3928 = vmax.f32 %v3687, %v3921
    %v3929 = vmax.f32 %v3688, %v3924
    %v3930 = vpack.c.bf16 %v3928, %v3927
    %v3931 = vpack.c.bf16 %v3929, %v3929
    %v3932 = vld [vmem:[#allocation30] sm:$0xf]
    %v3933 = vld [vmem:[#allocation30 + $0x4] sm:$0xf]
    %v3934 = vld [vmem:[#allocation30 + $0x8] sm:$0xf]
    %v3935 = vld [vmem:[#allocation30 + $0xc] sm:$0xf]
    %v3936 = vld [vmem:[%s55] sm:$0x1]
    %v3938 = vperm.slane %v3936, 0
    %v3944 = vunpack.c.l.b16 %v3932
    %v3945 = vunpack.c.l.b16 %v3933
    %v3946 = vunpack.c.l.b16 %v3934
    %v3947 = vunpack.c.l.b16 %v3935
    %v3948 = vpack.c.b16 %v3945, %v3944
    %v3949 = vpack.c.b16 %v3947, %v3946
    %v3953 = vsel %vm527, %v3930, 0
    %v3956 = vsel %vm527, %v3931, 0
    %3958 = vmatpush.bf16.msra.mxu0 0
    %3959 = vmatpush.bf16.msra.mxu0 0
    %3960 = vmatpush.bf16.msra.mxu0 0
    %3961 = vmatpush.bf16.msra.mxu0 0
    %3962 = vmatpush.bf16.msra.mxu0 0
    %3963 = vmatpush.bf16.msra.mxu0 0
    %3964 = vmatpush.bf16.msra.mxu0 %v3949
    %3965 = vmatpush.bf16.msra.mxu0 %v3948
    %3966 = vmatmul.bf16.gmra.mxu0 %v3953
    %v3967 = vpop.f32.mrf.mxu0
    %v3968 = vadd.f32 %v3938, %v3967
    %v3969 = vpop.f32.mrf.mxu0
    %v3970 = vadd.f32 %v3938, %v3969
    %3971 = vmatmul.bf16.gmra.mxu0 %v3956
    %v3972 = vpop.f32.mrf.mxu0
    %v3973 = vadd.f32 %v3938, %v3972
    %v3974 = vpop.f32.mrf.mxu0
    %3975 = vdwg.mxu0
    %v3976 = vmax.f32 %v3968, 0.0
    %v3977 = vmax.f32 %v3970, 0.0
    %v3978 = vmax.f32 %v3973, 0.0
    %v3979 = vpack.c.bf16 %v3977, %v3976
    %v3980 = vpack.c.bf16 %v3978, %v3978
    %v3981 = vld [vmem:[#allocation31] sm:$0xf]
    %v3982 = vld [vmem:[#allocation31 + $0x4] sm:$0xf]
    %v3983 = vld [vmem:[#allocation31 + $0x8] sm:$0xf]
    %v3984 = vld [vmem:[#allocation31 + $0xc] sm:$0xf]
    %v3985 = vld [vmem:[%s57] sm:$0x1]
    %v3987 = vperm.slane %v3985, 0
    %v3993 = vunpack.c.l.b16 %v3981
    %v3994 = vunpack.c.l.b16 %v3982
    %v3995 = vunpack.c.l.b16 %v3983
    %v3996 = vunpack.c.l.b16 %v3984
    %v3997 = vpack.c.b16 %v3994, %v3993
    %v3998 = vpack.c.b16 %v3996, %v3995
    %v4002 = vsel %vm527, %v3979, 0
    %v4005 = vsel %vm527, %v3980, 0
    %4007 = vmatpush.bf16.msra.mxu0 0
    %4008 = vmatpush.bf16.msra.mxu0 0
    %4009 = vmatpush.bf16.msra.mxu0 0
    %4010 = vmatpush.bf16.msra.mxu0 0
    %4011 = vmatpush.bf16.msra.mxu0 0
    %4012 = vmatpush.bf16.msra.mxu0 0
    %4013 = vmatpush.bf16.msra.mxu0 %v3998
    %4014 = vmatpush.bf16.msra.mxu0 %v3997
    %4015 = vmatmul.bf16.gmra.mxu0 %v4002
    %v4016 = vpop.f32.mrf.mxu0
    %v4017 = vadd.f32 %v3987, %v4016
    %v4018 = vpop.f32.mrf.mxu0
    %v4019 = vadd.f32 %v3987, %v4018
    %4020 = vmatmul.bf16.gmra.mxu0 %v4005
    %v4021 = vpop.f32.mrf.mxu0
    %v4022 = vadd.f32 %v3987, %v4021
    %v4023 = vpop.f32.mrf.mxu0
    %4024 = vdwg.mxu0
    %v4025 = vmax.f32 %v4017, 0.0
    %v4026 = vmax.f32 %v4019, 0.0
    %v4027 = vmax.f32 %v4022, 0.0
    %v4028 = vpack.c.bf16 %v4026, %v4025
    %v4029 = vpack.c.bf16 %v4027, %v4027
    %v4030 = vld [vmem:[#allocation33] sm:$0xf]
    %v4031 = vld [vmem:[#allocation33 + $0x4] sm:$0xf]
    %v4032 = vld [vmem:[#allocation33 + $0x8] sm:$0xf]
    %v4033 = vld [vmem:[#allocation33 + $0xc] sm:$0xf]
    %v4034 = vld [vmem:[#allocation33 + $0x10] sm:$0xf]
    %v4035 = vld [vmem:[#allocation33 + $0x14] sm:$0xf]
    %v4036 = vld [vmem:[#allocation33 + $0x18] sm:$0xf]
    %v4037 = vld [vmem:[#allocation33 + $0x1c] sm:$0xf]
    %v4038 = vld [vmem:[%s59] sm:$0x1]
    %v4040 = vperm.slane %v4038, 0
    %v4050 = vunpack.c.l.b16 %v4030
    %v4051 = vunpack.c.l.b16 %v4031
    %v4052 = vunpack.c.l.b16 %v4032
    %v4053 = vunpack.c.l.b16 %v4033
    %v4054 = vunpack.c.l.b16 %v4034
    %v4055 = vunpack.c.l.b16 %v4035
    %v4056 = vunpack.c.l.b16 %v4036
    %v4057 = vunpack.c.l.b16 %v4037
    %v4058 = vpack.c.b16 %v4051, %v4050
    %v4059 = vpack.c.b16 %v4053, %v4052
    %v4060 = vpack.c.b16 %v4055, %v4054
    %v4061 = vpack.c.b16 %v4057, %v4056
    %vm4066 = vcmask 523264
    %v4068 = vsel %vm4066, %v4028, 0
    %v4071 = vsel %vm4066, %v4029, 0
    %4073 = vmatpush.bf16.msra.mxu0 0
    %4074 = vmatpush.bf16.msra.mxu0 0
    %4075 = vmatpush.bf16.msra.mxu0 0
    %4076 = vmatpush.bf16.msra.mxu0 0
    %4077 = vmatpush.bf16.msra.mxu0 %v4061
    %4078 = vmatpush.bf16.msra.mxu0 %v4060
    %4079 = vmatpush.bf16.msra.mxu0 %v4059
    %4080 = vmatpush.bf16.msra.mxu0 %v4058
    %4081 = vmatmul.bf16.gmra.mxu0 %v4068
    %v4082 = vpop.f32.mrf.mxu0
    %v4083 = vadd.f32 %v4040, %v4082
    %v4084 = vpop.f32.mrf.mxu0
    %v4085 = vadd.f32 %v4040, %v4084
    %4086 = vmatmul.bf16.gmra.mxu0 %v4071
    %v4087 = vpop.f32.mrf.mxu0
    %v4088 = vadd.f32 %v4040, %v4087
    %v4089 = vpop.f32.mrf.mxu0
    %4090 = vdwg.mxu0
    %v4091 = vxor.u32 %v4083, 2147483648
    %v4092 = vxor.u32 %v4085, 2147483648
    %v4093 = vxor.u32 %v4088, 2147483648
    %v4094 = vmul.f32 %v4091, 1.442695
    %v4095 = vpow.pop %v4094
    %v4096 = vmul.f32 %v4092, 1.442695
    %v4097 = vpow.pop %v4096
    %v4098 = vmul.f32 %v4093, 1.442695
    %v4099 = vpow.pop %v4098
    %v4100 = vadd.f32 %v4095, 1.0
    %v4101 = vadd.f32 %v4097, 1.0
    %v4102 = vadd.f32 %v4099, 1.0
    %v4103 = vrcp.pop %v4100
    %v4104 = vmul.f32 %v4100, %v4103
    %v4105 = vsub.f32 1.0, %v4104
    %v4106 = vmul.f32 %v4103, %v4105
    %v4107 = vadd.f32 %v4103, %v4106
    %vm4108 = vweird.f32 %v4100
    %vm4109 = vweird.f32 %v4103
    %vm4110 = vmor %vm4108, %vm4109
    %v4111 = vsel %vm4110, %v4103, %v4107
    %v4112 = vand.u32 2147483647, %v4100
    %vm4113 = vcmp.eq.f32.partialorder %v4112, 8.507059e+37
    %v4114 = vand.u32 %v4100, 2147483648
    %v4115 = vor.u32 1.1754944e-38, %v4114
    %v4116 = vsel %vm4113, %v4115, %v4111
    %v4117 = vmul.f32 1.0, %v4116
    %v4118 = vrcp.pop %v4101
    %v4119 = vmul.f32 %v4101, %v4118
    %v4120 = vsub.f32 1.0, %v4119
    %v4121 = vmul.f32 %v4118, %v4120
    %v4122 = vadd.f32 %v4118, %v4121
    %vm4123 = vweird.f32 %v4101
    %vm4124 = vweird.f32 %v4118
    %vm4125 = vmor %vm4123, %vm4124
    %v4126 = vsel %vm4125, %v4118, %v4122
    %v4127 = vand.u32 2147483647, %v4101
    %vm4128 = vcmp.eq.f32.partialorder %v4127, 8.507059e+37
    %v4129 = vand.u32 %v4101, 2147483648
    %v4130 = vor.u32 1.1754944e-38, %v4129
    %v4131 = vsel %vm4128, %v4130, %v4126
    %v4132 = vmul.f32 1.0, %v4131
    %v4133 = vrcp.pop %v4102
    %v4134 = vmul.f32 %v4102, %v4133
    %v4135 = vsub.f32 1.0, %v4134
    %v4136 = vmul.f32 %v4133, %v4135
    %v4137 = vadd.f32 %v4133, %v4136
    %vm4138 = vweird.f32 %v4102
    %vm4139 = vweird.f32 %v4133
    %vm4140 = vmor %vm4138, %vm4139
    %v4141 = vsel %vm4140, %v4133, %v4137
    %v4142 = vand.u32 2147483647, %v4102
    %vm4143 = vcmp.eq.f32.partialorder %v4142, 8.507059e+37
    %v4144 = vand.u32 %v4102, 2147483648
    %v4145 = vor.u32 1.1754944e-38, %v4144
    %v4146 = vsel %vm4143, %v4145, %v4141
    %v4147 = vmul.f32 1.0, %v4146
    %4148 = vst [vmem:[%s61] sm:$0xff] %v4117
    %4149 = vst [vmem:[%s61 + $0x8] sm:$0xff] %v4132
    %4150 = vst [vmem:[%s61 + $0x10] sm:$0xff] %v4147
    // Predicated region
    $region206: #{collision_net_forward.1} parent=1 // pred_check
      _
    $region207: #{collision_net_forward.1} parent=1 // pred_check_branch
      %4152 = sbr.rel (0) target = $region209
    $region208: #{collision_net_forward.1} parent=1 // pred_region
      _
    $region209: #{collision_net_forward.1} parent=1 // pred_fallthru
      _
    // Predicated region
    $region210: #{collision_net_forward.1} parent=1 // pred_check
      _
    $region211: #{collision_net_forward.1} parent=1 // pred_check_branch
      %4154 = sbr.rel (0) target = $region213
    $region212: #{collision_net_forward.1} parent=1 // pred_region
      _
    $region213: #{collision_net_forward.1} parent=1 // pred_fallthru
      _
    %4155 = vsyncpa [#allocation3], 1
    %4156 = vsyncpa [#allocation5], 1
    %4157 = vsyncpa [#allocation8], 1
    %4158 = vsyncpa [#allocation11], 1
    %4159 = vsyncpa [#allocation14], 1
    %4160 = vsyncpa [#allocation17], 1
    %4161 = vsyncpa [#allocation20], 1
    %4162 = vsyncpa [#allocation23], 1
    %4163 = vsyncpa [#allocation26], 1
    %4164 = vsyncpa [#allocation29], 1
    %4165 = vsyncpa [#allocation32], 1

</llo_original>
